<compile_context>
chip_gen: v7x
topology: tpu7x:2x2x1
jax: 0.10.0
libtpu: 0.0.40
codegen_flags: <defaults>
</compile_context>

<pallas_src>
import jax
import jax.numpy as jnp
import numpy as np
from jax.experimental import pallas as pl
from jax.experimental.pallas import tpu as pltpu

_BB = 8             # batch rows handled per grid step (one sublane tile)
_NLANE = 25 * _BB   # conv-stage lane width per pool2 tap: (i2,j2) x batch-in-block


# ----------------------------- fused Pallas kernel -----------------------------

def _lenet_kernel(w1_ref, b1_ref, gmax_ref, gmin_ref, w2_ref, b2_ref,
                  wf1_ref, bf1_ref, wf2_ref, bf2_ref, wf3_ref, bf3_ref, o_ref):
    # gmax/gmin: (4, 25, 25*BB) -- [pool2 tap di*2+dj, conv2 tap kh*5+kw, (i2*5+j2)*BB + b];
    #            max / min of the raw pixel over the corresponding pool1 2x2 window.
    # w2_ref   : (6, 16, 25)    -- conv2 weight as [cin, cout, kh*5+kw].
    # wf*_ref  : fc weights, transposed, fc1 column-permuted, zero padded to 128 lanes.
    # o_ref    : (BB, 128)      -- logits live in lanes 0..9.

    # conv1(1x1)+pool1+relu fused into conv2+pool2, strip-mined over the 4 pool2 taps
    # so the working set stays inside the vector register file.
    m = None
    for t in range(4):
        gmax_t = gmax_ref[t]                                   # (25, 25*BB), lane-dense
        gmin_t = gmin_ref[t]
        acc = None
        for c in range(6):
            sc = w1_ref[c]                                      # SMEM scalars
            bc = b1_ref[c]
            # conv1 is a per-channel affine of the raw pixel, and an affine map is
            # monotone, so pool1's max is the affine of the window max (or min if sc<0).
            sel = jnp.where(sc >= 0.0, gmax_t, gmin_t)
            pc = jnp.maximum(sc * sel + bc, 0.0)                # conv1+pool1+relu (25, 200)
            d = jnp.dot(w2_ref[c], pc,
                        preferred_element_type=jnp.float32)     # (16, 200)
            acc = d if acc is None else acc + d
        acc = acc + b2_ref[...]                                 # (16,1) broadcast
        m = acc if m is None else jnp.maximum(m, acc)           # pool2 (max over taps)
    p2 = jnp.maximum(m, 0.0)                                    # relu   (16, 25*BB)

    # Re-layout (channel, position*batch) -> (batch, feature) for the fc stack using only
    # well-supported primitives: one 2-D transpose, sublane-aligned slices, lane concat.
    # Resulting feature order is s*16 + c; fc1's weight columns were permuted to match.
    p2t = jnp.transpose(p2)                                     # (25*BB, 16)
    f = jnp.concatenate(
        [p2t[s * _BB:(s + 1) * _BB, :] for s in range(25)], axis=1)       # (BB, 400)

    # Linear fc1 -> fc2 -> fc3 (no inter-FC ReLU, per the PyTorch module), 128-lane dense.
    h = jnp.dot(f, wf1_ref[...], preferred_element_type=jnp.float32) + bf1_ref[...]
    h = jnp.dot(h, wf2_ref[...], preferred_element_type=jnp.float32) + bf2_ref[...]
    h = jnp.dot(h, wf3_ref[...], preferred_element_type=jnp.float32) + bf3_ref[...]
    o_ref[...] = h                                              # (BB, 128)


# ----------------------------- one-time parameter prep -----------------------------

def prepare_params(params):
    """Weight glue hoisted out of the per-call forward; run ONCE per parameter set."""
    w1, b1, w2, b2, wf1, bf1, wf2, bf2, wf3, bf3 = params
    f32 = jnp.float32
    w1s = w1.reshape(6).astype(f32)
    b1s = b1.reshape(6).astype(f32)
    w2r = w2.astype(f32).transpose(1, 0, 2, 3).reshape(6, 16, 25)        # [cin, cout, tap]
    b2r = b2.astype(f32).reshape(16, 1)
    # fc1: the kernel hands features over in (s, cout) order (lane = s*16 + c).
    wf1p = jnp.pad(
        wf1.astype(f32).reshape(120, 16, 25).transpose(2, 1, 0).reshape(400, 120),
        ((0, 0), (0, 8)))                                                 # (400, 128)
    bf1p = jnp.pad(bf1.astype(f32), (0, 8)).reshape(1, 128)
    wf2p = jnp.pad(wf2.astype(f32).T, ((0, 8), (0, 44)))                  # (128, 128)
    bf2p = jnp.pad(bf2.astype(f32), (0, 44)).reshape(1, 128)
    wf3p = jnp.pad(wf3.astype(f32).T, ((0, 44), (0, 118)))                # (128, 128)
    bf3p = jnp.pad(bf3.astype(f32), (0, 118)).reshape(1, 128)
    return (w1s, b1s, w2r, b2r, wf1p, bf1p, wf2p, bf2p, wf3p, bf3p)


# ----------------------------- forward pass -----------------------------

def lenet_forward(x, prepped):
    (w1s, b1s, w2r, b2r, wf1p, bf1p, wf2p, bf2p, wf3p, bf3p) = prepped
    if x.shape[1:] != (1, 28, 28):
        raise ValueError("expected input of shape (B, 1, 28, 28)")
    B = x.shape[0]
    Bp = ((B + _BB - 1) // _BB) * _BB
    if Bp != B:
        x = jnp.pad(x, ((0, Bp - B), (0, 0), (0, 0), (0, 0)))
    NB = Bp // _BB

    # Minimal input glue: pool1 window max/min on the raw image, then im2col of the
    # pooled 14x14 maps straight into the kernel's lane-dense layout.
    xr = x.reshape(Bp, 14, 2, 14, 2)
    P = jnp.stack([xr.max(axis=(2, 4)), xr.min(axis=(2, 4))])            # (2, Bp, 14, 14)
    cols = []
    for kh in range(5):
        for kw in range(5):
            w = P[:, :, kh:kh + 10, kw:kw + 10]                          # (2, Bp, 10, 10)
            cols.append(w.reshape(2, Bp, 5, 2, 5, 2))                    # [.,., i2,di, j2,dj]
    G = jnp.stack(cols, axis=2)                                          # (2,Bp,25,5,2,5,2)
    G = G.reshape(2, NB, _BB, 25, 5, 2, 5, 2)
    G = G.transpose(0, 1, 5, 7, 3, 4, 6, 2)                              # (2,NB,di,dj,k,i2,j2,b)
    G = G.reshape(2, NB, 4, 25, _NLANE)
    gmax, gmin = G[0], G[1]

    smem = pl.BlockSpec(memory_space=pltpu.MemorySpace.SMEM)
    out = pl.pallas_call(
        _lenet_kernel,
        out_shape=jax.ShapeDtypeStruct((Bp, 128), jnp.float32),
        grid=(NB,),
        in_specs=[
            smem,                                                         # w1s
            smem,                                                         # b1s
            pl.BlockSpec((None, 4, 25, _NLANE), lambda i: (i, 0, 0, 0)),  # gmax
            pl.BlockSpec((None, 4, 25, _NLANE), lambda i: (i, 0, 0, 0)),  # gmin
            pl.BlockSpec((6, 16, 25), lambda i: (0, 0, 0)),               # w2r
            pl.BlockSpec((16, 1), lambda i: (0, 0)),                      # b2r
            pl.BlockSpec((400, 128), lambda i: (0, 0)),                   # wf1p
            pl.BlockSpec((1, 128), lambda i: (0, 0)),                     # bf1p
            pl.BlockSpec((128, 128), lambda i: (0, 0)),                   # wf2p
            pl.BlockSpec((1, 128), lambda i: (0, 0)),                     # bf2p
            pl.BlockSpec((128, 128), lambda i: (0, 0)),                   # wf3p
            pl.BlockSpec((1, 128), lambda i: (0, 0)),                     # bf3p
        ],
        out_specs=pl.BlockSpec((_BB, 128), lambda i: (i, 0)),
        compiler_params=pltpu.CompilerParams(dimension_semantics=("parallel",)),
    )(w1s, b1s, gmax, gmin, w2r, b2r, wf1p, bf1p, wf2p, bf2p, wf3p, bf3p)
    return out[:B, :10]


# ----------------------------- pure-JAX reference -----------------------------

def reference(x, params):
    (w1, b1, w2, b2, wf1, bf1, wf2, bf2, wf3, bf3) = params
    dn = ("NCHW", "OIHW", "NCHW")
    neg_inf = jnp.array(-jnp.inf, jnp.float32)

    def pool(y):
        return jax.lax.reduce_window(y, neg_inf, jax.lax.max,
                                     (1, 1, 2, 2), (1, 1, 2, 2), "VALID")

    y = jax.lax.conv_general_dilated(x, w1, (1, 1), "VALID",
                                     dimension_numbers=dn) + b1[None, :, None, None]
    y = jax.nn.relu(pool(y))
    y = jax.lax.conv_general_dilated(y, w2, (1, 1), "VALID",
                                     dimension_numbers=dn) + b2[None, :, None, None]
    y = jax.nn.relu(pool(y))
    y = y.reshape(y.shape[0], -1)
    y = y @ wf1.T + bf1
    y = y @ wf2.T + bf2
    y = y @ wf3.T + bf3
    return y


# ----------------------------- main -----------------------------

if __name__ == "__main__":
    key = jax.random.PRNGKey(0)
    ks = jax.random.split(key, 11)

    B = 16  # two batch blocks -> grid=(2,); spatial must be 28x28 so fc1 sees 16*5*5=400
    x = jax.random.normal(ks[0], (B, 1, 28, 28), jnp.float32)

    params = (
        0.50 * jax.random.normal(ks[1], (6, 1, 1, 1), jnp.float32),   # conv1.weight
        0.10 * jax.random.normal(ks[2], (6,), jnp.float32),            # conv1.bias
        0.10 * jax.random.normal(ks[3], (16, 6, 5, 5), jnp.float32),   # conv2.weight
        0.10 * jax.random.normal(ks[4], (16,), jnp.float32),           # conv2.bias
        0.05 * jax.random.normal(ks[5], (120, 400), jnp.float32),      # fc1.weight
        0.05 * jax.random.normal(ks[6], (120,), jnp.float32),          # fc1.bias
        0.05 * jax.random.normal(ks[7], (84, 120), jnp.float32),       # fc2.weight
        0.05 * jax.random.normal(ks[8], (84,), jnp.float32),           # fc2.bias
        0.05 * jax.random.normal(ks[9], (10, 84), jnp.float32),        # fc3.weight
        0.05 * jax.random.normal(ks[10], (10,), jnp.float32),          # fc3.bias
    )

    prepped = prepare_params(params)          # one-time weight glue (hoisted per review)
    fwd = jax.jit(lenet_forward)
    out = jax.block_until_ready(fwd(x, prepped))
    assert out.shape == (B, 10)

    ref = reference(x, params)
    np.testing.assert_allclose(np.asarray(out), np.asarray(ref), rtol=1e-4, atol=1e-4)

    print("KERNEL_OK")
</pallas_src>

<mosaic_0001>
module attributes {stable_mosaic.version = 11 : i64} {
  func.func @_lenet_kernel(%arg0: i32, %arg1: memref<6xf32, #tpu.memory_space<smem>>, %arg2: memref<6xf32, #tpu.memory_space<smem>>, %arg3: memref<1x4x25x200xf32, #tpu.memory_space<vmem>>, %arg4: memref<1x4x25x200xf32, #tpu.memory_space<vmem>>, %arg5: memref<6x16x25xf32, #tpu.memory_space<vmem>>, %arg6: memref<16x1xf32, #tpu.memory_space<vmem>>, %arg7: memref<400x128xf32, #tpu.memory_space<vmem>>, %arg8: memref<1x128xf32, #tpu.memory_space<vmem>>, %arg9: memref<128x128xf32, #tpu.memory_space<vmem>>, %arg10: memref<1x128xf32, #tpu.memory_space<vmem>>, %arg11: memref<128x128xf32, #tpu.memory_space<vmem>>, %arg12: memref<1x128xf32, #tpu.memory_space<vmem>>, %arg13: memref<8x128xf32, #tpu.memory_space<vmem>>) attributes {dimension_semantics = [#tpu.dimension_semantics<parallel>], iteration_bounds = array<i64: 2>, scalar_prefetch = 0 : i64, scratch_operands = 0 : i64, tpu.core_type = #tpu.core_type<tc>, window_params = [{transform_indices = @transform_0, window_bounds = array<i64: 6>}, {transform_indices = @transform_1, window_bounds = array<i64: 6>}, {transform_indices = @transform_2, window_bounds = array<i64: 1, 4, 25, 200>}, {transform_indices = @transform_3, window_bounds = array<i64: 1, 4, 25, 200>}, {pipeline_mode = #tpu.pipeline_mode<synchronous>, transform_indices = @transform_4, window_bounds = array<i64: 6, 16, 25>}, {pipeline_mode = #tpu.pipeline_mode<synchronous>, transform_indices = @transform_5, window_bounds = array<i64: 16, 1>}, {pipeline_mode = #tpu.pipeline_mode<synchronous>, transform_indices = @transform_6, window_bounds = array<i64: 400, 128>}, {pipeline_mode = #tpu.pipeline_mode<synchronous>, transform_indices = @transform_7, window_bounds = array<i64: 1, 128>}, {pipeline_mode = #tpu.pipeline_mode<synchronous>, transform_indices = @transform_8, window_bounds = array<i64: 128, 128>}, {pipeline_mode = #tpu.pipeline_mode<synchronous>, transform_indices = @transform_9, window_bounds = array<i64: 1, 128>}, {pipeline_mode = #tpu.pipeline_mode<synchronous>, transform_indices = @transform_10, window_bounds = array<i64: 128, 128>}, {pipeline_mode = #tpu.pipeline_mode<synchronous>, transform_indices = @transform_11, window_bounds = array<i64: 1, 128>}, {transform_indices = @transform_12, window_bounds = array<i64: 8, 128>}]} {
    %c0 = arith.constant 0 : index
    %c0_0 = arith.constant 0 : index
    %c0_1 = arith.constant 0 : index
    %c0_2 = arith.constant 0 : index
    %0 = vector.load %arg3[%c0, %c0_0, %c0_1, %c0_2] : memref<1x4x25x200xf32, #tpu.memory_space<vmem>>, vector<1x1x25x200xf32>
    %1 = vector.shape_cast %0 : vector<1x1x25x200xf32> to vector<25x200xf32>
    %c0_3 = arith.constant 0 : index
    %c0_4 = arith.constant 0 : index
    %c0_5 = arith.constant 0 : index
    %c0_6 = arith.constant 0 : index
    %2 = vector.load %arg4[%c0_3, %c0_4, %c0_5, %c0_6] : memref<1x4x25x200xf32, #tpu.memory_space<vmem>>, vector<1x1x25x200xf32>
    %3 = vector.shape_cast %2 : vector<1x1x25x200xf32> to vector<25x200xf32>
    %c0_7 = arith.constant 0 : index
    %4 = memref.load %arg1[%c0_7] : memref<6xf32, #tpu.memory_space<smem>>
    %c0_8 = arith.constant 0 : index
    %5 = memref.load %arg2[%c0_8] : memref<6xf32, #tpu.memory_space<smem>>
    %cst = arith.constant 0.000000e+00 : f32
    %6 = arith.cmpf oge, %4, %cst : f32
    %7 = arith.select %6, %1, %3 : vector<25x200xf32>
    %8 = vector.broadcast %4 : f32 to vector<25x200xf32>
    %9 = arith.mulf %8, %7 : vector<25x200xf32>
    %10 = vector.broadcast %5 : f32 to vector<25x200xf32>
    %11 = arith.addf %9, %10 : vector<25x200xf32>
    %cst_9 = arith.constant 0.000000e+00 : f32
    %12 = vector.broadcast %cst_9 : f32 to vector<25x200xf32>
    %13 = arith.maximumf %11, %12 : vector<25x200xf32>
    %c0_10 = arith.constant 0 : index
    %c0_11 = arith.constant 0 : index
    %c0_12 = arith.constant 0 : index
    %14 = vector.load %arg5[%c0_10, %c0_11, %c0_12] : memref<6x16x25xf32, #tpu.memory_space<vmem>>, vector<1x16x25xf32>
    %15 = vector.shape_cast %14 : vector<1x16x25xf32> to vector<16x25xf32>
    %cst_13 = arith.constant dense<0.000000e+00> : vector<16x200xf32>
    %16 = tpu.matmul %15, %13, %cst_13 {dimension_numbers = #tpu.dot_dimension_numbers<[1], [0], [0], [1], [0, 0, 1, 1], [], []>} : vector<16x25xf32>, vector<25x200xf32>, vector<16x200xf32> -> vector<16x200xf32>
    %c1 = arith.constant 1 : index
    %17 = memref.load %arg1[%c1] : memref<6xf32, #tpu.memory_space<smem>>
    %c1_14 = arith.constant 1 : index
    %18 = memref.load %arg2[%c1_14] : memref<6xf32, #tpu.memory_space<smem>>
    %cst_15 = arith.constant 0.000000e+00 : f32
    %19 = arith.cmpf oge, %17, %cst_15 : f32
    %20 = arith.select %19, %1, %3 : vector<25x200xf32>
    %21 = vector.broadcast %17 : f32 to vector<25x200xf32>
    %22 = arith.mulf %21, %20 : vector<25x200xf32>
    %23 = vector.broadcast %18 : f32 to vector<25x200xf32>
    %24 = arith.addf %22, %23 : vector<25x200xf32>
    %cst_16 = arith.constant 0.000000e+00 : f32
    %25 = vector.broadcast %cst_16 : f32 to vector<25x200xf32>
    %26 = arith.maximumf %24, %25 : vector<25x200xf32>
    %c1_17 = arith.constant 1 : index
    %c0_18 = arith.constant 0 : index
    %c0_19 = arith.constant 0 : index
    %27 = vector.load %arg5[%c1_17, %c0_18, %c0_19] : memref<6x16x25xf32, #tpu.memory_space<vmem>>, vector<1x16x25xf32>
    %28 = vector.shape_cast %27 : vector<1x16x25xf32> to vector<16x25xf32>
    %cst_20 = arith.constant dense<0.000000e+00> : vector<16x200xf32>
    %29 = tpu.matmul %28, %26, %cst_20 {dimension_numbers = #tpu.dot_dimension_numbers<[1], [0], [0], [1], [0, 0, 1, 1], [], []>} : vector<16x25xf32>, vector<25x200xf32>, vector<16x200xf32> -> vector<16x200xf32>
    %30 = arith.addf %16, %29 : vector<16x200xf32>
    %c2 = arith.constant 2 : index
    %31 = memref.load %arg1[%c2] : memref<6xf32, #tpu.memory_space<smem>>
    %c2_21 = arith.constant 2 : index
    %32 = memref.load %arg2[%c2_21] : memref<6xf32, #tpu.memory_space<smem>>
    %cst_22 = arith.constant 0.000000e+00 : f32
    %33 = arith.cmpf oge, %31, %cst_22 : f32
    %34 = arith.select %33, %1, %3 : vector<25x200xf32>
    %35 = vector.broadcast %31 : f32 to vector<25x200xf32>
    %36 = arith.mulf %35, %34 : vector<25x200xf32>
    %37 = vector.broadcast %32 : f32 to vector<25x200xf32>
    %38 = arith.addf %36, %37 : vector<25x200xf32>
    %cst_23 = arith.constant 0.000000e+00 : f32
    %39 = vector.broadcast %cst_23 : f32 to vector<25x200xf32>
    %40 = arith.maximumf %38, %39 : vector<25x200xf32>
    %c2_24 = arith.constant 2 : index
    %c0_25 = arith.constant 0 : index
    %c0_26 = arith.constant 0 : index
    %41 = vector.load %arg5[%c2_24, %c0_25, %c0_26] : memref<6x16x25xf32, #tpu.memory_space<vmem>>, vector<1x16x25xf32>
    %42 = vector.shape_cast %41 : vector<1x16x25xf32> to vector<16x25xf32>
    %cst_27 = arith.constant dense<0.000000e+00> : vector<16x200xf32>
    %43 = tpu.matmul %42, %40, %cst_27 {dimension_numbers = #tpu.dot_dimension_numbers<[1], [0], [0], [1], [0, 0, 1, 1], [], []>} : vector<16x25xf32>, vector<25x200xf32>, vector<16x200xf32> -> vector<16x200xf32>
    %44 = arith.addf %30, %43 : vector<16x200xf32>
    %c3 = arith.constant 3 : index
    %45 = memref.load %arg1[%c3] : memref<6xf32, #tpu.memory_space<smem>>
    %c3_28 = arith.constant 3 : index
    %46 = memref.load %arg2[%c3_28] : memref<6xf32, #tpu.memory_space<smem>>
    %cst_29 = arith.constant 0.000000e+00 : f32
    %47 = arith.cmpf oge, %45, %cst_29 : f32
    %48 = arith.select %47, %1, %3 : vector<25x200xf32>
    %49 = vector.broadcast %45 : f32 to vector<25x200xf32>
    %50 = arith.mulf %49, %48 : vector<25x200xf32>
    %51 = vector.broadcast %46 : f32 to vector<25x200xf32>
    %52 = arith.addf %50, %51 : vector<25x200xf32>
    %cst_30 = arith.constant 0.000000e+00 : f32
    %53 = vector.broadcast %cst_30 : f32 to vector<25x200xf32>
    %54 = arith.maximumf %52, %53 : vector<25x200xf32>
    %c3_31 = arith.constant 3 : index
    %c0_32 = arith.constant 0 : index
    %c0_33 = arith.constant 0 : index
    %55 = vector.load %arg5[%c3_31, %c0_32, %c0_33] : memref<6x16x25xf32, #tpu.memory_space<vmem>>, vector<1x16x25xf32>
    %56 = vector.shape_cast %55 : vector<1x16x25xf32> to vector<16x25xf32>
    %cst_34 = arith.constant dense<0.000000e+00> : vector<16x200xf32>
    %57 = tpu.matmul %56, %54, %cst_34 {dimension_numbers = #tpu.dot_dimension_numbers<[1], [0], [0], [1], [0, 0, 1, 1], [], []>} : vector<16x25xf32>, vector<25x200xf32>, vector<16x200xf32> -> vector<16x200xf32>
    %58 = arith.addf %44, %57 : vector<16x200xf32>
    %c4 = arith.constant 4 : index
    %59 = memref.load %arg1[%c4] : memref<6xf32, #tpu.memory_space<smem>>
    %c4_35 = arith.constant 4 : index
    %60 = memref.load %arg2[%c4_35] : memref<6xf32, #tpu.memory_space<smem>>
    %cst_36 = arith.constant 0.000000e+00 : f32
    %61 = arith.cmpf oge, %59, %cst_36 : f32
    %62 = arith.select %61, %1, %3 : vector<25x200xf32>
    %63 = vector.broadcast %59 : f32 to vector<25x200xf32>
    %64 = arith.mulf %63, %62 : vector<25x200xf32>
    %65 = vector.broadcast %60 : f32 to vector<25x200xf32>
    %66 = arith.addf %64, %65 : vector<25x200xf32>
    %cst_37 = arith.constant 0.000000e+00 : f32
    %67 = vector.broadcast %cst_37 : f32 to vector<25x200xf32>
    %68 = arith.maximumf %66, %67 : vector<25x200xf32>
    %c4_38 = arith.constant 4 : index
    %c0_39 = arith.constant 0 : index
    %c0_40 = arith.constant 0 : index
    %69 = vector.load %arg5[%c4_38, %c0_39, %c0_40] : memref<6x16x25xf32, #tpu.memory_space<vmem>>, vector<1x16x25xf32>
    %70 = vector.shape_cast %69 : vector<1x16x25xf32> to vector<16x25xf32>
    %cst_41 = arith.constant dense<0.000000e+00> : vector<16x200xf32>
    %71 = tpu.matmul %70, %68, %cst_41 {dimension_numbers = #tpu.dot_dimension_numbers<[1], [0], [0], [1], [0, 0, 1, 1], [], []>} : vector<16x25xf32>, vector<25x200xf32>, vector<16x200xf32> -> vector<16x200xf32>
    %72 = arith.addf %58, %71 : vector<16x200xf32>
    %c5 = arith.constant 5 : index
    %73 = memref.load %arg1[%c5] : memref<6xf32, #tpu.memory_space<smem>>
    %c5_42 = arith.constant 5 : index
    %74 = memref.load %arg2[%c5_42] : memref<6xf32, #tpu.memory_space<smem>>
    %cst_43 = arith.constant 0.000000e+00 : f32
    %75 = arith.cmpf oge, %73, %cst_43 : f32
    %76 = arith.select %75, %1, %3 : vector<25x200xf32>
    %77 = vector.broadcast %73 : f32 to vector<25x200xf32>
    %78 = arith.mulf %77, %76 : vector<25x200xf32>
    %79 = vector.broadcast %74 : f32 to vector<25x200xf32>
    %80 = arith.addf %78, %79 : vector<25x200xf32>
    %cst_44 = arith.constant 0.000000e+00 : f32
    %81 = vector.broadcast %cst_44 : f32 to vector<25x200xf32>
    %82 = arith.maximumf %80, %81 : vector<25x200xf32>
    %c5_45 = arith.constant 5 : index
    %c0_46 = arith.constant 0 : index
    %c0_47 = arith.constant 0 : index
    %83 = vector.load %arg5[%c5_45, %c0_46, %c0_47] : memref<6x16x25xf32, #tpu.memory_space<vmem>>, vector<1x16x25xf32>
    %84 = vector.shape_cast %83 : vector<1x16x25xf32> to vector<16x25xf32>
    %cst_48 = arith.constant dense<0.000000e+00> : vector<16x200xf32>
    %85 = tpu.matmul %84, %82, %cst_48 {dimension_numbers = #tpu.dot_dimension_numbers<[1], [0], [0], [1], [0, 0, 1, 1], [], []>} : vector<16x25xf32>, vector<25x200xf32>, vector<16x200xf32> -> vector<16x200xf32>
    %86 = arith.addf %72, %85 : vector<16x200xf32>
    %c0_49 = arith.constant 0 : index
    %c0_50 = arith.constant 0 : index
    %87 = vector.load %arg6[%c0_49, %c0_50] : memref<16x1xf32, #tpu.memory_space<vmem>>, vector<16x1xf32>
    %88 = vector.broadcast %87 : vector<16x1xf32> to vector<16x200xf32>
    %89 = arith.addf %86, %88 : vector<16x200xf32>
    %c0_51 = arith.constant 0 : index
    %c1_52 = arith.constant 1 : index
    %c0_53 = arith.constant 0 : index
    %c0_54 = arith.constant 0 : index
    %90 = vector.load %arg3[%c0_51, %c1_52, %c0_53, %c0_54] : memref<1x4x25x200xf32, #tpu.memory_space<vmem>>, vector<1x1x25x200xf32>
    %91 = vector.shape_cast %90 : vector<1x1x25x200xf32> to vector<25x200xf32>
    %c0_55 = arith.constant 0 : index
    %c1_56 = arith.constant 1 : index
    %c0_57 = arith.constant 0 : index
    %c0_58 = arith.constant 0 : index
    %92 = vector.load %arg4[%c0_55, %c1_56, %c0_57, %c0_58] : memref<1x4x25x200xf32, #tpu.memory_space<vmem>>, vector<1x1x25x200xf32>
    %93 = vector.shape_cast %92 : vector<1x1x25x200xf32> to vector<25x200xf32>
    %c0_59 = arith.constant 0 : index
    %94 = memref.load %arg1[%c0_59] : memref<6xf32, #tpu.memory_space<smem>>
    %c0_60 = arith.constant 0 : index
    %95 = memref.load %arg2[%c0_60] : memref<6xf32, #tpu.memory_space<smem>>
    %cst_61 = arith.constant 0.000000e+00 : f32
    %96 = arith.cmpf oge, %94, %cst_61 : f32
    %97 = arith.select %96, %91, %93 : vector<25x200xf32>
    %98 = vector.broadcast %94 : f32 to vector<25x200xf32>
    %99 = arith.mulf %98, %97 : vector<25x200xf32>
    %100 = vector.broadcast %95 : f32 to vector<25x200xf32>
    %101 = arith.addf %99, %100 : vector<25x200xf32>
    %cst_62 = arith.constant 0.000000e+00 : f32
    %102 = vector.broadcast %cst_62 : f32 to vector<25x200xf32>
    %103 = arith.maximumf %101, %102 : vector<25x200xf32>
    %c0_63 = arith.constant 0 : index
    %c0_64 = arith.constant 0 : index
    %c0_65 = arith.constant 0 : index
    %104 = vector.load %arg5[%c0_63, %c0_64, %c0_65] : memref<6x16x25xf32, #tpu.memory_space<vmem>>, vector<1x16x25xf32>
    %105 = vector.shape_cast %104 : vector<1x16x25xf32> to vector<16x25xf32>
    %cst_66 = arith.constant dense<0.000000e+00> : vector<16x200xf32>
    %106 = tpu.matmul %105, %103, %cst_66 {dimension_numbers = #tpu.dot_dimension_numbers<[1], [0], [0], [1], [0, 0, 1, 1], [], []>} : vector<16x25xf32>, vector<25x200xf32>, vector<16x200xf32> -> vector<16x200xf32>
    %c1_67 = arith.constant 1 : index
    %107 = memref.load %arg1[%c1_67] : memref<6xf32, #tpu.memory_space<smem>>
    %c1_68 = arith.constant 1 : index
    %108 = memref.load %arg2[%c1_68] : memref<6xf32, #tpu.memory_space<smem>>
    %cst_69 = arith.constant 0.000000e+00 : f32
    %109 = arith.cmpf oge, %107, %cst_69 : f32
    %110 = arith.select %109, %91, %93 : vector<25x200xf32>
    %111 = vector.broadcast %107 : f32 to vector<25x200xf32>
    %112 = arith.mulf %111, %110 : vector<25x200xf32>
    %113 = vector.broadcast %108 : f32 to vector<25x200xf32>
    %114 = arith.addf %112, %113 : vector<25x200xf32>
    %cst_70 = arith.constant 0.000000e+00 : f32
    %115 = vector.broadcast %cst_70 : f32 to vector<25x200xf32>
    %116 = arith.maximumf %114, %115 : vector<25x200xf32>
    %c1_71 = arith.constant 1 : index
    %c0_72 = arith.constant 0 : index
    %c0_73 = arith.constant 0 : index
    %117 = vector.load %arg5[%c1_71, %c0_72, %c0_73] : memref<6x16x25xf32, #tpu.memory_space<vmem>>, vector<1x16x25xf32>
    %118 = vector.shape_cast %117 : vector<1x16x25xf32> to vector<16x25xf32>
    %cst_74 = arith.constant dense<0.000000e+00> : vector<16x200xf32>
    %119 = tpu.matmul %118, %116, %cst_74 {dimension_numbers = #tpu.dot_dimension_numbers<[1], [0], [0], [1], [0, 0, 1, 1], [], []>} : vector<16x25xf32>, vector<25x200xf32>, vector<16x200xf32> -> vector<16x200xf32>
    %120 = arith.addf %106, %119 : vector<16x200xf32>
    %c2_75 = arith.constant 2 : index
    %121 = memref.load %arg1[%c2_75] : memref<6xf32, #tpu.memory_space<smem>>
    %c2_76 = arith.constant 2 : index
    %122 = memref.load %arg2[%c2_76] : memref<6xf32, #tpu.memory_space<smem>>
    %cst_77 = arith.constant 0.000000e+00 : f32
    %123 = arith.cmpf oge, %121, %cst_77 : f32
    %124 = arith.select %123, %91, %93 : vector<25x200xf32>
    %125 = vector.broadcast %121 : f32 to vector<25x200xf32>
    %126 = arith.mulf %125, %124 : vector<25x200xf32>
    %127 = vector.broadcast %122 : f32 to vector<25x200xf32>
    %128 = arith.addf %126, %127 : vector<25x200xf32>
    %cst_78 = arith.constant 0.000000e+00 : f32
    %129 = vector.broadcast %cst_78 : f32 to vector<25x200xf32>
    %130 = arith.maximumf %128, %129 : vector<25x200xf32>
    %c2_79 = arith.constant 2 : index
    %c0_80 = arith.constant 0 : index
    %c0_81 = arith.constant 0 : index
    %131 = vector.load %arg5[%c2_79, %c0_80, %c0_81] : memref<6x16x25xf32, #tpu.memory_space<vmem>>, vector<1x16x25xf32>
    %132 = vector.shape_cast %131 : vector<1x16x25xf32> to vector<16x25xf32>
    %cst_82 = arith.constant dense<0.000000e+00> : vector<16x200xf32>
    %133 = tpu.matmul %132, %130, %cst_82 {dimension_numbers = #tpu.dot_dimension_numbers<[1], [0], [0], [1], [0, 0, 1, 1], [], []>} : vector<16x25xf32>, vector<25x200xf32>, vector<16x200xf32> -> vector<16x200xf32>
    %134 = arith.addf %120, %133 : vector<16x200xf32>
    %c3_83 = arith.constant 3 : index
    %135 = memref.load %arg1[%c3_83] : memref<6xf32, #tpu.memory_space<smem>>
    %c3_84 = arith.constant 3 : index
    %136 = memref.load %arg2[%c3_84] : memref<6xf32, #tpu.memory_space<smem>>
    %cst_85 = arith.constant 0.000000e+00 : f32
    %137 = arith.cmpf oge, %135, %cst_85 : f32
    %138 = arith.select %137, %91, %93 : vector<25x200xf32>
    %139 = vector.broadcast %135 : f32 to vector<25x200xf32>
    %140 = arith.mulf %139, %138 : vector<25x200xf32>
    %141 = vector.broadcast %136 : f32 to vector<25x200xf32>
    %142 = arith.addf %140, %141 : vector<25x200xf32>
    %cst_86 = arith.constant 0.000000e+00 : f32
    %143 = vector.broadcast %cst_86 : f32 to vector<25x200xf32>
    %144 = arith.maximumf %142, %143 : vector<25x200xf32>
    %c3_87 = arith.constant 3 : index
    %c0_88 = arith.constant 0 : index
    %c0_89 = arith.constant 0 : index
    %145 = vector.load %arg5[%c3_87, %c0_88, %c0_89] : memref<6x16x25xf32, #tpu.memory_space<vmem>>, vector<1x16x25xf32>
    %146 = vector.shape_cast %145 : vector<1x16x25xf32> to vector<16x25xf32>
    %cst_90 = arith.constant dense<0.000000e+00> : vector<16x200xf32>
    %147 = tpu.matmul %146, %144, %cst_90 {dimension_numbers = #tpu.dot_dimension_numbers<[1], [0], [0], [1], [0, 0, 1, 1], [], []>} : vector<16x25xf32>, vector<25x200xf32>, vector<16x200xf32> -> vector<16x200xf32>
    %148 = arith.addf %134, %147 : vector<16x200xf32>
    %c4_91 = arith.constant 4 : index
    %149 = memref.load %arg1[%c4_91] : memref<6xf32, #tpu.memory_space<smem>>
    %c4_92 = arith.constant 4 : index
    %150 = memref.load %arg2[%c4_92] : memref<6xf32, #tpu.memory_space<smem>>
    %cst_93 = arith.constant 0.000000e+00 : f32
    %151 = arith.cmpf oge, %149, %cst_93 : f32
    %152 = arith.select %151, %91, %93 : vector<25x200xf32>
    %153 = vector.broadcast %149 : f32 to vector<25x200xf32>
    %154 = arith.mulf %153, %152 : vector<25x200xf32>
    %155 = vector.broadcast %150 : f32 to vector<25x200xf32>
    %156 = arith.addf %154, %155 : vector<25x200xf32>
    %cst_94 = arith.constant 0.000000e+00 : f32
    %157 = vector.broadcast %cst_94 : f32 to vector<25x200xf32>
    %158 = arith.maximumf %156, %157 : vector<25x200xf32>
    %c4_95 = arith.constant 4 : index
    %c0_96 = arith.constant 0 : index
    %c0_97 = arith.constant 0 : index
    %159 = vector.load %arg5[%c4_95, %c0_96, %c0_97] : memref<6x16x25xf32, #tpu.memory_space<vmem>>, vector<1x16x25xf32>
    %160 = vector.shape_cast %159 : vector<1x16x25xf32> to vector<16x25xf32>
    %cst_98 = arith.constant dense<0.000000e+00> : vector<16x200xf32>
    %161 = tpu.matmul %160, %158, %cst_98 {dimension_numbers = #tpu.dot_dimension_numbers<[1], [0], [0], [1], [0, 0, 1, 1], [], []>} : vector<16x25xf32>, vector<25x200xf32>, vector<16x200xf32> -> vector<16x200xf32>
    %162 = arith.addf %148, %161 : vector<16x200xf32>
    %c5_99 = arith.constant 5 : index
    %163 = memref.load %arg1[%c5_99] : memref<6xf32, #tpu.memory_space<smem>>
    %c5_100 = arith.constant 5 : index
    %164 = memref.load %arg2[%c5_100] : memref<6xf32, #tpu.memory_space<smem>>
    %cst_101 = arith.constant 0.000000e+00 : f32
    %165 = arith.cmpf oge, %163, %cst_101 : f32
    %166 = arith.select %165, %91, %93 : vector<25x200xf32>
    %167 = vector.broadcast %163 : f32 to vector<25x200xf32>
    %168 = arith.mulf %167, %166 : vector<25x200xf32>
    %169 = vector.broadcast %164 : f32 to vector<25x200xf32>
    %170 = arith.addf %168, %169 : vector<25x200xf32>
    %cst_102 = arith.constant 0.000000e+00 : f32
    %171 = vector.broadcast %cst_102 : f32 to vector<25x200xf32>
    %172 = arith.maximumf %170, %171 : vector<25x200xf32>
    %c5_103 = arith.constant 5 : index
    %c0_104 = arith.constant 0 : index
    %c0_105 = arith.constant 0 : index
    %173 = vector.load %arg5[%c5_103, %c0_104, %c0_105] : memref<6x16x25xf32, #tpu.memory_space<vmem>>, vector<1x16x25xf32>
    %174 = vector.shape_cast %173 : vector<1x16x25xf32> to vector<16x25xf32>
    %cst_106 = arith.constant dense<0.000000e+00> : vector<16x200xf32>
    %175 = tpu.matmul %174, %172, %cst_106 {dimension_numbers = #tpu.dot_dimension_numbers<[1], [0], [0], [1], [0, 0, 1, 1], [], []>} : vector<16x25xf32>, vector<25x200xf32>, vector<16x200xf32> -> vector<16x200xf32>
    %176 = arith.addf %162, %175 : vector<16x200xf32>
    %c0_107 = arith.constant 0 : index
    %c0_108 = arith.constant 0 : index
    %177 = vector.load %arg6[%c0_107, %c0_108] : memref<16x1xf32, #tpu.memory_space<vmem>>, vector<16x1xf32>
    %178 = vector.broadcast %177 : vector<16x1xf32> to vector<16x200xf32>
    %179 = arith.addf %176, %178 : vector<16x200xf32>
    %180 = arith.maximumf %89, %179 : vector<16x200xf32>
    %c0_109 = arith.constant 0 : index
    %c2_110 = arith.constant 2 : index
    %c0_111 = arith.constant 0 : index
    %c0_112 = arith.constant 0 : index
    %181 = vector.load %arg3[%c0_109, %c2_110, %c0_111, %c0_112] : memref<1x4x25x200xf32, #tpu.memory_space<vmem>>, vector<1x1x25x200xf32>
    %182 = vector.shape_cast %181 : vector<1x1x25x200xf32> to vector<25x200xf32>
    %c0_113 = arith.constant 0 : index
    %c2_114 = arith.constant 2 : index
    %c0_115 = arith.constant 0 : index
    %c0_116 = arith.constant 0 : index
    %183 = vector.load %arg4[%c0_113, %c2_114, %c0_115, %c0_116] : memref<1x4x25x200xf32, #tpu.memory_space<vmem>>, vector<1x1x25x200xf32>
    %184 = vector.shape_cast %183 : vector<1x1x25x200xf32> to vector<25x200xf32>
    %c0_117 = arith.constant 0 : index
    %185 = memref.load %arg1[%c0_117] : memref<6xf32, #tpu.memory_space<smem>>
    %c0_118 = arith.constant 0 : index
    %186 = memref.load %arg2[%c0_118] : memref<6xf32, #tpu.memory_space<smem>>
    %cst_119 = arith.constant 0.000000e+00 : f32
    %187 = arith.cmpf oge, %185, %cst_119 : f32
    %188 = arith.select %187, %182, %184 : vector<25x200xf32>
    %189 = vector.broadcast %185 : f32 to vector<25x200xf32>
    %190 = arith.mulf %189, %188 : vector<25x200xf32>
    %191 = vector.broadcast %186 : f32 to vector<25x200xf32>
    %192 = arith.addf %190, %191 : vector<25x200xf32>
    %cst_120 = arith.constant 0.000000e+00 : f32
    %193 = vector.broadcast %cst_120 : f32 to vector<25x200xf32>
    %194 = arith.maximumf %192, %193 : vector<25x200xf32>
    %c0_121 = arith.constant 0 : index
    %c0_122 = arith.constant 0 : index
    %c0_123 = arith.constant 0 : index
    %195 = vector.load %arg5[%c0_121, %c0_122, %c0_123] : memref<6x16x25xf32, #tpu.memory_space<vmem>>, vector<1x16x25xf32>
    %196 = vector.shape_cast %195 : vector<1x16x25xf32> to vector<16x25xf32>
    %cst_124 = arith.constant dense<0.000000e+00> : vector<16x200xf32>
    %197 = tpu.matmul %196, %194, %cst_124 {dimension_numbers = #tpu.dot_dimension_numbers<[1], [0], [0], [1], [0, 0, 1, 1], [], []>} : vector<16x25xf32>, vector<25x200xf32>, vector<16x200xf32> -> vector<16x200xf32>
    %c1_125 = arith.constant 1 : index
    %198 = memref.load %arg1[%c1_125] : memref<6xf32, #tpu.memory_space<smem>>
    %c1_126 = arith.constant 1 : index
    %199 = memref.load %arg2[%c1_126] : memref<6xf32, #tpu.memory_space<smem>>
    %cst_127 = arith.constant 0.000000e+00 : f32
    %200 = arith.cmpf oge, %198, %cst_127 : f32
    %201 = arith.select %200, %182, %184 : vector<25x200xf32>
    %202 = vector.broadcast %198 : f32 to vector<25x200xf32>
    %203 = arith.mulf %202, %201 : vector<25x200xf32>
    %204 = vector.broadcast %199 : f32 to vector<25x200xf32>
    %205 = arith.addf %203, %204 : vector<25x200xf32>
    %cst_128 = arith.constant 0.000000e+00 : f32
    %206 = vector.broadcast %cst_128 : f32 to vector<25x200xf32>
    %207 = arith.maximumf %205, %206 : vector<25x200xf32>
    %c1_129 = arith.constant 1 : index
    %c0_130 = arith.constant 0 : index
    %c0_131 = arith.constant 0 : index
    %208 = vector.load %arg5[%c1_129, %c0_130, %c0_131] : memref<6x16x25xf32, #tpu.memory_space<vmem>>, vector<1x16x25xf32>
    %209 = vector.shape_cast %208 : vector<1x16x25xf32> to vector<16x25xf32>
    %cst_132 = arith.constant dense<0.000000e+00> : vector<16x200xf32>
    %210 = tpu.matmul %209, %207, %cst_132 {dimension_numbers = #tpu.dot_dimension_numbers<[1], [0], [0], [1], [0, 0, 1, 1], [], []>} : vector<16x25xf32>, vector<25x200xf32>, vector<16x200xf32> -> vector<16x200xf32>
    %211 = arith.addf %197, %210 : vector<16x200xf32>
    %c2_133 = arith.constant 2 : index
    %212 = memref.load %arg1[%c2_133] : memref<6xf32, #tpu.memory_space<smem>>
    %c2_134 = arith.constant 2 : index
    %213 = memref.load %arg2[%c2_134] : memref<6xf32, #tpu.memory_space<smem>>
    %cst_135 = arith.constant 0.000000e+00 : f32
    %214 = arith.cmpf oge, %212, %cst_135 : f32
    %215 = arith.select %214, %182, %184 : vector<25x200xf32>
    %216 = vector.broadcast %212 : f32 to vector<25x200xf32>
    %217 = arith.mulf %216, %215 : vector<25x200xf32>
    %218 = vector.broadcast %213 : f32 to vector<25x200xf32>
    %219 = arith.addf %217, %218 : vector<25x200xf32>
    %cst_136 = arith.constant 0.000000e+00 : f32
    %220 = vector.broadcast %cst_136 : f32 to vector<25x200xf32>
    %221 = arith.maximumf %219, %220 : vector<25x200xf32>
    %c2_137 = arith.constant 2 : index
    %c0_138 = arith.constant 0 : index
    %c0_139 = arith.constant 0 : index
    %222 = vector.load %arg5[%c2_137, %c0_138, %c0_139] : memref<6x16x25xf32, #tpu.memory_space<vmem>>, vector<1x16x25xf32>
    %223 = vector.shape_cast %222 : vector<1x16x25xf32> to vector<16x25xf32>
    %cst_140 = arith.constant dense<0.000000e+00> : vector<16x200xf32>
    %224 = tpu.matmul %223, %221, %cst_140 {dimension_numbers = #tpu.dot_dimension_numbers<[1], [0], [0], [1], [0, 0, 1, 1], [], []>} : vector<16x25xf32>, vector<25x200xf32>, vector<16x200xf32> -> vector<16x200xf32>
    %225 = arith.addf %211, %224 : vector<16x200xf32>
    %c3_141 = arith.constant 3 : index
    %226 = memref.load %arg1[%c3_141] : memref<6xf32, #tpu.memory_space<smem>>
    %c3_142 = arith.constant 3 : index
    %227 = memref.load %arg2[%c3_142] : memref<6xf32, #tpu.memory_space<smem>>
    %cst_143 = arith.constant 0.000000e+00 : f32
    %228 = arith.cmpf oge, %226, %cst_143 : f32
    %229 = arith.select %228, %182, %184 : vector<25x200xf32>
    %230 = vector.broadcast %226 : f32 to vector<25x200xf32>
    %231 = arith.mulf %230, %229 : vector<25x200xf32>
    %232 = vector.broadcast %227 : f32 to vector<25x200xf32>
    %233 = arith.addf %231, %232 : vector<25x200xf32>
    %cst_144 = arith.constant 0.000000e+00 : f32
    %234 = vector.broadcast %cst_144 : f32 to vector<25x200xf32>
    %235 = arith.maximumf %233, %234 : vector<25x200xf32>
    %c3_145 = arith.constant 3 : index
    %c0_146 = arith.constant 0 : index
    %c0_147 = arith.constant 0 : index
    %236 = vector.load %arg5[%c3_145, %c0_146, %c0_147] : memref<6x16x25xf32, #tpu.memory_space<vmem>>, vector<1x16x25xf32>
    %237 = vector.shape_cast %236 : vector<1x16x25xf32> to vector<16x25xf32>
    %cst_148 = arith.constant dense<0.000000e+00> : vector<16x200xf32>
    %238 = tpu.matmul %237, %235, %cst_148 {dimension_numbers = #tpu.dot_dimension_numbers<[1], [0], [0], [1], [0, 0, 1, 1], [], []>} : vector<16x25xf32>, vector<25x200xf32>, vector<16x200xf32> -> vector<16x200xf32>
    %239 = arith.addf %225, %238 : vector<16x200xf32>
    %c4_149 = arith.constant 4 : index
    %240 = memref.load %arg1[%c4_149] : memref<6xf32, #tpu.memory_space<smem>>
    %c4_150 = arith.constant 4 : index
    %241 = memref.load %arg2[%c4_150] : memref<6xf32, #tpu.memory_space<smem>>
    %cst_151 = arith.constant 0.000000e+00 : f32
    %242 = arith.cmpf oge, %240, %cst_151 : f32
    %243 = arith.select %242, %182, %184 : vector<25x200xf32>
    %244 = vector.broadcast %240 : f32 to vector<25x200xf32>
    %245 = arith.mulf %244, %243 : vector<25x200xf32>
    %246 = vector.broadcast %241 : f32 to vector<25x200xf32>
    %247 = arith.addf %245, %246 : vector<25x200xf32>
    %cst_152 = arith.constant 0.000000e+00 : f32
    %248 = vector.broadcast %cst_152 : f32 to vector<25x200xf32>
    %249 = arith.maximumf %247, %248 : vector<25x200xf32>
    %c4_153 = arith.constant 4 : index
    %c0_154 = arith.constant 0 : index
    %c0_155 = arith.constant 0 : index
    %250 = vector.load %arg5[%c4_153, %c0_154, %c0_155] : memref<6x16x25xf32, #tpu.memory_space<vmem>>, vector<1x16x25xf32>
    %251 = vector.shape_cast %250 : vector<1x16x25xf32> to vector<16x25xf32>
    %cst_156 = arith.constant dense<0.000000e+00> : vector<16x200xf32>
    %252 = tpu.matmul %251, %249, %cst_156 {dimension_numbers = #tpu.dot_dimension_numbers<[1], [0], [0], [1], [0, 0, 1, 1], [], []>} : vector<16x25xf32>, vector<25x200xf32>, vector<16x200xf32> -> vector<16x200xf32>
    %253 = arith.addf %239, %252 : vector<16x200xf32>
    %c5_157 = arith.constant 5 : index
    %254 = memref.load %arg1[%c5_157] : memref<6xf32, #tpu.memory_space<smem>>
    %c5_158 = arith.constant 5 : index
    %255 = memref.load %arg2[%c5_158] : memref<6xf32, #tpu.memory_space<smem>>
    %cst_159 = arith.constant 0.000000e+00 : f32
    %256 = arith.cmpf oge, %254, %cst_159 : f32
    %257 = arith.select %256, %182, %184 : vector<25x200xf32>
    %258 = vector.broadcast %254 : f32 to vector<25x200xf32>
    %259 = arith.mulf %258, %257 : vector<25x200xf32>
    %260 = vector.broadcast %255 : f32 to vector<25x200xf32>
    %261 = arith.addf %259, %260 : vector<25x200xf32>
    %cst_160 = arith.constant 0.000000e+00 : f32
    %262 = vector.broadcast %cst_160 : f32 to vector<25x200xf32>
    %263 = arith.maximumf %261, %262 : vector<25x200xf32>
    %c5_161 = arith.constant 5 : index
    %c0_162 = arith.constant 0 : index
    %c0_163 = arith.constant 0 : index
    %264 = vector.load %arg5[%c5_161, %c0_162, %c0_163] : memref<6x16x25xf32, #tpu.memory_space<vmem>>, vector<1x16x25xf32>
    %265 = vector.shape_cast %264 : vector<1x16x25xf32> to vector<16x25xf32>
    %cst_164 = arith.constant dense<0.000000e+00> : vector<16x200xf32>
    %266 = tpu.matmul %265, %263, %cst_164 {dimension_numbers = #tpu.dot_dimension_numbers<[1], [0], [0], [1], [0, 0, 1, 1], [], []>} : vector<16x25xf32>, vector<25x200xf32>, vector<16x200xf32> -> vector<16x200xf32>
    %267 = arith.addf %253, %266 : vector<16x200xf32>
    %c0_165 = arith.constant 0 : index
    %c0_166 = arith.constant 0 : index
    %268 = vector.load %arg6[%c0_165, %c0_166] : memref<16x1xf32, #tpu.memory_space<vmem>>, vector<16x1xf32>
    %269 = vector.broadcast %268 : vector<16x1xf32> to vector<16x200xf32>
    %270 = arith.addf %267, %269 : vector<16x200xf32>
    %271 = arith.maximumf %180, %270 : vector<16x200xf32>
    %c0_167 = arith.constant 0 : index
    %c3_168 = arith.constant 3 : index
    %c0_169 = arith.constant 0 : index
    %c0_170 = arith.constant 0 : index
    %272 = vector.load %arg3[%c0_167, %c3_168, %c0_169, %c0_170] : memref<1x4x25x200xf32, #tpu.memory_space<vmem>>, vector<1x1x25x200xf32>
    %273 = vector.shape_cast %272 : vector<1x1x25x200xf32> to vector<25x200xf32>
    %c0_171 = arith.constant 0 : index
    %c3_172 = arith.constant 3 : index
    %c0_173 = arith.constant 0 : index
    %c0_174 = arith.constant 0 : index
    %274 = vector.load %arg4[%c0_171, %c3_172, %c0_173, %c0_174] : memref<1x4x25x200xf32, #tpu.memory_space<vmem>>, vector<1x1x25x200xf32>
    %275 = vector.shape_cast %274 : vector<1x1x25x200xf32> to vector<25x200xf32>
    %c0_175 = arith.constant 0 : index
    %276 = memref.load %arg1[%c0_175] : memref<6xf32, #tpu.memory_space<smem>>
    %c0_176 = arith.constant 0 : index
    %277 = memref.load %arg2[%c0_176] : memref<6xf32, #tpu.memory_space<smem>>
    %cst_177 = arith.constant 0.000000e+00 : f32
    %278 = arith.cmpf oge, %276, %cst_177 : f32
    %279 = arith.select %278, %273, %275 : vector<25x200xf32>
    %280 = vector.broadcast %276 : f32 to vector<25x200xf32>
    %281 = arith.mulf %280, %279 : vector<25x200xf32>
    %282 = vector.broadcast %277 : f32 to vector<25x200xf32>
    %283 = arith.addf %281, %282 : vector<25x200xf32>
    %cst_178 = arith.constant 0.000000e+00 : f32
    %284 = vector.broadcast %cst_178 : f32 to vector<25x200xf32>
    %285 = arith.maximumf %283, %284 : vector<25x200xf32>
    %c0_179 = arith.constant 0 : index
    %c0_180 = arith.constant 0 : index
    %c0_181 = arith.constant 0 : index
    %286 = vector.load %arg5[%c0_179, %c0_180, %c0_181] : memref<6x16x25xf32, #tpu.memory_space<vmem>>, vector<1x16x25xf32>
    %287 = vector.shape_cast %286 : vector<1x16x25xf32> to vector<16x25xf32>
    %cst_182 = arith.constant dense<0.000000e+00> : vector<16x200xf32>
    %288 = tpu.matmul %287, %285, %cst_182 {dimension_numbers = #tpu.dot_dimension_numbers<[1], [0], [0], [1], [0, 0, 1, 1], [], []>} : vector<16x25xf32>, vector<25x200xf32>, vector<16x200xf32> -> vector<16x200xf32>
    %c1_183 = arith.constant 1 : index
    %289 = memref.load %arg1[%c1_183] : memref<6xf32, #tpu.memory_space<smem>>
    %c1_184 = arith.constant 1 : index
    %290 = memref.load %arg2[%c1_184] : memref<6xf32, #tpu.memory_space<smem>>
    %cst_185 = arith.constant 0.000000e+00 : f32
    %291 = arith.cmpf oge, %289, %cst_185 : f32
    %292 = arith.select %291, %273, %275 : vector<25x200xf32>
    %293 = vector.broadcast %289 : f32 to vector<25x200xf32>
    %294 = arith.mulf %293, %292 : vector<25x200xf32>
    %295 = vector.broadcast %290 : f32 to vector<25x200xf32>
    %296 = arith.addf %294, %295 : vector<25x200xf32>
    %cst_186 = arith.constant 0.000000e+00 : f32
    %297 = vector.broadcast %cst_186 : f32 to vector<25x200xf32>
    %298 = arith.maximumf %296, %297 : vector<25x200xf32>
    %c1_187 = arith.constant 1 : index
    %c0_188 = arith.constant 0 : index
    %c0_189 = arith.constant 0 : index
    %299 = vector.load %arg5[%c1_187, %c0_188, %c0_189] : memref<6x16x25xf32, #tpu.memory_space<vmem>>, vector<1x16x25xf32>
    %300 = vector.shape_cast %299 : vector<1x16x25xf32> to vector<16x25xf32>
    %cst_190 = arith.constant dense<0.000000e+00> : vector<16x200xf32>
    %301 = tpu.matmul %300, %298, %cst_190 {dimension_numbers = #tpu.dot_dimension_numbers<[1], [0], [0], [1], [0, 0, 1, 1], [], []>} : vector<16x25xf32>, vector<25x200xf32>, vector<16x200xf32> -> vector<16x200xf32>
    %302 = arith.addf %288, %301 : vector<16x200xf32>
    %c2_191 = arith.constant 2 : index
    %303 = memref.load %arg1[%c2_191] : memref<6xf32, #tpu.memory_space<smem>>
    %c2_192 = arith.constant 2 : index
    %304 = memref.load %arg2[%c2_192] : memref<6xf32, #tpu.memory_space<smem>>
    %cst_193 = arith.constant 0.000000e+00 : f32
    %305 = arith.cmpf oge, %303, %cst_193 : f32
    %306 = arith.select %305, %273, %275 : vector<25x200xf32>
    %307 = vector.broadcast %303 : f32 to vector<25x200xf32>
    %308 = arith.mulf %307, %306 : vector<25x200xf32>
    %309 = vector.broadcast %304 : f32 to vector<25x200xf32>
    %310 = arith.addf %308, %309 : vector<25x200xf32>
    %cst_194 = arith.constant 0.000000e+00 : f32
    %311 = vector.broadcast %cst_194 : f32 to vector<25x200xf32>
    %312 = arith.maximumf %310, %311 : vector<25x200xf32>
    %c2_195 = arith.constant 2 : index
    %c0_196 = arith.constant 0 : index
    %c0_197 = arith.constant 0 : index
    %313 = vector.load %arg5[%c2_195, %c0_196, %c0_197] : memref<6x16x25xf32, #tpu.memory_space<vmem>>, vector<1x16x25xf32>
    %314 = vector.shape_cast %313 : vector<1x16x25xf32> to vector<16x25xf32>
    %cst_198 = arith.constant dense<0.000000e+00> : vector<16x200xf32>
    %315 = tpu.matmul %314, %312, %cst_198 {dimension_numbers = #tpu.dot_dimension_numbers<[1], [0], [0], [1], [0, 0, 1, 1], [], []>} : vector<16x25xf32>, vector<25x200xf32>, vector<16x200xf32> -> vector<16x200xf32>
    %316 = arith.addf %302, %315 : vector<16x200xf32>
    %c3_199 = arith.constant 3 : index
    %317 = memref.load %arg1[%c3_199] : memref<6xf32, #tpu.memory_space<smem>>
    %c3_200 = arith.constant 3 : index
    %318 = memref.load %arg2[%c3_200] : memref<6xf32, #tpu.memory_space<smem>>
    %cst_201 = arith.constant 0.000000e+00 : f32
    %319 = arith.cmpf oge, %317, %cst_201 : f32
    %320 = arith.select %319, %273, %275 : vector<25x200xf32>
    %321 = vector.broadcast %317 : f32 to vector<25x200xf32>
    %322 = arith.mulf %321, %320 : vector<25x200xf32>
    %323 = vector.broadcast %318 : f32 to vector<25x200xf32>
    %324 = arith.addf %322, %323 : vector<25x200xf32>
    %cst_202 = arith.constant 0.000000e+00 : f32
    %325 = vector.broadcast %cst_202 : f32 to vector<25x200xf32>
    %326 = arith.maximumf %324, %325 : vector<25x200xf32>
    %c3_203 = arith.constant 3 : index
    %c0_204 = arith.constant 0 : index
    %c0_205 = arith.constant 0 : index
    %327 = vector.load %arg5[%c3_203, %c0_204, %c0_205] : memref<6x16x25xf32, #tpu.memory_space<vmem>>, vector<1x16x25xf32>
    %328 = vector.shape_cast %327 : vector<1x16x25xf32> to vector<16x25xf32>
    %cst_206 = arith.constant dense<0.000000e+00> : vector<16x200xf32>
    %329 = tpu.matmul %328, %326, %cst_206 {dimension_numbers = #tpu.dot_dimension_numbers<[1], [0], [0], [1], [0, 0, 1, 1], [], []>} : vector<16x25xf32>, vector<25x200xf32>, vector<16x200xf32> -> vector<16x200xf32>
    %330 = arith.addf %316, %329 : vector<16x200xf32>
    %c4_207 = arith.constant 4 : index
    %331 = memref.load %arg1[%c4_207] : memref<6xf32, #tpu.memory_space<smem>>
    %c4_208 = arith.constant 4 : index
    %332 = memref.load %arg2[%c4_208] : memref<6xf32, #tpu.memory_space<smem>>
    %cst_209 = arith.constant 0.000000e+00 : f32
    %333 = arith.cmpf oge, %331, %cst_209 : f32
    %334 = arith.select %333, %273, %275 : vector<25x200xf32>
    %335 = vector.broadcast %331 : f32 to vector<25x200xf32>
    %336 = arith.mulf %335, %334 : vector<25x200xf32>
    %337 = vector.broadcast %332 : f32 to vector<25x200xf32>
    %338 = arith.addf %336, %337 : vector<25x200xf32>
    %cst_210 = arith.constant 0.000000e+00 : f32
    %339 = vector.broadcast %cst_210 : f32 to vector<25x200xf32>
    %340 = arith.maximumf %338, %339 : vector<25x200xf32>
    %c4_211 = arith.constant 4 : index
    %c0_212 = arith.constant 0 : index
    %c0_213 = arith.constant 0 : index
    %341 = vector.load %arg5[%c4_211, %c0_212, %c0_213] : memref<6x16x25xf32, #tpu.memory_space<vmem>>, vector<1x16x25xf32>
    %342 = vector.shape_cast %341 : vector<1x16x25xf32> to vector<16x25xf32>
    %cst_214 = arith.constant dense<0.000000e+00> : vector<16x200xf32>
    %343 = tpu.matmul %342, %340, %cst_214 {dimension_numbers = #tpu.dot_dimension_numbers<[1], [0], [0], [1], [0, 0, 1, 1], [], []>} : vector<16x25xf32>, vector<25x200xf32>, vector<16x200xf32> -> vector<16x200xf32>
    %344 = arith.addf %330, %343 : vector<16x200xf32>
    %c5_215 = arith.constant 5 : index
    %345 = memref.load %arg1[%c5_215] : memref<6xf32, #tpu.memory_space<smem>>
    %c5_216 = arith.constant 5 : index
    %346 = memref.load %arg2[%c5_216] : memref<6xf32, #tpu.memory_space<smem>>
    %cst_217 = arith.constant 0.000000e+00 : f32
    %347 = arith.cmpf oge, %345, %cst_217 : f32
    %348 = arith.select %347, %273, %275 : vector<25x200xf32>
    %349 = vector.broadcast %345 : f32 to vector<25x200xf32>
    %350 = arith.mulf %349, %348 : vector<25x200xf32>
    %351 = vector.broadcast %346 : f32 to vector<25x200xf32>
    %352 = arith.addf %350, %351 : vector<25x200xf32>
    %cst_218 = arith.constant 0.000000e+00 : f32
    %353 = vector.broadcast %cst_218 : f32 to vector<25x200xf32>
    %354 = arith.maximumf %352, %353 : vector<25x200xf32>
    %c5_219 = arith.constant 5 : index
    %c0_220 = arith.constant 0 : index
    %c0_221 = arith.constant 0 : index
    %355 = vector.load %arg5[%c5_219, %c0_220, %c0_221] : memref<6x16x25xf32, #tpu.memory_space<vmem>>, vector<1x16x25xf32>
    %356 = vector.shape_cast %355 : vector<1x16x25xf32> to vector<16x25xf32>
    %cst_222 = arith.constant dense<0.000000e+00> : vector<16x200xf32>
    %357 = tpu.matmul %356, %354, %cst_222 {dimension_numbers = #tpu.dot_dimension_numbers<[1], [0], [0], [1], [0, 0, 1, 1], [], []>} : vector<16x25xf32>, vector<25x200xf32>, vector<16x200xf32> -> vector<16x200xf32>
    %358 = arith.addf %344, %357 : vector<16x200xf32>
    %c0_223 = arith.constant 0 : index
    %c0_224 = arith.constant 0 : index
    %359 = vector.load %arg6[%c0_223, %c0_224] : memref<16x1xf32, #tpu.memory_space<vmem>>, vector<16x1xf32>
    %360 = vector.broadcast %359 : vector<16x1xf32> to vector<16x200xf32>
    %361 = arith.addf %358, %360 : vector<16x200xf32>
    %362 = arith.maximumf %271, %361 : vector<16x200xf32>
    %cst_225 = arith.constant 0.000000e+00 : f32
    %363 = vector.broadcast %cst_225 : f32 to vector<16x200xf32>
    %364 = arith.maximumf %362, %363 : vector<16x200xf32>
    %365 = tpu.transpose %364, [1, 0] : vector<16x200xf32> -> vector<200x16xf32>
    %366 = vector.extract_strided_slice %365 {offsets = [0, 0], sizes = [8, 16], strides = [1, 1]} : vector<200x16xf32> to vector<8x16xf32>
    %367 = vector.extract_strided_slice %365 {offsets = [8, 0], sizes = [8, 16], strides = [1, 1]} : vector<200x16xf32> to vector<8x16xf32>
    %368 = vector.extract_strided_slice %365 {offsets = [16, 0], sizes = [8, 16], strides = [1, 1]} : vector<200x16xf32> to vector<8x16xf32>
    %369 = vector.extract_strided_slice %365 {offsets = [24, 0], sizes = [8, 16], strides = [1, 1]} : vector<200x16xf32> to vector<8x16xf32>
    %370 = vector.extract_strided_slice %365 {offsets = [32, 0], sizes = [8, 16], strides = [1, 1]} : vector<200x16xf32> to vector<8x16xf32>
    %371 = vector.extract_strided_slice %365 {offsets = [40, 0], sizes = [8, 16], strides = [1, 1]} : vector<200x16xf32> to vector<8x16xf32>
    %372 = vector.extract_strided_slice %365 {offsets = [48, 0], sizes = [8, 16], strides = [1, 1]} : vector<200x16xf32> to vector<8x16xf32>
    %373 = vector.extract_strided_slice %365 {offsets = [56, 0], sizes = [8, 16], strides = [1, 1]} : vector<200x16xf32> to vector<8x16xf32>
    %374 = vector.extract_strided_slice %365 {offsets = [64, 0], sizes = [8, 16], strides = [1, 1]} : vector<200x16xf32> to vector<8x16xf32>
    %375 = vector.extract_strided_slice %365 {offsets = [72, 0], sizes = [8, 16], strides = [1, 1]} : vector<200x16xf32> to vector<8x16xf32>
    %376 = vector.extract_strided_slice %365 {offsets = [80, 0], sizes = [8, 16], strides = [1, 1]} : vector<200x16xf32> to vector<8x16xf32>
    %377 = vector.extract_strided_slice %365 {offsets = [88, 0], sizes = [8, 16], strides = [1, 1]} : vector<200x16xf32> to vector<8x16xf32>
    %378 = vector.extract_strided_slice %365 {offsets = [96, 0], sizes = [8, 16], strides = [1, 1]} : vector<200x16xf32> to vector<8x16xf32>
    %379 = vector.extract_strided_slice %365 {offsets = [104, 0], sizes = [8, 16], strides = [1, 1]} : vector<200x16xf32> to vector<8x16xf32>
    %380 = vector.extract_strided_slice %365 {offsets = [112, 0], sizes = [8, 16], strides = [1, 1]} : vector<200x16xf32> to vector<8x16xf32>
    %381 = vector.extract_strided_slice %365 {offsets = [120, 0], sizes = [8, 16], strides = [1, 1]} : vector<200x16xf32> to vector<8x16xf32>
    %382 = vector.extract_strided_slice %365 {offsets = [128, 0], sizes = [8, 16], strides = [1, 1]} : vector<200x16xf32> to vector<8x16xf32>
    %383 = vector.extract_strided_slice %365 {offsets = [136, 0], sizes = [8, 16], strides = [1, 1]} : vector<200x16xf32> to vector<8x16xf32>
    %384 = vector.extract_strided_slice %365 {offsets = [144, 0], sizes = [8, 16], strides = [1, 1]} : vector<200x16xf32> to vector<8x16xf32>
    %385 = vector.extract_strided_slice %365 {offsets = [152, 0], sizes = [8, 16], strides = [1, 1]} : vector<200x16xf32> to vector<8x16xf32>
    %386 = vector.extract_strided_slice %365 {offsets = [160, 0], sizes = [8, 16], strides = [1, 1]} : vector<200x16xf32> to vector<8x16xf32>
    %387 = vector.extract_strided_slice %365 {offsets = [168, 0], sizes = [8, 16], strides = [1, 1]} : vector<200x16xf32> to vector<8x16xf32>
    %388 = vector.extract_strided_slice %365 {offsets = [176, 0], sizes = [8, 16], strides = [1, 1]} : vector<200x16xf32> to vector<8x16xf32>
    %389 = vector.extract_strided_slice %365 {offsets = [184, 0], sizes = [8, 16], strides = [1, 1]} : vector<200x16xf32> to vector<8x16xf32>
    %390 = vector.extract_strided_slice %365 {offsets = [192, 0], sizes = [8, 16], strides = [1, 1]} : vector<200x16xf32> to vector<8x16xf32>
    %391 = tpu.concatenate %366, %367, %368, %369, %370, %371, %372, %373, %374, %375, %376, %377, %378, %379, %380, %381 in 1 : vector<8x16xf32>, vector<8x16xf32>, vector<8x16xf32>, vector<8x16xf32>, vector<8x16xf32>, vector<8x16xf32>, vector<8x16xf32>, vector<8x16xf32>, vector<8x16xf32>, vector<8x16xf32>, vector<8x16xf32>, vector<8x16xf32>, vector<8x16xf32>, vector<8x16xf32>, vector<8x16xf32>, vector<8x16xf32> -> vector<8x256xf32>
    %392 = tpu.concatenate %382, %383, %384, %385, %386, %387, %388, %389, %390 in 1 : vector<8x16xf32>, vector<8x16xf32>, vector<8x16xf32>, vector<8x16xf32>, vector<8x16xf32>, vector<8x16xf32>, vector<8x16xf32>, vector<8x16xf32>, vector<8x16xf32> -> vector<8x144xf32>
    %393 = tpu.concatenate %391, %392 in 1 : vector<8x256xf32>, vector<8x144xf32> -> vector<8x400xf32>
    %c0_226 = arith.constant 0 : index
    %c0_227 = arith.constant 0 : index
    %394 = vector.load %arg7[%c0_226, %c0_227] : memref<400x128xf32, #tpu.memory_space<vmem>>, vector<400x128xf32>
    %cst_228 = arith.constant dense<0.000000e+00> : vector<8x128xf32>
    %395 = tpu.matmul %393, %394, %cst_228 {dimension_numbers = #tpu.dot_dimension_numbers<[1], [0], [0], [1], [0, 0, 1, 1], [], []>} : vector<8x400xf32>, vector<400x128xf32>, vector<8x128xf32> -> vector<8x128xf32>
    %c0_229 = arith.constant 0 : index
    %c0_230 = arith.constant 0 : index
    %396 = vector.load %arg8[%c0_229, %c0_230] : memref<1x128xf32, #tpu.memory_space<vmem>>, vector<1x128xf32>
    %397 = vector.broadcast %396 : vector<1x128xf32> to vector<8x128xf32>
    %398 = arith.addf %395, %397 : vector<8x128xf32>
    %c0_231 = arith.constant 0 : index
    %c0_232 = arith.constant 0 : index
    %399 = vector.load %arg9[%c0_231, %c0_232] : memref<128x128xf32, #tpu.memory_space<vmem>>, vector<128x128xf32>
    %cst_233 = arith.constant dense<0.000000e+00> : vector<8x128xf32>
    %400 = tpu.matmul %398, %399, %cst_233 {dimension_numbers = #tpu.dot_dimension_numbers<[1], [0], [0], [1], [0, 0, 1, 1], [], []>} : vector<8x128xf32>, vector<128x128xf32>, vector<8x128xf32> -> vector<8x128xf32>
    %c0_234 = arith.constant 0 : index
    %c0_235 = arith.constant 0 : index
    %401 = vector.load %arg10[%c0_234, %c0_235] : memref<1x128xf32, #tpu.memory_space<vmem>>, vector<1x128xf32>
    %402 = vector.broadcast %401 : vector<1x128xf32> to vector<8x128xf32>
    %403 = arith.addf %400, %402 : vector<8x128xf32>
    %c0_236 = arith.constant 0 : index
    %c0_237 = arith.constant 0 : index
    %404 = vector.load %arg11[%c0_236, %c0_237] : memref<128x128xf32, #tpu.memory_space<vmem>>, vector<128x128xf32>
    %cst_238 = arith.constant dense<0.000000e+00> : vector<8x128xf32>
    %405 = tpu.matmul %403, %404, %cst_238 {dimension_numbers = #tpu.dot_dimension_numbers<[1], [0], [0], [1], [0, 0, 1, 1], [], []>} : vector<8x128xf32>, vector<128x128xf32>, vector<8x128xf32> -> vector<8x128xf32>
    %c0_239 = arith.constant 0 : index
    %c0_240 = arith.constant 0 : index
    %406 = vector.load %arg12[%c0_239, %c0_240] : memref<1x128xf32, #tpu.memory_space<vmem>>, vector<1x128xf32>
    %407 = vector.broadcast %406 : vector<1x128xf32> to vector<8x128xf32>
    %408 = arith.addf %405, %407 : vector<8x128xf32>
    %c0_241 = arith.constant 0 : index
    %c0_242 = arith.constant 0 : index
    %409 = vector.load %arg13[%c0_241, %c0_242] : memref<8x128xf32, #tpu.memory_space<vmem>>, vector<8x128xf32>
    tpu.vector_store %arg13[%c0_241, %c0_242], %408 {strides = array<i32>} : memref<8x128xf32, #tpu.memory_space<vmem>>, vector<8x128xf32>,
    return
  }
  func.func @transform_0(%arg0: i32) -> i32 {
    %c0_i32 = arith.constant 0 : i32
    %c0_i32_0 = arith.constant 0 : i32
    return %c0_i32 : i32
  }
  func.func @transform_1(%arg0: i32) -> i32 {
    %c0_i32 = arith.constant 0 : i32
    %c0_i32_0 = arith.constant 0 : i32
    return %c0_i32 : i32
  }
  func.func @transform_2(%arg0: i32) -> (i32, i32, i32, i32) {
    %c0_i32 = arith.constant 0 : i32
    %c0_i32_0 = arith.constant 0 : i32
    %c0_i32_1 = arith.constant 0 : i32
    %c0_i32_2 = arith.constant 0 : i32
    return %arg0, %c0_i32, %c0_i32_0, %c0_i32_1 : i32, i32, i32, i32
  }
  func.func @transform_3(%arg0: i32) -> (i32, i32, i32, i32) {
    %c0_i32 = arith.constant 0 : i32
    %c0_i32_0 = arith.constant 0 : i32
    %c0_i32_1 = arith.constant 0 : i32
    %c0_i32_2 = arith.constant 0 : i32
    return %arg0, %c0_i32, %c0_i32_0, %c0_i32_1 : i32, i32, i32, i32
  }
  func.func @transform_4(%arg0: i32) -> (i32, i32, i32) {
    %c0_i32 = arith.constant 0 : i32
    %c0_i32_0 = arith.constant 0 : i32
    %c0_i32_1 = arith.constant 0 : i32
    %c0_i32_2 = arith.constant 0 : i32
    return %c0_i32, %c0_i32_0, %c0_i32_1 : i32, i32, i32
  }
  func.func @transform_5(%arg0: i32) -> (i32, i32) {
    %c0_i32 = arith.constant 0 : i32
    %c0_i32_0 = arith.constant 0 : i32
    %c0_i32_1 = arith.constant 0 : i32
    return %c0_i32, %c0_i32_0 : i32, i32
  }
  func.func @transform_6(%arg0: i32) -> (i32, i32) {
    %c0_i32 = arith.constant 0 : i32
    %c0_i32_0 = arith.constant 0 : i32
    %c0_i32_1 = arith.constant 0 : i32
    return %c0_i32, %c0_i32_0 : i32, i32
  }
  func.func @transform_7(%arg0: i32) -> (i32, i32) {
    %c0_i32 = arith.constant 0 : i32
    %c0_i32_0 = arith.constant 0 : i32
    %c0_i32_1 = arith.constant 0 : i32
    return %c0_i32, %c0_i32_0 : i32, i32
  }
  func.func @transform_8(%arg0: i32) -> (i32, i32) {
    %c0_i32 = arith.constant 0 : i32
    %c0_i32_0 = arith.constant 0 : i32
    %c0_i32_1 = arith.constant 0 : i32
    return %c0_i32, %c0_i32_0 : i32, i32
  }
  func.func @transform_9(%arg0: i32) -> (i32, i32) {
    %c0_i32 = arith.constant 0 : i32
    %c0_i32_0 = arith.constant 0 : i32
    %c0_i32_1 = arith.constant 0 : i32
    return %c0_i32, %c0_i32_0 : i32, i32
  }
  func.func @transform_10(%arg0: i32) -> (i32, i32) {
    %c0_i32 = arith.constant 0 : i32
    %c0_i32_0 = arith.constant 0 : i32
    %c0_i32_1 = arith.constant 0 : i32
    return %c0_i32, %c0_i32_0 : i32, i32
  }
  func.func @transform_11(%arg0: i32) -> (i32, i32) {
    %c0_i32 = arith.constant 0 : i32
    %c0_i32_0 = arith.constant 0 : i32
    %c0_i32_1 = arith.constant 0 : i32
    return %c0_i32, %c0_i32_0 : i32, i32
  }
  func.func @transform_12(%arg0: i32) -> (i32, i32) {
    %c0_i32 = arith.constant 0 : i32
    %c0_i32_0 = arith.constant 0 : i32
    return %arg0, %c0_i32 : i32, i32
  }
}

</mosaic_0001>

<llo_original>
// kernel: lenet_forward.1
$region0: #{lenet_forward.1}
  #allocation0 [shape = 'u32[]', space=smem, size = 0x4, offset = 0x4, fixed_abs, tag = 'smem constant byte address 0x4 - core index']
  #allocation1 [shape = 'u32[144,128]{1,0:T(1,128)}', space=vmem, size = 0x12000, scoped, tag = 'internal scratch']
  %s0 = inlined_call_operand.vmem [shape: f32[6], index: 0, kind: input, shape index: {}]
  %s1 = inlined_call_operand.vmem [shape: f32[6], index: 1, kind: input, shape index: {}]
  %s2 = inlined_call_operand.vmem [shape: f32[2,4,25,200], index: 2, kind: input, shape index: {}]
  %s3 = inlined_call_operand.vmem [shape: f32[2,4,25,200], index: 3, kind: input, shape index: {}]
  %s4 = inlined_call_operand.vmem [shape: f32[6,16,25], index: 4, kind: input, shape index: {}]
  %s5 = inlined_call_operand.vmem [shape: f32[16,1], index: 5, kind: input, shape index: {}]
  %s6 = inlined_call_operand.vmem [shape: f32[400,128], index: 6, kind: input, shape index: {}]
  %s7 = inlined_call_operand.vmem [shape: f32[1,128], index: 7, kind: input, shape index: {}]
  %s8 = inlined_call_operand.vmem [shape: f32[128,128], index: 8, kind: input, shape index: {}]
  %s9 = inlined_call_operand.vmem [shape: f32[1,128], index: 9, kind: input, shape index: {}]
  %s10 = inlined_call_operand.vmem [shape: f32[128,128], index: 10, kind: input, shape index: {}]
  %s11 = inlined_call_operand.vmem [shape: f32[1,128], index: 11, kind: input, shape index: {}]
  %s12 = inlined_call_operand.hbm [shape: f32[16,128], index: 12, kind: output, shape index: {}]
  %s13 = sld [smem:[#allocation0]]
  $region89: #{lenet_forward.1} parent=0
    _
  %s15 = ssub.s32 1, %s13
  %s16 = scalar_select 0, %s15, %s13
  $region1: #{lenet_forward.1} parent=0
    #allocation2 [shape = 'u8[512]{0}', space=smem, size = 0x200, scoped, tag = 'input window, operand 0, single buffered']
    #allocation3 [shape = 's32[2]{0}', space=sflag, size = 0x8, scoped, tag = 'scoped memory for lenet_forward.1']
    #allocation4 [shape = 's32[2]{0}', space=sflag, size = 0x8, scoped, tag = 'scoped memory for lenet_forward.1']
    #allocation5 [shape = 'u8[512]{0}', space=smem, size = 0x200, scoped, tag = 'input window, operand 1, single buffered']
    #allocation6 [shape = 's32[1]{0}', space=sflag, size = 0x4, scoped, tag = 'scoped memory for lenet_forward.1']
    #allocation7 [shape = 'u8[8192]{0}', space=vmem, size = 0x2000, scoped, tag = 'output window, operand 0']
    %17 = vsyncpa [#allocation4], 0
    %18 = vsyncpa [#allocation6], 0
    %19 = vsyncpa [#allocation3], 0
    %s20 = scalar_lea.sflag [#allocation3], 1
    %21 = vsyncpa %s20, 0
    loop: start=0, step=1, limit=4
    $region2: #{lenet_forward.1} parent=1 // loop_pre_header
      _
    $region3: #{lenet_forward.1} parent=1 // loop_header
      %s23 = sphi 0, %s27
      %p24 = scmp.ge.s32.totalorder %s23, 4
      %s31 = sphi 0, %s31
      %s33 = sphi 0, %s31
      %s34 = sphi 0, %s33
      %s48 = sphi 0, %s34
      %s52 = sphi 0, %s52
      %s54 = sphi 0, %s52
      %s55 = sphi 0, %s54
      %s69 = sphi 0, %s55
      %s75 = sphi 0, %s77
      %s78 = sphi 0, %s75
      %s79 = sphi 0, %s78
      %s95 = sphi 0, %s79
      %s101 = sphi 0, %s103
      %s104 = sphi 0, %s101
      %s105 = sphi 0, %s104
      %s121 = sphi 0, %s105
      %s125 = sphi 0, %s125
      %s127 = sphi 0, %s125
      %s128 = sphi 0, %s127
      %s142 = sphi 0, %s128
      %s146 = sphi 0, %s146
      %s148 = sphi 0, %s146
      %s149 = sphi 0, %s148
      %s163 = sphi 0, %s149
      %s167 = sphi 0, %s167
      %s169 = sphi 0, %s167
      %s170 = sphi 0, %s169
      %s184 = sphi 0, %s170
      %s188 = sphi 0, %s188
      %s190 = sphi 0, %s188
      %s191 = sphi 0, %s190
      %s205 = sphi 0, %s191
      %s209 = sphi 0, %s209
      %s211 = sphi 0, %s209
      %s212 = sphi 0, %s211
      %s226 = sphi 0, %s212
      %s230 = sphi 0, %s230
      %s232 = sphi 0, %s230
      %s233 = sphi 0, %s232
      %s247 = sphi 0, %s233
      %s251 = sphi 0, %s251
      %s253 = sphi 0, %s251
      %s254 = sphi 0, %s253
      %s268 = sphi 0, %s254
      %s272 = sphi 0, %s272
      %s274 = sphi 0, %s272
      %s275 = sphi 0, %s274
      %s289 = sphi 0, %s275
      %s295 = sphi 0, %s297
      %s298 = sphi 0, %s295
      %s299 = sphi 0, %s298
      %s315 = sphi 0, %s299
    $region4: #{lenet_forward.1} parent=1 // loop_header_branch
      %26 = sbr.rel (%p24) target = $region8
    $region5: #{lenet_forward.1} parent=1 // loop_body
      %s28 = ssub.s32 %s23, 1
      %s29 = ssub.s32 %s23, 2
      %s30 = sadd.s32 %s23, 1
      %s32 = sadd.s32 %s31, 1
      %p35 = scmp.eq.s32.totalorder %s23, 1
      %p36 = scmp.ne.s32.totalorder %s31, %s33
      %p37 = scmp.eq.s32.totalorder %s23, 0
      %p38 = por %p36, %p37
      %p39 = scmp.ne.s32.totalorder %s31, %s33
      %p40 = scmp.eq.s32.totalorder %s28, 1
      %p41 = por %p39, %p40
      %p42 = scmp.ne.s32.totalorder %s33, %s34
      %p43 = scmp.eq.s32.totalorder %s28, 0
      %p44 = por %p42, %p43
      %p45 = scmp.ne.s32.totalorder %s33, %s34
      %p46 = scmp.eq.s32.totalorder %s29, 1
      %p47 = por %p45, %p46
      %p49 = scmp.ne.s32.totalorder %s34, %s48
      %p50 = scmp.eq.s32.totalorder %s29, 0
      %p51 = por %p49, %p50
      %s53 = sadd.s32 %s52, 1
      %p56 = scmp.eq.s32.totalorder %s23, 1
      %p57 = scmp.ne.s32.totalorder %s52, %s54
      %p58 = scmp.eq.s32.totalorder %s23, 0
      %p59 = por %p57, %p58
      %p60 = scmp.ne.s32.totalorder %s52, %s54
      %p61 = scmp.eq.s32.totalorder %s28, 1
      %p62 = por %p60, %p61
      %p63 = scmp.ne.s32.totalorder %s54, %s55
      %p64 = scmp.eq.s32.totalorder %s28, 0
      %p65 = por %p63, %p64
      %p66 = scmp.ne.s32.totalorder %s54, %s55
      %p67 = scmp.eq.s32.totalorder %s29, 1
      %p68 = por %p66, %p67
      %p70 = scmp.ne.s32.totalorder %s55, %s69
      %p71 = scmp.eq.s32.totalorder %s29, 0
      %p72 = por %p70, %p71
      %s73 = ssub.s32 %s23, %s30
      %p74 = scmp.eq.s32.totalorder %s73, 0
      %s76 = sadd.s32 %s75, 1
      %s77 = scalar_select %p74, %s75, %s76
      %p80 = pneg %p74
      %p81 = scmp.eq.s32.totalorder %s23, 1
      %p82 = por %p80, %p81
      %p83 = scmp.ne.s32.totalorder %s75, %s78
      %p84 = scmp.eq.s32.totalorder %s23, 0
      %p85 = por %p83, %p84
      %p86 = scmp.ne.s32.totalorder %s75, %s78
      %p87 = scmp.eq.s32.totalorder %s28, 1
      %p88 = por %p86, %p87
      %p89 = scmp.ne.s32.totalorder %s78, %s79
      %p90 = scmp.eq.s32.totalorder %s28, 0
      %p91 = por %p89, %p90
      %p92 = scmp.ne.s32.totalorder %s78, %s79
      %p93 = scmp.eq.s32.totalorder %s29, 1
      %p94 = por %p92, %p93
      %p96 = scmp.ne.s32.totalorder %s79, %s95
      %p97 = scmp.eq.s32.totalorder %s29, 0
      %p98 = por %p96, %p97
      %s99 = ssub.s32 %s23, %s30
      %p100 = scmp.eq.s32.totalorder %s99, 0
      %s102 = sadd.s32 %s101, 1
      %s103 = scalar_select %p100, %s101, %s102
      %p106 = pneg %p100
      %p107 = scmp.eq.s32.totalorder %s23, 1
      %p108 = por %p106, %p107
      %p109 = scmp.ne.s32.totalorder %s101, %s104
      %p110 = scmp.eq.s32.totalorder %s23, 0
      %p111 = por %p109, %p110
      %p112 = scmp.ne.s32.totalorder %s101, %s104
      %p113 = scmp.eq.s32.totalorder %s28, 1
      %p114 = por %p112, %p113
      %p115 = scmp.ne.s32.totalorder %s104, %s105
      %p116 = scmp.eq.s32.totalorder %s28, 0
      %p117 = por %p115, %p116
      %p118 = scmp.ne.s32.totalorder %s104, %s105
      %p119 = scmp.eq.s32.totalorder %s29, 1
      %p120 = por %p118, %p119
      %p122 = scmp.ne.s32.totalorder %s105, %s121
      %p123 = scmp.eq.s32.totalorder %s29, 0
      %p124 = por %p122, %p123
      %s126 = sadd.s32 %s125, 1
      %p129 = scmp.eq.s32.totalorder %s23, 1
      %p130 = scmp.ne.s32.totalorder %s125, %s127
      %p131 = scmp.eq.s32.totalorder %s23, 0
      %p132 = por %p130, %p131
      %p133 = scmp.ne.s32.totalorder %s125, %s127
      %p134 = scmp.eq.s32.totalorder %s28, 1
      %p135 = por %p133, %p134
      %p136 = scmp.ne.s32.totalorder %s127, %s128
      %p137 = scmp.eq.s32.totalorder %s28, 0
      %p138 = por %p136, %p137
      %p139 = scmp.ne.s32.totalorder %s127, %s128
      %p140 = scmp.eq.s32.totalorder %s29, 1
      %p141 = por %p139, %p140
      %p143 = scmp.ne.s32.totalorder %s128, %s142
      %p144 = scmp.eq.s32.totalorder %s29, 0
      %p145 = por %p143, %p144
      %s147 = sadd.s32 %s146, 1
      %p150 = scmp.eq.s32.totalorder %s23, 1
      %p151 = scmp.ne.s32.totalorder %s146, %s148
      %p152 = scmp.eq.s32.totalorder %s23, 0
      %p153 = por %p151, %p152
      %p154 = scmp.ne.s32.totalorder %s146, %s148
      %p155 = scmp.eq.s32.totalorder %s28, 1
      %p156 = por %p154, %p155
      %p157 = scmp.ne.s32.totalorder %s148, %s149
      %p158 = scmp.eq.s32.totalorder %s28, 0
      %p159 = por %p157, %p158
      %p160 = scmp.ne.s32.totalorder %s148, %s149
      %p161 = scmp.eq.s32.totalorder %s29, 1
      %p162 = por %p160, %p161
      %p164 = scmp.ne.s32.totalorder %s149, %s163
      %p165 = scmp.eq.s32.totalorder %s29, 0
      %p166 = por %p164, %p165
      %s168 = sadd.s32 %s167, 1
      %p171 = scmp.eq.s32.totalorder %s23, 1
      %p172 = scmp.ne.s32.totalorder %s167, %s169
      %p173 = scmp.eq.s32.totalorder %s23, 0
      %p174 = por %p172, %p173
      %p175 = scmp.ne.s32.totalorder %s167, %s169
      %p176 = scmp.eq.s32.totalorder %s28, 1
      %p177 = por %p175, %p176
      %p178 = scmp.ne.s32.totalorder %s169, %s170
      %p179 = scmp.eq.s32.totalorder %s28, 0
      %p180 = por %p178, %p179
      %p181 = scmp.ne.s32.totalorder %s169, %s170
      %p182 = scmp.eq.s32.totalorder %s29, 1
      %p183 = por %p181, %p182
      %p185 = scmp.ne.s32.totalorder %s170, %s184
      %p186 = scmp.eq.s32.totalorder %s29, 0
      %p187 = por %p185, %p186
      %s189 = sadd.s32 %s188, 1
      %p192 = scmp.eq.s32.totalorder %s23, 1
      %p193 = scmp.ne.s32.totalorder %s188, %s190
      %p194 = scmp.eq.s32.totalorder %s23, 0
      %p195 = por %p193, %p194
      %p196 = scmp.ne.s32.totalorder %s188, %s190
      %p197 = scmp.eq.s32.totalorder %s28, 1
      %p198 = por %p196, %p197
      %p199 = scmp.ne.s32.totalorder %s190, %s191
      %p200 = scmp.eq.s32.totalorder %s28, 0
      %p201 = por %p199, %p200
      %p202 = scmp.ne.s32.totalorder %s190, %s191
      %p203 = scmp.eq.s32.totalorder %s29, 1
      %p204 = por %p202, %p203
      %p206 = scmp.ne.s32.totalorder %s191, %s205
      %p207 = scmp.eq.s32.totalorder %s29, 0
      %p208 = por %p206, %p207
      %s210 = sadd.s32 %s209, 1
      %p213 = scmp.eq.s32.totalorder %s23, 1
      %p214 = scmp.ne.s32.totalorder %s209, %s211
      %p215 = scmp.eq.s32.totalorder %s23, 0
      %p216 = por %p214, %p215
      %p217 = scmp.ne.s32.totalorder %s209, %s211
      %p218 = scmp.eq.s32.totalorder %s28, 1
      %p219 = por %p217, %p218
      %p220 = scmp.ne.s32.totalorder %s211, %s212
      %p221 = scmp.eq.s32.totalorder %s28, 0
      %p222 = por %p220, %p221
      %p223 = scmp.ne.s32.totalorder %s211, %s212
      %p224 = scmp.eq.s32.totalorder %s29, 1
      %p225 = por %p223, %p224
      %p227 = scmp.ne.s32.totalorder %s212, %s226
      %p228 = scmp.eq.s32.totalorder %s29, 0
      %p229 = por %p227, %p228
      %s231 = sadd.s32 %s230, 1
      %p234 = scmp.eq.s32.totalorder %s23, 1
      %p235 = scmp.ne.s32.totalorder %s230, %s232
      %p236 = scmp.eq.s32.totalorder %s23, 0
      %p237 = por %p235, %p236
      %p238 = scmp.ne.s32.totalorder %s230, %s232
      %p239 = scmp.eq.s32.totalorder %s28, 1
      %p240 = por %p238, %p239
      %p241 = scmp.ne.s32.totalorder %s232, %s233
      %p242 = scmp.eq.s32.totalorder %s28, 0
      %p243 = por %p241, %p242
      %p244 = scmp.ne.s32.totalorder %s232, %s233
      %p245 = scmp.eq.s32.totalorder %s29, 1
      %p246 = por %p244, %p245
      %p248 = scmp.ne.s32.totalorder %s233, %s247
      %p249 = scmp.eq.s32.totalorder %s29, 0
      %p250 = por %p248, %p249
      %s252 = sadd.s32 %s251, 1
      %p255 = scmp.eq.s32.totalorder %s23, 1
      %p256 = scmp.ne.s32.totalorder %s251, %s253
      %p257 = scmp.eq.s32.totalorder %s23, 0
      %p258 = por %p256, %p257
      %p259 = scmp.ne.s32.totalorder %s251, %s253
      %p260 = scmp.eq.s32.totalorder %s28, 1
      %p261 = por %p259, %p260
      %p262 = scmp.ne.s32.totalorder %s253, %s254
      %p263 = scmp.eq.s32.totalorder %s28, 0
      %p264 = por %p262, %p263
      %p265 = scmp.ne.s32.totalorder %s253, %s254
      %p266 = scmp.eq.s32.totalorder %s29, 1
      %p267 = por %p265, %p266
      %p269 = scmp.ne.s32.totalorder %s254, %s268
      %p270 = scmp.eq.s32.totalorder %s29, 0
      %p271 = por %p269, %p270
      %s273 = sadd.s32 %s272, 1
      %p276 = scmp.eq.s32.totalorder %s23, 1
      %p277 = scmp.ne.s32.totalorder %s272, %s274
      %p278 = scmp.eq.s32.totalorder %s23, 0
      %p279 = por %p277, %p278
      %p280 = scmp.ne.s32.totalorder %s272, %s274
      %p281 = scmp.eq.s32.totalorder %s28, 1
      %p282 = por %p280, %p281
      %p283 = scmp.ne.s32.totalorder %s274, %s275
      %p284 = scmp.eq.s32.totalorder %s28, 0
      %p285 = por %p283, %p284
      %p286 = scmp.ne.s32.totalorder %s274, %s275
      %p287 = scmp.eq.s32.totalorder %s29, 1
      %p288 = por %p286, %p287
      %p290 = scmp.ne.s32.totalorder %s275, %s289
      %p291 = scmp.eq.s32.totalorder %s29, 0
      %p292 = por %p290, %p291
      %s293 = ssub.s32 %s23, %s30
      %p294 = scmp.eq.s32.totalorder %s293, 0
      %s296 = sadd.s32 %s295, 1
      %s297 = scalar_select %p294, %s295, %s296
      %p300 = pneg %p294
      %p301 = scmp.eq.s32.totalorder %s23, 1
      %p302 = por %p300, %p301
      %p303 = scmp.ne.s32.totalorder %s295, %s298
      %p304 = scmp.eq.s32.totalorder %s23, 0
      %p305 = por %p303, %p304
      %p306 = scmp.ne.s32.totalorder %s295, %s298
      %p307 = scmp.eq.s32.totalorder %s28, 1
      %p308 = por %p306, %p307
      %p309 = scmp.ne.s32.totalorder %s298, %s299
      %p310 = scmp.eq.s32.totalorder %s28, 0
      %p311 = por %p309, %p310
      %p312 = scmp.ne.s32.totalorder %s298, %s299
      %p313 = scmp.eq.s32.totalorder %s29, 1
      %p314 = por %p312, %p313
      %p316 = scmp.ne.s32.totalorder %s299, %s315
      %p317 = scmp.eq.s32.totalorder %s29, 0
      %p318 = por %p316, %p317
      %p319 = scmp.le.s32.totalorder 1, %s23
      %p320 = scmp.lt.s32.totalorder %s23, 3
      %p321 = pnand %p319, %p320
      %p322 = pneg %p321
      // Predicated region
      $region9: #{lenet_forward.1} parent=5 // pred_check
        _
      $region10: #{lenet_forward.1} parent=5 // pred_check_branch
        %324 = sbr.rel (%p321) target = $region12
      $region11: #{lenet_forward.1} parent=5 // pred_region
        %s325 = ssub.s32 %s23, 1
        // Predicated region
        $region13: #{lenet_forward.1} parent=11 // pred_check
          %p326 = pneg %p44
        $region14: #{lenet_forward.1} parent=11 // pred_check_branch
          %328 = sbr.rel (%p326) target = $region16
        $region15: #{lenet_forward.1} parent=11 // pred_region
          %s330 = ssub.s32 16, 16
          %331 = vsyncadd [#allocation4], %s330
          %s333 = sshll.u32 %s0, 4
          %s334 = int_to_ptr.vmem [resolvable:$true] %s333
          %336 = dma.vmem_to_smem %s334, 16, [#allocation2], [#allocation4]
        $region16: #{lenet_forward.1} parent=11 // pred_fallthru
          _
        // Predicated region
        $region17: #{lenet_forward.1} parent=11 // pred_check
          %p337 = pneg %p65
        $region18: #{lenet_forward.1} parent=11 // pred_check_branch
          %339 = sbr.rel (%p337) target = $region20
        $region19: #{lenet_forward.1} parent=11 // pred_region
          %s341 = ssub.s32 16, 16
          %342 = vsyncadd [#allocation6], %s341
          %s344 = sshll.u32 %s1, 4
          %s345 = int_to_ptr.vmem [resolvable:$true] %s344
          %347 = dma.vmem_to_smem %s345, 16, [#allocation5], [#allocation6]
        $region20: #{lenet_forward.1} parent=11 // pred_fallthru
          _
        // Predicated region
        $region21: #{lenet_forward.1} parent=11 // pred_check
          %p348 = pneg %p138
        $region22: #{lenet_forward.1} parent=11 // pred_check_branch
          %350 = sbr.rel (%p348) target = $region24
        $region23: #{lenet_forward.1} parent=11 // pred_region
          _
        $region24: #{lenet_forward.1} parent=11 // pred_fallthru
          _
        // Predicated region
        $region25: #{lenet_forward.1} parent=11 // pred_check
          %p351 = pneg %p159
        $region26: #{lenet_forward.1} parent=11 // pred_check_branch
          %353 = sbr.rel (%p351) target = $region28
        $region27: #{lenet_forward.1} parent=11 // pred_region
          _
        $region28: #{lenet_forward.1} parent=11 // pred_fallthru
          _
        // Predicated region
        $region29: #{lenet_forward.1} parent=11 // pred_check
          %p354 = pneg %p180
        $region30: #{lenet_forward.1} parent=11 // pred_check_branch
          %356 = sbr.rel (%p354) target = $region32
        $region31: #{lenet_forward.1} parent=11 // pred_region
          _
        $region32: #{lenet_forward.1} parent=11 // pred_fallthru
          _
        // Predicated region
        $region33: #{lenet_forward.1} parent=11 // pred_check
          %p357 = pneg %p201
        $region34: #{lenet_forward.1} parent=11 // pred_check_branch
          %359 = sbr.rel (%p357) target = $region36
        $region35: #{lenet_forward.1} parent=11 // pred_region
          _
        $region36: #{lenet_forward.1} parent=11 // pred_fallthru
          _
        // Predicated region
        $region37: #{lenet_forward.1} parent=11 // pred_check
          %p360 = pneg %p222
        $region38: #{lenet_forward.1} parent=11 // pred_check_branch
          %362 = sbr.rel (%p360) target = $region40
        $region39: #{lenet_forward.1} parent=11 // pred_region
          _
        $region40: #{lenet_forward.1} parent=11 // pred_fallthru
          _
        // Predicated region
        $region41: #{lenet_forward.1} parent=11 // pred_check
          %p363 = pneg %p243
        $region42: #{lenet_forward.1} parent=11 // pred_check_branch
          %365 = sbr.rel (%p363) target = $region44
        $region43: #{lenet_forward.1} parent=11 // pred_region
          _
        $region44: #{lenet_forward.1} parent=11 // pred_fallthru
          _
        // Predicated region
        $region45: #{lenet_forward.1} parent=11 // pred_check
          %p366 = pneg %p264
        $region46: #{lenet_forward.1} parent=11 // pred_check_branch
          %368 = sbr.rel (%p366) target = $region48
        $region47: #{lenet_forward.1} parent=11 // pred_region
          _
        $region48: #{lenet_forward.1} parent=11 // pred_fallthru
          _
        // Predicated region
        $region49: #{lenet_forward.1} parent=11 // pred_check
          %p369 = pneg %p285
        $region50: #{lenet_forward.1} parent=11 // pred_check_branch
          %371 = sbr.rel (%p369) target = $region52
        $region51: #{lenet_forward.1} parent=11 // pred_region
          _
        $region52: #{lenet_forward.1} parent=11 // pred_fallthru
          _
      $region12: #{lenet_forward.1} parent=5 // pred_fallthru
        _
      %p372 = scmp.lt.s32.totalorder %s23, 2
      // Predicated region
      $region53: #{lenet_forward.1} parent=5 // pred_check
        %p373 = pneg %p372
      $region54: #{lenet_forward.1} parent=5 // pred_check_branch
        %375 = sbr.rel (%p373) target = $region56
      $region55: #{lenet_forward.1} parent=5 // pred_region
        // Predicated region
        $region57: #{lenet_forward.1} parent=55 // pred_check
          %p376 = pneg %p85
        $region58: #{lenet_forward.1} parent=55 // pred_check_branch
          %378 = sbr.rel (%p376) target = $region60
        $region59: #{lenet_forward.1} parent=55 // pred_region
          %p379 = scmp.lt.s32.totalorder %s23, 1
          %s380 = scalar_select %p379, %s23, 1
          %s381 = smul.addr %s380, 32
          %s382 = smul.addr %s381, 8
          %s383 = scalar_lea.vmem %s2, %s382
        $region60: #{lenet_forward.1} parent=55 // pred_fallthru
          _
        // Predicated region
        $region61: #{lenet_forward.1} parent=55 // pred_check
          %p384 = pneg %p111
        $region62: #{lenet_forward.1} parent=55 // pred_check_branch
          %386 = sbr.rel (%p384) target = $region64
        $region63: #{lenet_forward.1} parent=55 // pred_region
          %p387 = scmp.lt.s32.totalorder %s23, 1
          %s388 = scalar_select %p387, %s23, 1
          %s389 = smul.addr %s388, 32
          %s390 = smul.addr %s389, 8
          %s391 = scalar_lea.vmem %s3, %s390
        $region64: #{lenet_forward.1} parent=55 // pred_fallthru
          _
      $region56: #{lenet_forward.1} parent=5 // pred_fallthru
        _
      %p392 = scmp.le.s32.totalorder 1, %s23
      %p393 = scmp.lt.s32.totalorder %s23, 3
      %p394 = pnand %p392, %p393
      %p395 = pneg %p394
      // Predicated region
      $region65: #{lenet_forward.1} parent=5 // pred_check
        _
      $region66: #{lenet_forward.1} parent=5 // pred_check_branch
        %397 = sbr.rel (%p394) target = $region68
      $region67: #{lenet_forward.1} parent=5 // pred_region
        %s398 = ssub.s32 %s23, 1
        // Predicated region
        $region69: #{lenet_forward.1} parent=67 // pred_check
          %p399 = pneg %p44
        $region70: #{lenet_forward.1} parent=67 // pred_check_branch
          %401 = sbr.rel (%p399) target = $region72
        $region71: #{lenet_forward.1} parent=67 // pred_region
          %402 = dma.done [#allocation4], 16
        $region72: #{lenet_forward.1} parent=67 // pred_fallthru
          _
        // Predicated region
        $region73: #{lenet_forward.1} parent=67 // pred_check
          %p403 = pneg %p65
        $region74: #{lenet_forward.1} parent=67 // pred_check_branch
          %405 = sbr.rel (%p403) target = $region76
        $region75: #{lenet_forward.1} parent=67 // pred_region
          %406 = dma.done [#allocation6], 16
        $region76: #{lenet_forward.1} parent=67 // pred_fallthru
          _
        %407 = sfence
        %p408 = pneg %p44
        %p409 = pneg %p41
        %p410 = pneg %p65
        %p411 = pneg %p62
        %p412 = scmp.lt.s32.totalorder %s28, 1
        %s413 = scalar_select %p412, %s28, 1
        %s414 = smul.addr %s413, 32
        %s415 = smul.addr %s414, 8
        %s416 = scalar_lea.vmem %s2, %s415
        %p417 = pneg %p91
        %p418 = pneg %p88
        %p419 = scmp.lt.s32.totalorder %s28, 1
        %s420 = scalar_select %p419, %s28, 1
        %s421 = smul.addr %s420, 32
        %s422 = smul.addr %s421, 8
        %s423 = scalar_lea.vmem %s3, %s422
        %p424 = pneg %p117
        %p425 = pneg %p114
        %p426 = pneg %p138
        %p427 = pneg %p135
        %p428 = pneg %p159
        %p429 = pneg %p156
        %p430 = pneg %p180
        %p431 = pneg %p177
        %p432 = pneg %p201
        %p433 = pneg %p198
        %p434 = pneg %p222
        %p435 = pneg %p219
        %p436 = pneg %p243
        %p437 = pneg %p240
        %p438 = pneg %p264
        %p439 = pneg %p261
        %p440 = pneg %p285
        %p441 = pneg %p282
        %p442 = pneg %p311
        %p443 = pneg %p308
        %s444 = sand.u32 %s298, 1
        %s445 = scalar_lea.sflag [#allocation3], %s444
        %s446 = sand.u32 %s298, 1
        %s447 = smul.addr %s446, 8
        %s448 = scalar_lea.vmem [#allocation7], %s447
        %p449 = scmp.lt.s32.totalorder %s28, 1
        %s450 = scalar_select %p449, %s28, 1
        %s451 = smul.addr %s450, 32
        %s452 = smul.addr %s451, 8
        %s453 = scalar_lea.vmem %s2, %s452
        %p454 = scmp.lt.s32.totalorder %s28, 1
        %s455 = scalar_select %p454, %s28, 1
        %s456 = smul.addr %s455, 32
        %s457 = smul.addr %s456, 8
        %s458 = scalar_lea.vmem %s3, %s457
        %v459 = vld [vmem:[%s453] sm:$0xff]
        %v460 = vld [vmem:[%s453 + $0x8] sm:$0xff]
        %v461 = vld [vmem:[%s453 + $0x10] sm:$0xff]
        %v462 = vld [vmem:[%s453 + $0x18] sm:$0xff]
        %v463 = vld [vmem:[%s453 + $0x20] sm:$0xff]
        %v464 = vld [vmem:[%s453 + $0x28] sm:$0xff]
        %v465 = vld [vmem:[%s453 + $0x30] sm:$0x1]
        %v466 = vld [vmem:[%s453 + $0x38] sm:$0x1]
        %v467 = vld [vmem:[%s458] sm:$0xff]
        %v468 = vld [vmem:[%s458 + $0x8] sm:$0xff]
        %v469 = vld [vmem:[%s458 + $0x10] sm:$0xff]
        %v470 = vld [vmem:[%s458 + $0x18] sm:$0xff]
        %v471 = vld [vmem:[%s458 + $0x20] sm:$0xff]
        %v472 = vld [vmem:[%s458 + $0x28] sm:$0xff]
        %v473 = vld [vmem:[%s458 + $0x30] sm:$0x1]
        %v474 = vld [vmem:[%s458 + $0x38] sm:$0x1]
        %s475 = sld [smem:[#allocation2]]
        %s476 = sld [smem:[#allocation5]]
        %p477 = scmp.ge.f32.partialorder %s475, 0.0
        %s478 = scalar_select %p477, 1, 0
        %v479 = vstv %s478
        %vm480 = vcmp.eq.s32.totalorder %v479, 1
        %v481 = vsel %vm480, %v459, %v467
        %v482 = vsel %vm480, %v460, %v468
        %v483 = vsel %vm480, %v461, %v469
        %v484 = vsel %vm480, %v462, %v470
        %v485 = vsel %vm480, %v463, %v471
        %v486 = vsel %vm480, %v464, %v472
        %v487 = vsel %vm480, %v465, %v473
        %v488 = vsel %vm480, %v466, %v474
        %v489 = vstv %s475
        %v490 = vmul.f32 %v489, %v481
        %v491 = vmul.f32 %v489, %v482
        %v492 = vmul.f32 %v489, %v483
        %v493 = vmul.f32 %v489, %v484
        %v494 = vmul.f32 %v489, %v485
        %v495 = vmul.f32 %v489, %v486
        %v496 = vmul.f32 %v489, %v487
        %v497 = vmul.f32 %v489, %v488
        %v498 = vstv %s476
        %v499 = vadd.f32 %v490, %v498
        %v500 = vadd.f32 %v491, %v498
        %v501 = vadd.f32 %v492, %v498
        %v502 = vadd.f32 %v493, %v498
        %v503 = vadd.f32 %v494, %v498
        %v504 = vadd.f32 %v495, %v498
        %v505 = vadd.f32 %v496, %v498
        %v506 = vadd.f32 %v497, %v498
        %v507 = vmax.f32 %v499, 0.0
        %v508 = vmax.f32 %v500, 0.0
        %v509 = vmax.f32 %v501, 0.0
        %v510 = vmax.f32 %v502, 0.0
        %v511 = vmax.f32 %v503, 0.0
        %v512 = vmax.f32 %v504, 0.0
        %v513 = vmax.f32 %v505, 0.0
        %v514 = vmax.f32 %v506, 0.0
        %v515 = vld [vmem:[%s4] sm:$0xff]
        %v516 = vld [vmem:[%s4 + $0x8] sm:$0xff]
        %s517 = sld [smem:[#allocation2 + $0x1]]
        %s518 = sld [smem:[#allocation5 + $0x1]]
        %p519 = scmp.ge.f32.partialorder %s517, 0.0
        %s520 = scalar_select %p519, 1, 0
        %v521 = vstv %s520
        %vm522 = vcmp.eq.s32.totalorder %v521, 1
        %v523 = vsel %vm522, %v459, %v467
        %v524 = vsel %vm522, %v460, %v468
        %v525 = vsel %vm522, %v461, %v469
        %v526 = vsel %vm522, %v462, %v470
        %v527 = vsel %vm522, %v463, %v471
        %v528 = vsel %vm522, %v464, %v472
        %v529 = vsel %vm522, %v465, %v473
        %v530 = vsel %vm522, %v466, %v474
        %v531 = vstv %s517
        %v532 = vmul.f32 %v531, %v523
        %v533 = vmul.f32 %v531, %v524
        %v534 = vmul.f32 %v531, %v525
        %v535 = vmul.f32 %v531, %v526
        %v536 = vmul.f32 %v531, %v527
        %v537 = vmul.f32 %v531, %v528
        %v538 = vmul.f32 %v531, %v529
        %v539 = vmul.f32 %v531, %v530
        %v540 = vstv %s518
        %v541 = vadd.f32 %v532, %v540
        %v542 = vadd.f32 %v533, %v540
        %v543 = vadd.f32 %v534, %v540
        %v544 = vadd.f32 %v535, %v540
        %v545 = vadd.f32 %v536, %v540
        %v546 = vadd.f32 %v537, %v540
        %v547 = vadd.f32 %v538, %v540
        %v548 = vadd.f32 %v539, %v540
        %v549 = vmax.f32 %v541, 0.0
        %v550 = vmax.f32 %v542, 0.0
        %v551 = vmax.f32 %v543, 0.0
        %v552 = vmax.f32 %v544, 0.0
        %v553 = vmax.f32 %v545, 0.0
        %v554 = vmax.f32 %v546, 0.0
        %v555 = vmax.f32 %v547, 0.0
        %v556 = vmax.f32 %v548, 0.0
        %s557 = scalar_lea.vmem %s4, 16
        %v558 = vld [vmem:[%s557] sm:$0xff]
        %v559 = vld [vmem:[%s557 + $0x8] sm:$0xff]
        %vm560 = vcmask 203776
        %v562 = vsel %vm560, %v558, 0
        %v565 = vsel %vm560, %v559, 0
        %vm567 = vcmask 1040384
        %v569 = vsel %vm567, %v555, 0
        %v572 = vsel %vm567, %v556, 0
        %574 = vmatprep.subr.mxu0 %v550
        %575 = vmatpush1.msra.mxu0 %v549
        %576 = vmatprep.subr.mxu0 %v552
        %577 = vmatpush1.msra.mxu0 %v551
        %578 = vmatprep.subr.mxu0 %v554
        %579 = vmatpush1.msra.mxu0 %v553
        %580 = vmatprep.subr.mxu0 %v572
        %581 = vmatpush1.msra.mxu0 %v569
        %582 = vmatprep.subr.mxu0 0.0
        %583 = vmatpush1.msra.mxu0 0.0
        %584 = vmatprep.subr.mxu0 0.0
        %585 = vmatpush1.msra.mxu0 0.0
        %586 = vmatprep.subr.mxu0 0.0
        %587 = vmatpush1.msra.mxu0 0.0
        %588 = vmatprep.subr.mxu0 0.0
        %589 = vmatpush1.msra.mxu0 0.0
        %590 = vmatprep.subr.mxu0 0.0
        %591 = vmatpush1.msra.mxu0 0.0
        %592 = vmatprep.subr.mxu0 0.0
        %593 = vmatpush1.msra.mxu0 0.0
        %594 = vmatprep.subr.mxu0 0.0
        %595 = vmatpush1.msra.mxu0 0.0
        %596 = vmatprep.subr.mxu0 0.0
        %597 = vmatpush1.msra.mxu0 0.0
        %598 = vmatprep.subr.mxu0 0.0
        %599 = vmatpush1.msra.mxu0 0.0
        %600 = vmatprep.subr.mxu0 0.0
        %601 = vmatpush1.msra.mxu0 0.0
        %602 = vmatprep.subr.mxu0 0.0
        %603 = vmatpush1.msra.mxu0 0.0
        %604 = vmatprep.subr.mxu0 0.0
        %605 = vmatpush1.msra.mxu0 0.0
        %606 = vmatprep.subr.mxu0 0.0
        %607 = vmatpush1.msra.mxu0 0.0
        %608 = vmatprep.subr.mxu0 0.0
        %609 = vmatpush1.msra.mxu0 0.0
        %610 = vmatprep.subr.mxu0 0.0
        %611 = vmatpush1.msra.mxu0 0.0
        %612 = vmatprep.subr.mxu0 0.0
        %613 = vmatpush1.msra.mxu0 0.0
        %614 = vmatprep.subr.mxu0 0.0
        %615 = vmatpush1.msra.mxu0 0.0
        %616 = vmatprep.subr.mxu0 0.0
        %617 = vmatpush1.msra.mxu0 0.0
        %618 = vmatprep.subr.mxu0 0.0
        %619 = vmatpush1.msra.mxu0 0.0
        %620 = vmatprep.subr.mxu0 0.0
        %621 = vmatpush1.msra.mxu0 0.0
        %622 = vmatprep.subr.mxu0 0.0
        %623 = vmatpush1.msra.mxu0 0.0
        %624 = vmatprep.subr.mxu0 0.0
        %625 = vmatpush1.msra.mxu0 0.0
        %626 = vmatprep.subr.mxu0 0.0
        %627 = vmatpush1.msra.mxu0 0.0
        %628 = vmatprep.subr.mxu0 0.0
        %629 = vmatpush1.msra.mxu0 0.0
        %630 = vmatprep.subr.mxu0 0.0
        %631 = vmatpush1.msra.mxu0 0.0
        %632 = vmatprep.subr.mxu0 0.0
        %633 = vmatpush1.msra.mxu0 0.0
        %634 = vmatprep.subr.mxu0 0.0
        %635 = vmatpush1.msra.mxu0 0.0
        %636 = vmatprep.subr.mxu0 0.0
        %637 = vmatpush1.msra.mxu0 0.0
        %638 = vmatprep.mubr.f32.mxu0 0.0
        %639 = vmatmul.mubr.f32.gmra.mrb[0].mxu0 %v562
        %v640 = vpop.f32.mrb[0].mxu0
        %v641 = vadd.f32 0.0, %v640
        %v642 = vpop.f32.mrb[0].mxu0
        %v643 = vadd.f32 0.0, %v642
        %644 = vmatprep.mubr.f32.mxu0 0.0
        %645 = vmatmul.mubr.f32.gmra.mrb[0].mxu0 %v565
        %v646 = vpop.f32.mrb[0].mxu0
        %v647 = vadd.f32 0.0, %v646
        %v648 = vpop.f32.mrb[0].mxu0
        %v649 = vadd.f32 0.0, %v648
        %650 = vdwg.mxu0
        %v652 = vsel %vm560, %v515, 0
        %v655 = vsel %vm560, %v516, 0
        %v658 = vsel %vm567, %v513, 0
        %v661 = vsel %vm567, %v514, 0
        %663 = vmatprep.subr.mxu0 %v508
        %664 = vmatpush1.msra.mxu0 %v507
        %665 = vmatprep.subr.mxu0 %v510
        %666 = vmatpush1.msra.mxu0 %v509
        %667 = vmatprep.subr.mxu0 %v512
        %668 = vmatpush1.msra.mxu0 %v511
        %669 = vmatprep.subr.mxu0 %v661
        %670 = vmatpush1.msra.mxu0 %v658
        %671 = vmatprep.subr.mxu0 0.0
        %672 = vmatpush1.msra.mxu0 0.0
        %673 = vmatprep.subr.mxu0 0.0
        %674 = vmatpush1.msra.mxu0 0.0
        %675 = vmatprep.subr.mxu0 0.0
        %676 = vmatpush1.msra.mxu0 0.0
        %677 = vmatprep.subr.mxu0 0.0
        %678 = vmatpush1.msra.mxu0 0.0
        %679 = vmatprep.subr.mxu0 0.0
        %680 = vmatpush1.msra.mxu0 0.0
        %681 = vmatprep.subr.mxu0 0.0
        %682 = vmatpush1.msra.mxu0 0.0
        %683 = vmatprep.subr.mxu0 0.0
        %684 = vmatpush1.msra.mxu0 0.0
        %685 = vmatprep.subr.mxu0 0.0
        %686 = vmatpush1.msra.mxu0 0.0
        %687 = vmatprep.subr.mxu0 0.0
        %688 = vmatpush1.msra.mxu0 0.0
        %689 = vmatprep.subr.mxu0 0.0
        %690 = vmatpush1.msra.mxu0 0.0
        %691 = vmatprep.subr.mxu0 0.0
        %692 = vmatpush1.msra.mxu0 0.0
        %693 = vmatprep.subr.mxu0 0.0
        %694 = vmatpush1.msra.mxu0 0.0
        %695 = vmatprep.subr.mxu0 0.0
        %696 = vmatpush1.msra.mxu0 0.0
        %697 = vmatprep.subr.mxu0 0.0
        %698 = vmatpush1.msra.mxu0 0.0
        %699 = vmatprep.subr.mxu0 0.0
        %700 = vmatpush1.msra.mxu0 0.0
        %701 = vmatprep.subr.mxu0 0.0
        %702 = vmatpush1.msra.mxu0 0.0
        %703 = vmatprep.subr.mxu0 0.0
        %704 = vmatpush1.msra.mxu0 0.0
        %705 = vmatprep.subr.mxu0 0.0
        %706 = vmatpush1.msra.mxu0 0.0
        %707 = vmatprep.subr.mxu0 0.0
        %708 = vmatpush1.msra.mxu0 0.0
        %709 = vmatprep.subr.mxu0 0.0
        %710 = vmatpush1.msra.mxu0 0.0
        %711 = vmatprep.subr.mxu0 0.0
        %712 = vmatpush1.msra.mxu0 0.0
        %713 = vmatprep.subr.mxu0 0.0
        %714 = vmatpush1.msra.mxu0 0.0
        %715 = vmatprep.subr.mxu0 0.0
        %716 = vmatpush1.msra.mxu0 0.0
        %717 = vmatprep.subr.mxu0 0.0
        %718 = vmatpush1.msra.mxu0 0.0
        %719 = vmatprep.subr.mxu0 0.0
        %720 = vmatpush1.msra.mxu0 0.0
        %721 = vmatprep.subr.mxu0 0.0
        %722 = vmatpush1.msra.mxu0 0.0
        %723 = vmatprep.subr.mxu0 0.0
        %724 = vmatpush1.msra.mxu0 0.0
        %725 = vmatprep.subr.mxu0 0.0
        %726 = vmatpush1.msra.mxu0 0.0
        %727 = vmatprep.mubr.f32.mxu0 0.0
        %728 = vmatmul.mubr.f32.gmra.mrb[0].mxu0 %v652
        %v729 = vpop.f32.mrb[0].mxu0
        %v730 = vadd.f32 %v641, %v729
        %v731 = vpop.f32.mrb[0].mxu0
        %v732 = vadd.f32 %v643, %v731
        %733 = vmatprep.mubr.f32.mxu0 0.0
        %734 = vmatmul.mubr.f32.gmra.mrb[0].mxu0 %v655
        %v735 = vpop.f32.mrb[0].mxu0
        %v736 = vadd.f32 %v647, %v735
        %v737 = vpop.f32.mrb[0].mxu0
        %v738 = vadd.f32 %v649, %v737
        %739 = vdwg.mxu0
        %s740 = sld [smem:[#allocation2 + $0x2]]
        %s741 = sld [smem:[#allocation5 + $0x2]]
        %p742 = scmp.ge.f32.partialorder %s740, 0.0
        %s743 = scalar_select %p742, 1, 0
        %v744 = vstv %s743
        %vm745 = vcmp.eq.s32.totalorder %v744, 1
        %v746 = vsel %vm745, %v459, %v467
        %v747 = vsel %vm745, %v460, %v468
        %v748 = vsel %vm745, %v461, %v469
        %v749 = vsel %vm745, %v462, %v470
        %v750 = vsel %vm745, %v463, %v471
        %v751 = vsel %vm745, %v464, %v472
        %v752 = vsel %vm745, %v465, %v473
        %v753 = vsel %vm745, %v466, %v474
        %v754 = vstv %s740
        %v755 = vmul.f32 %v754, %v746
        %v756 = vmul.f32 %v754, %v747
        %v757 = vmul.f32 %v754, %v748
        %v758 = vmul.f32 %v754, %v749
        %v759 = vmul.f32 %v754, %v750
        %v760 = vmul.f32 %v754, %v751
        %v761 = vmul.f32 %v754, %v752
        %v762 = vmul.f32 %v754, %v753
        %v763 = vstv %s741
        %v764 = vadd.f32 %v755, %v763
        %v765 = vadd.f32 %v756, %v763
        %v766 = vadd.f32 %v757, %v763
        %v767 = vadd.f32 %v758, %v763
        %v768 = vadd.f32 %v759, %v763
        %v769 = vadd.f32 %v760, %v763
        %v770 = vadd.f32 %v761, %v763
        %v771 = vadd.f32 %v762, %v763
        %v772 = vmax.f32 %v764, 0.0
        %v773 = vmax.f32 %v765, 0.0
        %v774 = vmax.f32 %v766, 0.0
        %v775 = vmax.f32 %v767, 0.0
        %v776 = vmax.f32 %v768, 0.0
        %v777 = vmax.f32 %v769, 0.0
        %v778 = vmax.f32 %v770, 0.0
        %v779 = vmax.f32 %v771, 0.0
        %s780 = scalar_lea.vmem %s4, 32
        %v781 = vld [vmem:[%s780] sm:$0xff]
        %v782 = vld [vmem:[%s780 + $0x8] sm:$0xff]
        %v784 = vsel %vm560, %v781, 0
        %v787 = vsel %vm560, %v782, 0
        %v790 = vsel %vm567, %v778, 0
        %v793 = vsel %vm567, %v779, 0
        %795 = vmatprep.subr.mxu0 %v773
        %796 = vmatpush1.msra.mxu0 %v772
        %797 = vmatprep.subr.mxu0 %v775
        %798 = vmatpush1.msra.mxu0 %v774
        %799 = vmatprep.subr.mxu0 %v777
        %800 = vmatpush1.msra.mxu0 %v776
        %801 = vmatprep.subr.mxu0 %v793
        %802 = vmatpush1.msra.mxu0 %v790
        %803 = vmatprep.subr.mxu0 0.0
        %804 = vmatpush1.msra.mxu0 0.0
        %805 = vmatprep.subr.mxu0 0.0
        %806 = vmatpush1.msra.mxu0 0.0
        %807 = vmatprep.subr.mxu0 0.0
        %808 = vmatpush1.msra.mxu0 0.0
        %809 = vmatprep.subr.mxu0 0.0
        %810 = vmatpush1.msra.mxu0 0.0
        %811 = vmatprep.subr.mxu0 0.0
        %812 = vmatpush1.msra.mxu0 0.0
        %813 = vmatprep.subr.mxu0 0.0
        %814 = vmatpush1.msra.mxu0 0.0
        %815 = vmatprep.subr.mxu0 0.0
        %816 = vmatpush1.msra.mxu0 0.0
        %817 = vmatprep.subr.mxu0 0.0
        %818 = vmatpush1.msra.mxu0 0.0
        %819 = vmatprep.subr.mxu0 0.0
        %820 = vmatpush1.msra.mxu0 0.0
        %821 = vmatprep.subr.mxu0 0.0
        %822 = vmatpush1.msra.mxu0 0.0
        %823 = vmatprep.subr.mxu0 0.0
        %824 = vmatpush1.msra.mxu0 0.0
        %825 = vmatprep.subr.mxu0 0.0
        %826 = vmatpush1.msra.mxu0 0.0
        %827 = vmatprep.subr.mxu0 0.0
        %828 = vmatpush1.msra.mxu0 0.0
        %829 = vmatprep.subr.mxu0 0.0
        %830 = vmatpush1.msra.mxu0 0.0
        %831 = vmatprep.subr.mxu0 0.0
        %832 = vmatpush1.msra.mxu0 0.0
        %833 = vmatprep.subr.mxu0 0.0
        %834 = vmatpush1.msra.mxu0 0.0
        %835 = vmatprep.subr.mxu0 0.0
        %836 = vmatpush1.msra.mxu0 0.0
        %837 = vmatprep.subr.mxu0 0.0
        %838 = vmatpush1.msra.mxu0 0.0
        %839 = vmatprep.subr.mxu0 0.0
        %840 = vmatpush1.msra.mxu0 0.0
        %841 = vmatprep.subr.mxu0 0.0
        %842 = vmatpush1.msra.mxu0 0.0
        %843 = vmatprep.subr.mxu0 0.0
        %844 = vmatpush1.msra.mxu0 0.0
        %845 = vmatprep.subr.mxu0 0.0
        %846 = vmatpush1.msra.mxu0 0.0
        %847 = vmatprep.subr.mxu0 0.0
        %848 = vmatpush1.msra.mxu0 0.0
        %849 = vmatprep.subr.mxu0 0.0
        %850 = vmatpush1.msra.mxu0 0.0
        %851 = vmatprep.subr.mxu0 0.0
        %852 = vmatpush1.msra.mxu0 0.0
        %853 = vmatprep.subr.mxu0 0.0
        %854 = vmatpush1.msra.mxu0 0.0
        %855 = vmatprep.subr.mxu0 0.0
        %856 = vmatpush1.msra.mxu0 0.0
        %857 = vmatprep.subr.mxu0 0.0
        %858 = vmatpush1.msra.mxu0 0.0
        %859 = vmatprep.mubr.f32.mxu0 0.0
        %860 = vmatmul.mubr.f32.gmra.mrb[0].mxu0 %v784
        %v861 = vpop.f32.mrb[0].mxu0
        %v862 = vadd.f32 0.0, %v861
        %v863 = vpop.f32.mrb[0].mxu0
        %v864 = vadd.f32 0.0, %v863
        %865 = vmatprep.mubr.f32.mxu0 0.0
        %866 = vmatmul.mubr.f32.gmra.mrb[0].mxu0 %v787
        %v867 = vpop.f32.mrb[0].mxu0
        %v868 = vadd.f32 0.0, %v867
        %v869 = vpop.f32.mrb[0].mxu0
        %v870 = vadd.f32 0.0, %v869
        %871 = vdwg.mxu0
        %v872 = vadd.f32 %v730, %v862
        %v873 = vadd.f32 %v732, %v864
        %v874 = vadd.f32 %v736, %v868
        %v875 = vadd.f32 %v738, %v870
        %s876 = sld [smem:[#allocation2 + $0x3]]
        %s877 = sld [smem:[#allocation5 + $0x3]]
        %p878 = scmp.ge.f32.partialorder %s876, 0.0
        %s879 = scalar_select %p878, 1, 0
        %v880 = vstv %s879
        %vm881 = vcmp.eq.s32.totalorder %v880, 1
        %v882 = vsel %vm881, %v459, %v467
        %v883 = vsel %vm881, %v460, %v468
        %v884 = vsel %vm881, %v461, %v469
        %v885 = vsel %vm881, %v462, %v470
        %v886 = vsel %vm881, %v463, %v471
        %v887 = vsel %vm881, %v464, %v472
        %v888 = vsel %vm881, %v465, %v473
        %v889 = vsel %vm881, %v466, %v474
        %v890 = vstv %s876
        %v891 = vmul.f32 %v890, %v882
        %v892 = vmul.f32 %v890, %v883
        %v893 = vmul.f32 %v890, %v884
        %v894 = vmul.f32 %v890, %v885
        %v895 = vmul.f32 %v890, %v886
        %v896 = vmul.f32 %v890, %v887
        %v897 = vmul.f32 %v890, %v888
        %v898 = vmul.f32 %v890, %v889
        %v899 = vstv %s877
        %v900 = vadd.f32 %v891, %v899
        %v901 = vadd.f32 %v892, %v899
        %v902 = vadd.f32 %v893, %v899
        %v903 = vadd.f32 %v894, %v899
        %v904 = vadd.f32 %v895, %v899
        %v905 = vadd.f32 %v896, %v899
        %v906 = vadd.f32 %v897, %v899
        %v907 = vadd.f32 %v898, %v899
        %v908 = vmax.f32 %v900, 0.0
        %v909 = vmax.f32 %v901, 0.0
        %v910 = vmax.f32 %v902, 0.0
        %v911 = vmax.f32 %v903, 0.0
        %v912 = vmax.f32 %v904, 0.0
        %v913 = vmax.f32 %v905, 0.0
        %v914 = vmax.f32 %v906, 0.0
        %v915 = vmax.f32 %v907, 0.0
        %s916 = scalar_lea.vmem %s4, 48
        %v917 = vld [vmem:[%s916] sm:$0xff]
        %v918 = vld [vmem:[%s916 + $0x8] sm:$0xff]
        %v920 = vsel %vm560, %v917, 0
        %v923 = vsel %vm560, %v918, 0
        %v926 = vsel %vm567, %v914, 0
        %v929 = vsel %vm567, %v915, 0
        %931 = vmatprep.subr.mxu0 %v909
        %932 = vmatpush1.msra.mxu0 %v908
        %933 = vmatprep.subr.mxu0 %v911
        %934 = vmatpush1.msra.mxu0 %v910
        %935 = vmatprep.subr.mxu0 %v913
        %936 = vmatpush1.msra.mxu0 %v912
        %937 = vmatprep.subr.mxu0 %v929
        %938 = vmatpush1.msra.mxu0 %v926
        %939 = vmatprep.subr.mxu0 0.0
        %940 = vmatpush1.msra.mxu0 0.0
        %941 = vmatprep.subr.mxu0 0.0
        %942 = vmatpush1.msra.mxu0 0.0
        %943 = vmatprep.subr.mxu0 0.0
        %944 = vmatpush1.msra.mxu0 0.0
        %945 = vmatprep.subr.mxu0 0.0
        %946 = vmatpush1.msra.mxu0 0.0
        %947 = vmatprep.subr.mxu0 0.0
        %948 = vmatpush1.msra.mxu0 0.0
        %949 = vmatprep.subr.mxu0 0.0
        %950 = vmatpush1.msra.mxu0 0.0
        %951 = vmatprep.subr.mxu0 0.0
        %952 = vmatpush1.msra.mxu0 0.0
        %953 = vmatprep.subr.mxu0 0.0
        %954 = vmatpush1.msra.mxu0 0.0
        %955 = vmatprep.subr.mxu0 0.0
        %956 = vmatpush1.msra.mxu0 0.0
        %957 = vmatprep.subr.mxu0 0.0
        %958 = vmatpush1.msra.mxu0 0.0
        %959 = vmatprep.subr.mxu0 0.0
        %960 = vmatpush1.msra.mxu0 0.0
        %961 = vmatprep.subr.mxu0 0.0
        %962 = vmatpush1.msra.mxu0 0.0
        %963 = vmatprep.subr.mxu0 0.0
        %964 = vmatpush1.msra.mxu0 0.0
        %965 = vmatprep.subr.mxu0 0.0
        %966 = vmatpush1.msra.mxu0 0.0
        %967 = vmatprep.subr.mxu0 0.0
        %968 = vmatpush1.msra.mxu0 0.0
        %969 = vmatprep.subr.mxu0 0.0
        %970 = vmatpush1.msra.mxu0 0.0
        %971 = vmatprep.subr.mxu0 0.0
        %972 = vmatpush1.msra.mxu0 0.0
        %973 = vmatprep.subr.mxu0 0.0
        %974 = vmatpush1.msra.mxu0 0.0
        %975 = vmatprep.subr.mxu0 0.0
        %976 = vmatpush1.msra.mxu0 0.0
        %977 = vmatprep.subr.mxu0 0.0
        %978 = vmatpush1.msra.mxu0 0.0
        %979 = vmatprep.subr.mxu0 0.0
        %980 = vmatpush1.msra.mxu0 0.0
        %981 = vmatprep.subr.mxu0 0.0
        %982 = vmatpush1.msra.mxu0 0.0
        %983 = vmatprep.subr.mxu0 0.0
        %984 = vmatpush1.msra.mxu0 0.0
        %985 = vmatprep.subr.mxu0 0.0
        %986 = vmatpush1.msra.mxu0 0.0
        %987 = vmatprep.subr.mxu0 0.0
        %988 = vmatpush1.msra.mxu0 0.0
        %989 = vmatprep.subr.mxu0 0.0
        %990 = vmatpush1.msra.mxu0 0.0
        %991 = vmatprep.subr.mxu0 0.0
        %992 = vmatpush1.msra.mxu0 0.0
        %993 = vmatprep.subr.mxu0 0.0
        %994 = vmatpush1.msra.mxu0 0.0
        %995 = vmatprep.mubr.f32.mxu0 0.0
        %996 = vmatmul.mubr.f32.gmra.mrb[0].mxu0 %v920
        %v997 = vpop.f32.mrb[0].mxu0
        %v998 = vadd.f32 0.0, %v997
        %v999 = vpop.f32.mrb[0].mxu0
        %v1000 = vadd.f32 0.0, %v999
        %1001 = vmatprep.mubr.f32.mxu0 0.0
        %1002 = vmatmul.mubr.f32.gmra.mrb[0].mxu0 %v923
        %v1003 = vpop.f32.mrb[0].mxu0
        %v1004 = vadd.f32 0.0, %v1003
        %v1005 = vpop.f32.mrb[0].mxu0
        %v1006 = vadd.f32 0.0, %v1005
        %1007 = vdwg.mxu0
        %v1008 = vadd.f32 %v872, %v998
        %v1009 = vadd.f32 %v873, %v1000
        %v1010 = vadd.f32 %v874, %v1004
        %v1011 = vadd.f32 %v875, %v1006
        %s1012 = sld [smem:[#allocation2 + $0x4]]
        %s1013 = sld [smem:[#allocation5 + $0x4]]
        %p1014 = scmp.ge.f32.partialorder %s1012, 0.0
        %s1015 = scalar_select %p1014, 1, 0
        %v1016 = vstv %s1015
        %vm1017 = vcmp.eq.s32.totalorder %v1016, 1
        %v1018 = vsel %vm1017, %v459, %v467
        %v1019 = vsel %vm1017, %v460, %v468
        %v1020 = vsel %vm1017, %v461, %v469
        %v1021 = vsel %vm1017, %v462, %v470
        %v1022 = vsel %vm1017, %v463, %v471
        %v1023 = vsel %vm1017, %v464, %v472
        %v1024 = vsel %vm1017, %v465, %v473
        %v1025 = vsel %vm1017, %v466, %v474
        %v1026 = vstv %s1012
        %v1027 = vmul.f32 %v1026, %v1018
        %v1028 = vmul.f32 %v1026, %v1019
        %v1029 = vmul.f32 %v1026, %v1020
        %v1030 = vmul.f32 %v1026, %v1021
        %v1031 = vmul.f32 %v1026, %v1022
        %v1032 = vmul.f32 %v1026, %v1023
        %v1033 = vmul.f32 %v1026, %v1024
        %v1034 = vmul.f32 %v1026, %v1025
        %v1035 = vstv %s1013
        %v1036 = vadd.f32 %v1027, %v1035
        %v1037 = vadd.f32 %v1028, %v1035
        %v1038 = vadd.f32 %v1029, %v1035
        %v1039 = vadd.f32 %v1030, %v1035
        %v1040 = vadd.f32 %v1031, %v1035
        %v1041 = vadd.f32 %v1032, %v1035
        %v1042 = vadd.f32 %v1033, %v1035
        %v1043 = vadd.f32 %v1034, %v1035
        %v1044 = vmax.f32 %v1036, 0.0
        %v1045 = vmax.f32 %v1037, 0.0
        %v1046 = vmax.f32 %v1038, 0.0
        %v1047 = vmax.f32 %v1039, 0.0
        %v1048 = vmax.f32 %v1040, 0.0
        %v1049 = vmax.f32 %v1041, 0.0
        %v1050 = vmax.f32 %v1042, 0.0
        %v1051 = vmax.f32 %v1043, 0.0
        %s1052 = scalar_lea.vmem %s4, 64
        %v1053 = vld [vmem:[%s1052] sm:$0xff]
        %v1054 = vld [vmem:[%s1052 + $0x8] sm:$0xff]
        %v1056 = vsel %vm560, %v1053, 0
        %v1059 = vsel %vm560, %v1054, 0
        %v1062 = vsel %vm567, %v1050, 0
        %v1065 = vsel %vm567, %v1051, 0
        %1067 = vmatprep.subr.mxu0 %v1045
        %1068 = vmatpush1.msra.mxu0 %v1044
        %1069 = vmatprep.subr.mxu0 %v1047
        %1070 = vmatpush1.msra.mxu0 %v1046
        %1071 = vmatprep.subr.mxu0 %v1049
        %1072 = vmatpush1.msra.mxu0 %v1048
        %1073 = vmatprep.subr.mxu0 %v1065
        %1074 = vmatpush1.msra.mxu0 %v1062
        %1075 = vmatprep.subr.mxu0 0.0
        %1076 = vmatpush1.msra.mxu0 0.0
        %1077 = vmatprep.subr.mxu0 0.0
        %1078 = vmatpush1.msra.mxu0 0.0
        %1079 = vmatprep.subr.mxu0 0.0
        %1080 = vmatpush1.msra.mxu0 0.0
        %1081 = vmatprep.subr.mxu0 0.0
        %1082 = vmatpush1.msra.mxu0 0.0
        %1083 = vmatprep.subr.mxu0 0.0
        %1084 = vmatpush1.msra.mxu0 0.0
        %1085 = vmatprep.subr.mxu0 0.0
        %1086 = vmatpush1.msra.mxu0 0.0
        %1087 = vmatprep.subr.mxu0 0.0
        %1088 = vmatpush1.msra.mxu0 0.0
        %1089 = vmatprep.subr.mxu0 0.0
        %1090 = vmatpush1.msra.mxu0 0.0
        %1091 = vmatprep.subr.mxu0 0.0
        %1092 = vmatpush1.msra.mxu0 0.0
        %1093 = vmatprep.subr.mxu0 0.0
        %1094 = vmatpush1.msra.mxu0 0.0
        %1095 = vmatprep.subr.mxu0 0.0
        %1096 = vmatpush1.msra.mxu0 0.0
        %1097 = vmatprep.subr.mxu0 0.0
        %1098 = vmatpush1.msra.mxu0 0.0
        %1099 = vmatprep.subr.mxu0 0.0
        %1100 = vmatpush1.msra.mxu0 0.0
        %1101 = vmatprep.subr.mxu0 0.0
        %1102 = vmatpush1.msra.mxu0 0.0
        %1103 = vmatprep.subr.mxu0 0.0
        %1104 = vmatpush1.msra.mxu0 0.0
        %1105 = vmatprep.subr.mxu0 0.0
        %1106 = vmatpush1.msra.mxu0 0.0
        %1107 = vmatprep.subr.mxu0 0.0
        %1108 = vmatpush1.msra.mxu0 0.0
        %1109 = vmatprep.subr.mxu0 0.0
        %1110 = vmatpush1.msra.mxu0 0.0
        %1111 = vmatprep.subr.mxu0 0.0
        %1112 = vmatpush1.msra.mxu0 0.0
        %1113 = vmatprep.subr.mxu0 0.0
        %1114 = vmatpush1.msra.mxu0 0.0
        %1115 = vmatprep.subr.mxu0 0.0
        %1116 = vmatpush1.msra.mxu0 0.0
        %1117 = vmatprep.subr.mxu0 0.0
        %1118 = vmatpush1.msra.mxu0 0.0
        %1119 = vmatprep.subr.mxu0 0.0
        %1120 = vmatpush1.msra.mxu0 0.0
        %1121 = vmatprep.subr.mxu0 0.0
        %1122 = vmatpush1.msra.mxu0 0.0
        %1123 = vmatprep.subr.mxu0 0.0
        %1124 = vmatpush1.msra.mxu0 0.0
        %1125 = vmatprep.subr.mxu0 0.0
        %1126 = vmatpush1.msra.mxu0 0.0
        %1127 = vmatprep.subr.mxu0 0.0
        %1128 = vmatpush1.msra.mxu0 0.0
        %1129 = vmatprep.subr.mxu0 0.0
        %1130 = vmatpush1.msra.mxu0 0.0
        %1131 = vmatprep.mubr.f32.mxu0 0.0
        %1132 = vmatmul.mubr.f32.gmra.mrb[0].mxu0 %v1056
        %v1133 = vpop.f32.mrb[0].mxu0
        %v1134 = vadd.f32 0.0, %v1133
        %v1135 = vpop.f32.mrb[0].mxu0
        %v1136 = vadd.f32 0.0, %v1135
        %1137 = vmatprep.mubr.f32.mxu0 0.0
        %1138 = vmatmul.mubr.f32.gmra.mrb[0].mxu0 %v1059
        %v1139 = vpop.f32.mrb[0].mxu0
        %v1140 = vadd.f32 0.0, %v1139
        %v1141 = vpop.f32.mrb[0].mxu0
        %v1142 = vadd.f32 0.0, %v1141
        %1143 = vdwg.mxu0
        %v1144 = vadd.f32 %v1008, %v1134
        %v1145 = vadd.f32 %v1009, %v1136
        %v1146 = vadd.f32 %v1010, %v1140
        %v1147 = vadd.f32 %v1011, %v1142
        %s1148 = sld [smem:[#allocation2 + $0x5]]
        %s1149 = sld [smem:[#allocation5 + $0x5]]
        %p1150 = scmp.ge.f32.partialorder %s1148, 0.0
        %s1151 = scalar_select %p1150, 1, 0
        %v1152 = vstv %s1151
        %vm1153 = vcmp.eq.s32.totalorder %v1152, 1
        %v1154 = vsel %vm1153, %v459, %v467
        %v1155 = vsel %vm1153, %v460, %v468
        %v1156 = vsel %vm1153, %v461, %v469
        %v1157 = vsel %vm1153, %v462, %v470
        %v1158 = vsel %vm1153, %v463, %v471
        %v1159 = vsel %vm1153, %v464, %v472
        %v1160 = vsel %vm1153, %v465, %v473
        %v1161 = vsel %vm1153, %v466, %v474
        %v1162 = vstv %s1148
        %v1163 = vmul.f32 %v1162, %v1154
        %v1164 = vmul.f32 %v1162, %v1155
        %v1165 = vmul.f32 %v1162, %v1156
        %v1166 = vmul.f32 %v1162, %v1157
        %v1167 = vmul.f32 %v1162, %v1158
        %v1168 = vmul.f32 %v1162, %v1159
        %v1169 = vmul.f32 %v1162, %v1160
        %v1170 = vmul.f32 %v1162, %v1161
        %v1171 = vstv %s1149
        %v1172 = vadd.f32 %v1163, %v1171
        %v1173 = vadd.f32 %v1164, %v1171
        %v1174 = vadd.f32 %v1165, %v1171
        %v1175 = vadd.f32 %v1166, %v1171
        %v1176 = vadd.f32 %v1167, %v1171
        %v1177 = vadd.f32 %v1168, %v1171
        %v1178 = vadd.f32 %v1169, %v1171
        %v1179 = vadd.f32 %v1170, %v1171
        %v1180 = vmax.f32 %v1172, 0.0
        %v1181 = vmax.f32 %v1173, 0.0
        %v1182 = vmax.f32 %v1174, 0.0
        %v1183 = vmax.f32 %v1175, 0.0
        %v1184 = vmax.f32 %v1176, 0.0
        %v1185 = vmax.f32 %v1177, 0.0
        %v1186 = vmax.f32 %v1178, 0.0
        %v1187 = vmax.f32 %v1179, 0.0
        %s1188 = scalar_lea.vmem %s4, 80
        %v1189 = vld [vmem:[%s1188] sm:$0xff]
        %v1190 = vld [vmem:[%s1188 + $0x8] sm:$0xff]
        %v1192 = vsel %vm560, %v1189, 0
        %v1195 = vsel %vm560, %v1190, 0
        %v1198 = vsel %vm567, %v1186, 0
        %v1201 = vsel %vm567, %v1187, 0
        %1203 = vmatprep.subr.mxu0 %v1181
        %1204 = vmatpush1.msra.mxu0 %v1180
        %1205 = vmatprep.subr.mxu0 %v1183
        %1206 = vmatpush1.msra.mxu0 %v1182
        %1207 = vmatprep.subr.mxu0 %v1185
        %1208 = vmatpush1.msra.mxu0 %v1184
        %1209 = vmatprep.subr.mxu0 %v1201
        %1210 = vmatpush1.msra.mxu0 %v1198
        %1211 = vmatprep.subr.mxu0 0.0
        %1212 = vmatpush1.msra.mxu0 0.0
        %1213 = vmatprep.subr.mxu0 0.0
        %1214 = vmatpush1.msra.mxu0 0.0
        %1215 = vmatprep.subr.mxu0 0.0
        %1216 = vmatpush1.msra.mxu0 0.0
        %1217 = vmatprep.subr.mxu0 0.0
        %1218 = vmatpush1.msra.mxu0 0.0
        %1219 = vmatprep.subr.mxu0 0.0
        %1220 = vmatpush1.msra.mxu0 0.0
        %1221 = vmatprep.subr.mxu0 0.0
        %1222 = vmatpush1.msra.mxu0 0.0
        %1223 = vmatprep.subr.mxu0 0.0
        %1224 = vmatpush1.msra.mxu0 0.0
        %1225 = vmatprep.subr.mxu0 0.0
        %1226 = vmatpush1.msra.mxu0 0.0
        %1227 = vmatprep.subr.mxu0 0.0
        %1228 = vmatpush1.msra.mxu0 0.0
        %1229 = vmatprep.subr.mxu0 0.0
        %1230 = vmatpush1.msra.mxu0 0.0
        %1231 = vmatprep.subr.mxu0 0.0
        %1232 = vmatpush1.msra.mxu0 0.0
        %1233 = vmatprep.subr.mxu0 0.0
        %1234 = vmatpush1.msra.mxu0 0.0
        %1235 = vmatprep.subr.mxu0 0.0
        %1236 = vmatpush1.msra.mxu0 0.0
        %1237 = vmatprep.subr.mxu0 0.0
        %1238 = vmatpush1.msra.mxu0 0.0
        %1239 = vmatprep.subr.mxu0 0.0
        %1240 = vmatpush1.msra.mxu0 0.0
        %1241 = vmatprep.subr.mxu0 0.0
        %1242 = vmatpush1.msra.mxu0 0.0
        %1243 = vmatprep.subr.mxu0 0.0
        %1244 = vmatpush1.msra.mxu0 0.0
        %1245 = vmatprep.subr.mxu0 0.0
        %1246 = vmatpush1.msra.mxu0 0.0
        %1247 = vmatprep.subr.mxu0 0.0
        %1248 = vmatpush1.msra.mxu0 0.0
        %1249 = vmatprep.subr.mxu0 0.0
        %1250 = vmatpush1.msra.mxu0 0.0
        %1251 = vmatprep.subr.mxu0 0.0
        %1252 = vmatpush1.msra.mxu0 0.0
        %1253 = vmatprep.subr.mxu0 0.0
        %1254 = vmatpush1.msra.mxu0 0.0
        %1255 = vmatprep.subr.mxu0 0.0
        %1256 = vmatpush1.msra.mxu0 0.0
        %1257 = vmatprep.subr.mxu0 0.0
        %1258 = vmatpush1.msra.mxu0 0.0
        %1259 = vmatprep.subr.mxu0 0.0
        %1260 = vmatpush1.msra.mxu0 0.0
        %1261 = vmatprep.subr.mxu0 0.0
        %1262 = vmatpush1.msra.mxu0 0.0
        %1263 = vmatprep.subr.mxu0 0.0
        %1264 = vmatpush1.msra.mxu0 0.0
        %1265 = vmatprep.subr.mxu0 0.0
        %1266 = vmatpush1.msra.mxu0 0.0
        %1267 = vmatprep.mubr.f32.mxu0 0.0
        %1268 = vmatmul.mubr.f32.gmra.mrb[0].mxu0 %v1192
        %v1269 = vpop.f32.mrb[0].mxu0
        %v1270 = vadd.f32 0.0, %v1269
        %v1271 = vpop.f32.mrb[0].mxu0
        %v1272 = vadd.f32 0.0, %v1271
        %1273 = vmatprep.mubr.f32.mxu0 0.0
        %1274 = vmatmul.mubr.f32.gmra.mrb[0].mxu0 %v1195
        %v1275 = vpop.f32.mrb[0].mxu0
        %v1276 = vadd.f32 0.0, %v1275
        %v1277 = vpop.f32.mrb[0].mxu0
        %v1278 = vadd.f32 0.0, %v1277
        %1279 = vdwg.mxu0
        %v1280 = vadd.f32 %v1144, %v1270
        %v1281 = vadd.f32 %v1145, %v1272
        %v1282 = vadd.f32 %v1146, %v1276
        %v1283 = vadd.f32 %v1147, %v1278
        %v1284 = vld [vmem:[%s5] sm:$0xff]
        %v1285 = vld [vmem:[%s5 + $0x8] sm:$0xff]
        %1287 = vset.pattern.permute.xlu0 0
        %1288 = vperm.xlu0 %1287, %v1284
        %v1289 = vpop.permute.xlu0 %1288
        %1292 = vset.pattern.permute.xlu0 0
        %1293 = vperm.xlu0 %1292, %v1285
        %v1294 = vpop.permute.xlu0 %1293
        %v1296 = vadd.f32 %v1280, %v1289
        %v1297 = vadd.f32 %v1281, %v1289
        %v1298 = vadd.f32 %v1282, %v1294
        %v1299 = vadd.f32 %v1283, %v1294
        %s1300 = scalar_lea.vmem %s453, 64
        %v1301 = vld [vmem:[%s1300] sm:$0xff]
        %v1302 = vld [vmem:[%s1300 + $0x8] sm:$0xff]
        %v1303 = vld [vmem:[%s1300 + $0x10] sm:$0xff]
        %v1304 = vld [vmem:[%s1300 + $0x18] sm:$0xff]
        %v1305 = vld [vmem:[%s1300 + $0x20] sm:$0xff]
        %v1306 = vld [vmem:[%s1300 + $0x28] sm:$0xff]
        %v1307 = vld [vmem:[%s1300 + $0x30] sm:$0x1]
        %v1308 = vld [vmem:[%s1300 + $0x38] sm:$0x1]
        %s1309 = scalar_lea.vmem %s458, 64
        %v1310 = vld [vmem:[%s1309] sm:$0xff]
        %v1311 = vld [vmem:[%s1309 + $0x8] sm:$0xff]
        %v1312 = vld [vmem:[%s1309 + $0x10] sm:$0xff]
        %v1313 = vld [vmem:[%s1309 + $0x18] sm:$0xff]
        %v1314 = vld [vmem:[%s1309 + $0x20] sm:$0xff]
        %v1315 = vld [vmem:[%s1309 + $0x28] sm:$0xff]
        %v1316 = vld [vmem:[%s1309 + $0x30] sm:$0x1]
        %v1317 = vld [vmem:[%s1309 + $0x38] sm:$0x1]
        %v1318 = vsel %vm480, %v1301, %v1310
        %v1319 = vsel %vm480, %v1302, %v1311
        %v1320 = vsel %vm480, %v1303, %v1312
        %v1321 = vsel %vm480, %v1304, %v1313
        %v1322 = vsel %vm480, %v1305, %v1314
        %v1323 = vsel %vm480, %v1306, %v1315
        %v1324 = vsel %vm480, %v1307, %v1316
        %v1325 = vsel %vm480, %v1308, %v1317
        %v1326 = vmul.f32 %v489, %v1318
        %v1327 = vmul.f32 %v489, %v1319
        %v1328 = vmul.f32 %v489, %v1320
        %v1329 = vmul.f32 %v489, %v1321
        %v1330 = vmul.f32 %v489, %v1322
        %v1331 = vmul.f32 %v489, %v1323
        %v1332 = vmul.f32 %v489, %v1324
        %v1333 = vmul.f32 %v489, %v1325
        %v1334 = vadd.f32 %v1326, %v498
        %v1335 = vadd.f32 %v1327, %v498
        %v1336 = vadd.f32 %v1328, %v498
        %v1337 = vadd.f32 %v1329, %v498
        %v1338 = vadd.f32 %v1330, %v498
        %v1339 = vadd.f32 %v1331, %v498
        %v1340 = vadd.f32 %v1332, %v498
        %v1341 = vadd.f32 %v1333, %v498
        %v1342 = vmax.f32 %v1334, 0.0
        %v1343 = vmax.f32 %v1335, 0.0
        %v1344 = vmax.f32 %v1336, 0.0
        %v1345 = vmax.f32 %v1337, 0.0
        %v1346 = vmax.f32 %v1338, 0.0
        %v1347 = vmax.f32 %v1339, 0.0
        %v1348 = vmax.f32 %v1340, 0.0
        %v1349 = vmax.f32 %v1341, 0.0
        %v1350 = vsel %vm522, %v1301, %v1310
        %v1351 = vsel %vm522, %v1302, %v1311
        %v1352 = vsel %vm522, %v1303, %v1312
        %v1353 = vsel %vm522, %v1304, %v1313
        %v1354 = vsel %vm522, %v1305, %v1314
        %v1355 = vsel %vm522, %v1306, %v1315
        %v1356 = vsel %vm522, %v1307, %v1316
        %v1357 = vsel %vm522, %v1308, %v1317
        %v1358 = vmul.f32 %v531, %v1350
        %v1359 = vmul.f32 %v531, %v1351
        %v1360 = vmul.f32 %v531, %v1352
        %v1361 = vmul.f32 %v531, %v1353
        %v1362 = vmul.f32 %v531, %v1354
        %v1363 = vmul.f32 %v531, %v1355
        %v1364 = vmul.f32 %v531, %v1356
        %v1365 = vmul.f32 %v531, %v1357
        %v1366 = vadd.f32 %v1358, %v540
        %v1367 = vadd.f32 %v1359, %v540
        %v1368 = vadd.f32 %v1360, %v540
        %v1369 = vadd.f32 %v1361, %v540
        %v1370 = vadd.f32 %v1362, %v540
        %v1371 = vadd.f32 %v1363, %v540
        %v1372 = vadd.f32 %v1364, %v540
        %v1373 = vadd.f32 %v1365, %v540
        %v1374 = vmax.f32 %v1366, 0.0
        %v1375 = vmax.f32 %v1367, 0.0
        %v1376 = vmax.f32 %v1368, 0.0
        %v1377 = vmax.f32 %v1369, 0.0
        %v1378 = vmax.f32 %v1370, 0.0
        %v1379 = vmax.f32 %v1371, 0.0
        %v1380 = vmax.f32 %v1372, 0.0
        %v1381 = vmax.f32 %v1373, 0.0
        %v1383 = vsel %vm567, %v1380, 0
        %v1386 = vsel %vm567, %v1381, 0
        %1388 = vmatprep.subr.mxu0 %v1375
        %1389 = vmatpush1.msra.mxu0 %v1374
        %1390 = vmatprep.subr.mxu0 %v1377
        %1391 = vmatpush1.msra.mxu0 %v1376
        %1392 = vmatprep.subr.mxu0 %v1379
        %1393 = vmatpush1.msra.mxu0 %v1378
        %1394 = vmatprep.subr.mxu0 %v1386
        %1395 = vmatpush1.msra.mxu0 %v1383
        %1396 = vmatprep.subr.mxu0 0.0
        %1397 = vmatpush1.msra.mxu0 0.0
        %1398 = vmatprep.subr.mxu0 0.0
        %1399 = vmatpush1.msra.mxu0 0.0
        %1400 = vmatprep.subr.mxu0 0.0
        %1401 = vmatpush1.msra.mxu0 0.0
        %1402 = vmatprep.subr.mxu0 0.0
        %1403 = vmatpush1.msra.mxu0 0.0
        %1404 = vmatprep.subr.mxu0 0.0
        %1405 = vmatpush1.msra.mxu0 0.0
        %1406 = vmatprep.subr.mxu0 0.0
        %1407 = vmatpush1.msra.mxu0 0.0
        %1408 = vmatprep.subr.mxu0 0.0
        %1409 = vmatpush1.msra.mxu0 0.0
        %1410 = vmatprep.subr.mxu0 0.0
        %1411 = vmatpush1.msra.mxu0 0.0
        %1412 = vmatprep.subr.mxu0 0.0
        %1413 = vmatpush1.msra.mxu0 0.0
        %1414 = vmatprep.subr.mxu0 0.0
        %1415 = vmatpush1.msra.mxu0 0.0
        %1416 = vmatprep.subr.mxu0 0.0
        %1417 = vmatpush1.msra.mxu0 0.0
        %1418 = vmatprep.subr.mxu0 0.0
        %1419 = vmatpush1.msra.mxu0 0.0
        %1420 = vmatprep.subr.mxu0 0.0
        %1421 = vmatpush1.msra.mxu0 0.0
        %1422 = vmatprep.subr.mxu0 0.0
        %1423 = vmatpush1.msra.mxu0 0.0
        %1424 = vmatprep.subr.mxu0 0.0
        %1425 = vmatpush1.msra.mxu0 0.0
        %1426 = vmatprep.subr.mxu0 0.0
        %1427 = vmatpush1.msra.mxu0 0.0
        %1428 = vmatprep.subr.mxu0 0.0
        %1429 = vmatpush1.msra.mxu0 0.0
        %1430 = vmatprep.subr.mxu0 0.0
        %1431 = vmatpush1.msra.mxu0 0.0
        %1432 = vmatprep.subr.mxu0 0.0
        %1433 = vmatpush1.msra.mxu0 0.0
        %1434 = vmatprep.subr.mxu0 0.0
        %1435 = vmatpush1.msra.mxu0 0.0
        %1436 = vmatprep.subr.mxu0 0.0
        %1437 = vmatpush1.msra.mxu0 0.0
        %1438 = vmatprep.subr.mxu0 0.0
        %1439 = vmatpush1.msra.mxu0 0.0
        %1440 = vmatprep.subr.mxu0 0.0
        %1441 = vmatpush1.msra.mxu0 0.0
        %1442 = vmatprep.subr.mxu0 0.0
        %1443 = vmatpush1.msra.mxu0 0.0
        %1444 = vmatprep.subr.mxu0 0.0
        %1445 = vmatpush1.msra.mxu0 0.0
        %1446 = vmatprep.subr.mxu0 0.0
        %1447 = vmatpush1.msra.mxu0 0.0
        %1448 = vmatprep.subr.mxu0 0.0
        %1449 = vmatpush1.msra.mxu0 0.0
        %1450 = vmatprep.subr.mxu0 0.0
        %1451 = vmatpush1.msra.mxu0 0.0
        %1452 = vmatprep.mubr.f32.mxu0 0.0
        %1453 = vmatmul.mubr.f32.gmra.mrb[0].mxu0 %v562
        %v1454 = vpop.f32.mrb[0].mxu0
        %v1455 = vadd.f32 0.0, %v1454
        %v1456 = vpop.f32.mrb[0].mxu0
        %v1457 = vadd.f32 0.0, %v1456
        %1458 = vmatprep.mubr.f32.mxu0 0.0
        %1459 = vmatmul.mubr.f32.gmra.mrb[0].mxu0 %v565
        %v1460 = vpop.f32.mrb[0].mxu0
        %v1461 = vadd.f32 0.0, %v1460
        %v1462 = vpop.f32.mrb[0].mxu0
        %v1463 = vadd.f32 0.0, %v1462
        %1464 = vdwg.mxu0
        %v1466 = vsel %vm567, %v1348, 0
        %v1469 = vsel %vm567, %v1349, 0
        %1471 = vmatprep.subr.mxu0 %v1343
        %1472 = vmatpush1.msra.mxu0 %v1342
        %1473 = vmatprep.subr.mxu0 %v1345
        %1474 = vmatpush1.msra.mxu0 %v1344
        %1475 = vmatprep.subr.mxu0 %v1347
        %1476 = vmatpush1.msra.mxu0 %v1346
        %1477 = vmatprep.subr.mxu0 %v1469
        %1478 = vmatpush1.msra.mxu0 %v1466
        %1479 = vmatprep.subr.mxu0 0.0
        %1480 = vmatpush1.msra.mxu0 0.0
        %1481 = vmatprep.subr.mxu0 0.0
        %1482 = vmatpush1.msra.mxu0 0.0
        %1483 = vmatprep.subr.mxu0 0.0
        %1484 = vmatpush1.msra.mxu0 0.0
        %1485 = vmatprep.subr.mxu0 0.0
        %1486 = vmatpush1.msra.mxu0 0.0
        %1487 = vmatprep.subr.mxu0 0.0
        %1488 = vmatpush1.msra.mxu0 0.0
        %1489 = vmatprep.subr.mxu0 0.0
        %1490 = vmatpush1.msra.mxu0 0.0
        %1491 = vmatprep.subr.mxu0 0.0
        %1492 = vmatpush1.msra.mxu0 0.0
        %1493 = vmatprep.subr.mxu0 0.0
        %1494 = vmatpush1.msra.mxu0 0.0
        %1495 = vmatprep.subr.mxu0 0.0
        %1496 = vmatpush1.msra.mxu0 0.0
        %1497 = vmatprep.subr.mxu0 0.0
        %1498 = vmatpush1.msra.mxu0 0.0
        %1499 = vmatprep.subr.mxu0 0.0
        %1500 = vmatpush1.msra.mxu0 0.0
        %1501 = vmatprep.subr.mxu0 0.0
        %1502 = vmatpush1.msra.mxu0 0.0
        %1503 = vmatprep.subr.mxu0 0.0
        %1504 = vmatpush1.msra.mxu0 0.0
        %1505 = vmatprep.subr.mxu0 0.0
        %1506 = vmatpush1.msra.mxu0 0.0
        %1507 = vmatprep.subr.mxu0 0.0
        %1508 = vmatpush1.msra.mxu0 0.0
        %1509 = vmatprep.subr.mxu0 0.0
        %1510 = vmatpush1.msra.mxu0 0.0
        %1511 = vmatprep.subr.mxu0 0.0
        %1512 = vmatpush1.msra.mxu0 0.0
        %1513 = vmatprep.subr.mxu0 0.0
        %1514 = vmatpush1.msra.mxu0 0.0
        %1515 = vmatprep.subr.mxu0 0.0
        %1516 = vmatpush1.msra.mxu0 0.0
        %1517 = vmatprep.subr.mxu0 0.0
        %1518 = vmatpush1.msra.mxu0 0.0
        %1519 = vmatprep.subr.mxu0 0.0
        %1520 = vmatpush1.msra.mxu0 0.0
        %1521 = vmatprep.subr.mxu0 0.0
        %1522 = vmatpush1.msra.mxu0 0.0
        %1523 = vmatprep.subr.mxu0 0.0
        %1524 = vmatpush1.msra.mxu0 0.0
        %1525 = vmatprep.subr.mxu0 0.0
        %1526 = vmatpush1.msra.mxu0 0.0
        %1527 = vmatprep.subr.mxu0 0.0
        %1528 = vmatpush1.msra.mxu0 0.0
        %1529 = vmatprep.subr.mxu0 0.0
        %1530 = vmatpush1.msra.mxu0 0.0
        %1531 = vmatprep.subr.mxu0 0.0
        %1532 = vmatpush1.msra.mxu0 0.0
        %1533 = vmatprep.subr.mxu0 0.0
        %1534 = vmatpush1.msra.mxu0 0.0
        %1535 = vmatprep.mubr.f32.mxu0 0.0
        %1536 = vmatmul.mubr.f32.gmra.mrb[0].mxu0 %v652
        %v1537 = vpop.f32.mrb[0].mxu0
        %v1538 = vadd.f32 %v1455, %v1537
        %v1539 = vpop.f32.mrb[0].mxu0
        %v1540 = vadd.f32 %v1457, %v1539
        %1541 = vmatprep.mubr.f32.mxu0 0.0
        %1542 = vmatmul.mubr.f32.gmra.mrb[0].mxu0 %v655
        %v1543 = vpop.f32.mrb[0].mxu0
        %v1544 = vadd.f32 %v1461, %v1543
        %v1545 = vpop.f32.mrb[0].mxu0
        %v1546 = vadd.f32 %v1463, %v1545
        %1547 = vdwg.mxu0
        %v1548 = vsel %vm745, %v1301, %v1310
        %v1549 = vsel %vm745, %v1302, %v1311
        %v1550 = vsel %vm745, %v1303, %v1312
        %v1551 = vsel %vm745, %v1304, %v1313
        %v1552 = vsel %vm745, %v1305, %v1314
        %v1553 = vsel %vm745, %v1306, %v1315
        %v1554 = vsel %vm745, %v1307, %v1316
        %v1555 = vsel %vm745, %v1308, %v1317
        %v1556 = vmul.f32 %v754, %v1548
        %v1557 = vmul.f32 %v754, %v1549
        %v1558 = vmul.f32 %v754, %v1550
        %v1559 = vmul.f32 %v754, %v1551
        %v1560 = vmul.f32 %v754, %v1552
        %v1561 = vmul.f32 %v754, %v1553
        %v1562 = vmul.f32 %v754, %v1554
        %v1563 = vmul.f32 %v754, %v1555
        %v1564 = vadd.f32 %v1556, %v763
        %v1565 = vadd.f32 %v1557, %v763
        %v1566 = vadd.f32 %v1558, %v763
        %v1567 = vadd.f32 %v1559, %v763
        %v1568 = vadd.f32 %v1560, %v763
        %v1569 = vadd.f32 %v1561, %v763
        %v1570 = vadd.f32 %v1562, %v763
        %v1571 = vadd.f32 %v1563, %v763
        %v1572 = vmax.f32 %v1564, 0.0
        %v1573 = vmax.f32 %v1565, 0.0
        %v1574 = vmax.f32 %v1566, 0.0
        %v1575 = vmax.f32 %v1567, 0.0
        %v1576 = vmax.f32 %v1568, 0.0
        %v1577 = vmax.f32 %v1569, 0.0
        %v1578 = vmax.f32 %v1570, 0.0
        %v1579 = vmax.f32 %v1571, 0.0
        %v1581 = vsel %vm567, %v1578, 0
        %v1584 = vsel %vm567, %v1579, 0
        %1586 = vmatprep.subr.mxu0 %v1573
        %1587 = vmatpush1.msra.mxu0 %v1572
        %1588 = vmatprep.subr.mxu0 %v1575
        %1589 = vmatpush1.msra.mxu0 %v1574
        %1590 = vmatprep.subr.mxu0 %v1577
        %1591 = vmatpush1.msra.mxu0 %v1576
        %1592 = vmatprep.subr.mxu0 %v1584
        %1593 = vmatpush1.msra.mxu0 %v1581
        %1594 = vmatprep.subr.mxu0 0.0
        %1595 = vmatpush1.msra.mxu0 0.0
        %1596 = vmatprep.subr.mxu0 0.0
        %1597 = vmatpush1.msra.mxu0 0.0
        %1598 = vmatprep.subr.mxu0 0.0
        %1599 = vmatpush1.msra.mxu0 0.0
        %1600 = vmatprep.subr.mxu0 0.0
        %1601 = vmatpush1.msra.mxu0 0.0
        %1602 = vmatprep.subr.mxu0 0.0
        %1603 = vmatpush1.msra.mxu0 0.0
        %1604 = vmatprep.subr.mxu0 0.0
        %1605 = vmatpush1.msra.mxu0 0.0
        %1606 = vmatprep.subr.mxu0 0.0
        %1607 = vmatpush1.msra.mxu0 0.0
        %1608 = vmatprep.subr.mxu0 0.0
        %1609 = vmatpush1.msra.mxu0 0.0
        %1610 = vmatprep.subr.mxu0 0.0
        %1611 = vmatpush1.msra.mxu0 0.0
        %1612 = vmatprep.subr.mxu0 0.0
        %1613 = vmatpush1.msra.mxu0 0.0
        %1614 = vmatprep.subr.mxu0 0.0
        %1615 = vmatpush1.msra.mxu0 0.0
        %1616 = vmatprep.subr.mxu0 0.0
        %1617 = vmatpush1.msra.mxu0 0.0
        %1618 = vmatprep.subr.mxu0 0.0
        %1619 = vmatpush1.msra.mxu0 0.0
        %1620 = vmatprep.subr.mxu0 0.0
        %1621 = vmatpush1.msra.mxu0 0.0
        %1622 = vmatprep.subr.mxu0 0.0
        %1623 = vmatpush1.msra.mxu0 0.0
        %1624 = vmatprep.subr.mxu0 0.0
        %1625 = vmatpush1.msra.mxu0 0.0
        %1626 = vmatprep.subr.mxu0 0.0
        %1627 = vmatpush1.msra.mxu0 0.0
        %1628 = vmatprep.subr.mxu0 0.0
        %1629 = vmatpush1.msra.mxu0 0.0
        %1630 = vmatprep.subr.mxu0 0.0
        %1631 = vmatpush1.msra.mxu0 0.0
        %1632 = vmatprep.subr.mxu0 0.0
        %1633 = vmatpush1.msra.mxu0 0.0
        %1634 = vmatprep.subr.mxu0 0.0
        %1635 = vmatpush1.msra.mxu0 0.0
        %1636 = vmatprep.subr.mxu0 0.0
        %1637 = vmatpush1.msra.mxu0 0.0
        %1638 = vmatprep.subr.mxu0 0.0
        %1639 = vmatpush1.msra.mxu0 0.0
        %1640 = vmatprep.subr.mxu0 0.0
        %1641 = vmatpush1.msra.mxu0 0.0
        %1642 = vmatprep.subr.mxu0 0.0
        %1643 = vmatpush1.msra.mxu0 0.0
        %1644 = vmatprep.subr.mxu0 0.0
        %1645 = vmatpush1.msra.mxu0 0.0
        %1646 = vmatprep.subr.mxu0 0.0
        %1647 = vmatpush1.msra.mxu0 0.0
        %1648 = vmatprep.subr.mxu0 0.0
        %1649 = vmatpush1.msra.mxu0 0.0
        %1650 = vmatprep.mubr.f32.mxu0 0.0
        %1651 = vmatmul.mubr.f32.gmra.mrb[0].mxu0 %v784
        %v1652 = vpop.f32.mrb[0].mxu0
        %v1653 = vadd.f32 0.0, %v1652
        %v1654 = vpop.f32.mrb[0].mxu0
        %v1655 = vadd.f32 0.0, %v1654
        %1656 = vmatprep.mubr.f32.mxu0 0.0
        %1657 = vmatmul.mubr.f32.gmra.mrb[0].mxu0 %v787
        %v1658 = vpop.f32.mrb[0].mxu0
        %v1659 = vadd.f32 0.0, %v1658
        %v1660 = vpop.f32.mrb[0].mxu0
        %v1661 = vadd.f32 0.0, %v1660
        %1662 = vdwg.mxu0
        %v1663 = vadd.f32 %v1538, %v1653
        %v1664 = vadd.f32 %v1540, %v1655
        %v1665 = vadd.f32 %v1544, %v1659
        %v1666 = vadd.f32 %v1546, %v1661
        %v1667 = vsel %vm881, %v1301, %v1310
        %v1668 = vsel %vm881, %v1302, %v1311
        %v1669 = vsel %vm881, %v1303, %v1312
        %v1670 = vsel %vm881, %v1304, %v1313
        %v1671 = vsel %vm881, %v1305, %v1314
        %v1672 = vsel %vm881, %v1306, %v1315
        %v1673 = vsel %vm881, %v1307, %v1316
        %v1674 = vsel %vm881, %v1308, %v1317
        %v1675 = vmul.f32 %v890, %v1667
        %v1676 = vmul.f32 %v890, %v1668
        %v1677 = vmul.f32 %v890, %v1669
        %v1678 = vmul.f32 %v890, %v1670
        %v1679 = vmul.f32 %v890, %v1671
        %v1680 = vmul.f32 %v890, %v1672
        %v1681 = vmul.f32 %v890, %v1673
        %v1682 = vmul.f32 %v890, %v1674
        %v1683 = vadd.f32 %v1675, %v899
        %v1684 = vadd.f32 %v1676, %v899
        %v1685 = vadd.f32 %v1677, %v899
        %v1686 = vadd.f32 %v1678, %v899
        %v1687 = vadd.f32 %v1679, %v899
        %v1688 = vadd.f32 %v1680, %v899
        %v1689 = vadd.f32 %v1681, %v899
        %v1690 = vadd.f32 %v1682, %v899
        %v1691 = vmax.f32 %v1683, 0.0
        %v1692 = vmax.f32 %v1684, 0.0
        %v1693 = vmax.f32 %v1685, 0.0
        %v1694 = vmax.f32 %v1686, 0.0
        %v1695 = vmax.f32 %v1687, 0.0
        %v1696 = vmax.f32 %v1688, 0.0
        %v1697 = vmax.f32 %v1689, 0.0
        %v1698 = vmax.f32 %v1690, 0.0
        %v1700 = vsel %vm567, %v1697, 0
        %v1703 = vsel %vm567, %v1698, 0
        %1705 = vmatprep.subr.mxu0 %v1692
        %1706 = vmatpush1.msra.mxu0 %v1691
        %1707 = vmatprep.subr.mxu0 %v1694
        %1708 = vmatpush1.msra.mxu0 %v1693
        %1709 = vmatprep.subr.mxu0 %v1696
        %1710 = vmatpush1.msra.mxu0 %v1695
        %1711 = vmatprep.subr.mxu0 %v1703
        %1712 = vmatpush1.msra.mxu0 %v1700
        %1713 = vmatprep.subr.mxu0 0.0
        %1714 = vmatpush1.msra.mxu0 0.0
        %1715 = vmatprep.subr.mxu0 0.0
        %1716 = vmatpush1.msra.mxu0 0.0
        %1717 = vmatprep.subr.mxu0 0.0
        %1718 = vmatpush1.msra.mxu0 0.0
        %1719 = vmatprep.subr.mxu0 0.0
        %1720 = vmatpush1.msra.mxu0 0.0
        %1721 = vmatprep.subr.mxu0 0.0
        %1722 = vmatpush1.msra.mxu0 0.0
        %1723 = vmatprep.subr.mxu0 0.0
        %1724 = vmatpush1.msra.mxu0 0.0
        %1725 = vmatprep.subr.mxu0 0.0
        %1726 = vmatpush1.msra.mxu0 0.0
        %1727 = vmatprep.subr.mxu0 0.0
        %1728 = vmatpush1.msra.mxu0 0.0
        %1729 = vmatprep.subr.mxu0 0.0
        %1730 = vmatpush1.msra.mxu0 0.0
        %1731 = vmatprep.subr.mxu0 0.0
        %1732 = vmatpush1.msra.mxu0 0.0
        %1733 = vmatprep.subr.mxu0 0.0
        %1734 = vmatpush1.msra.mxu0 0.0
        %1735 = vmatprep.subr.mxu0 0.0
        %1736 = vmatpush1.msra.mxu0 0.0
        %1737 = vmatprep.subr.mxu0 0.0
        %1738 = vmatpush1.msra.mxu0 0.0
        %1739 = vmatprep.subr.mxu0 0.0
        %1740 = vmatpush1.msra.mxu0 0.0
        %1741 = vmatprep.subr.mxu0 0.0
        %1742 = vmatpush1.msra.mxu0 0.0
        %1743 = vmatprep.subr.mxu0 0.0
        %1744 = vmatpush1.msra.mxu0 0.0
        %1745 = vmatprep.subr.mxu0 0.0
        %1746 = vmatpush1.msra.mxu0 0.0
        %1747 = vmatprep.subr.mxu0 0.0
        %1748 = vmatpush1.msra.mxu0 0.0
        %1749 = vmatprep.subr.mxu0 0.0
        %1750 = vmatpush1.msra.mxu0 0.0
        %1751 = vmatprep.subr.mxu0 0.0
        %1752 = vmatpush1.msra.mxu0 0.0
        %1753 = vmatprep.subr.mxu0 0.0
        %1754 = vmatpush1.msra.mxu0 0.0
        %1755 = vmatprep.subr.mxu0 0.0
        %1756 = vmatpush1.msra.mxu0 0.0
        %1757 = vmatprep.subr.mxu0 0.0
        %1758 = vmatpush1.msra.mxu0 0.0
        %1759 = vmatprep.subr.mxu0 0.0
        %1760 = vmatpush1.msra.mxu0 0.0
        %1761 = vmatprep.subr.mxu0 0.0
        %1762 = vmatpush1.msra.mxu0 0.0
        %1763 = vmatprep.subr.mxu0 0.0
        %1764 = vmatpush1.msra.mxu0 0.0
        %1765 = vmatprep.subr.mxu0 0.0
        %1766 = vmatpush1.msra.mxu0 0.0
        %1767 = vmatprep.subr.mxu0 0.0
        %1768 = vmatpush1.msra.mxu0 0.0
        %1769 = vmatprep.mubr.f32.mxu0 0.0
        %1770 = vmatmul.mubr.f32.gmra.mrb[0].mxu0 %v920
        %v1771 = vpop.f32.mrb[0].mxu0
        %v1772 = vadd.f32 0.0, %v1771
        %v1773 = vpop.f32.mrb[0].mxu0
        %v1774 = vadd.f32 0.0, %v1773
        %1775 = vmatprep.mubr.f32.mxu0 0.0
        %1776 = vmatmul.mubr.f32.gmra.mrb[0].mxu0 %v923
        %v1777 = vpop.f32.mrb[0].mxu0
        %v1778 = vadd.f32 0.0, %v1777
        %v1779 = vpop.f32.mrb[0].mxu0
        %v1780 = vadd.f32 0.0, %v1779
        %1781 = vdwg.mxu0
        %v1782 = vadd.f32 %v1663, %v1772
        %v1783 = vadd.f32 %v1664, %v1774
        %v1784 = vadd.f32 %v1665, %v1778
        %v1785 = vadd.f32 %v1666, %v1780
        %v1786 = vsel %vm1017, %v1301, %v1310
        %v1787 = vsel %vm1017, %v1302, %v1311
        %v1788 = vsel %vm1017, %v1303, %v1312
        %v1789 = vsel %vm1017, %v1304, %v1313
        %v1790 = vsel %vm1017, %v1305, %v1314
        %v1791 = vsel %vm1017, %v1306, %v1315
        %v1792 = vsel %vm1017, %v1307, %v1316
        %v1793 = vsel %vm1017, %v1308, %v1317
        %v1794 = vmul.f32 %v1026, %v1786
        %v1795 = vmul.f32 %v1026, %v1787
        %v1796 = vmul.f32 %v1026, %v1788
        %v1797 = vmul.f32 %v1026, %v1789
        %v1798 = vmul.f32 %v1026, %v1790
        %v1799 = vmul.f32 %v1026, %v1791
        %v1800 = vmul.f32 %v1026, %v1792
        %v1801 = vmul.f32 %v1026, %v1793
        %v1802 = vadd.f32 %v1794, %v1035
        %v1803 = vadd.f32 %v1795, %v1035
        %v1804 = vadd.f32 %v1796, %v1035
        %v1805 = vadd.f32 %v1797, %v1035
        %v1806 = vadd.f32 %v1798, %v1035
        %v1807 = vadd.f32 %v1799, %v1035
        %v1808 = vadd.f32 %v1800, %v1035
        %v1809 = vadd.f32 %v1801, %v1035
        %v1810 = vmax.f32 %v1802, 0.0
        %v1811 = vmax.f32 %v1803, 0.0
        %v1812 = vmax.f32 %v1804, 0.0
        %v1813 = vmax.f32 %v1805, 0.0
        %v1814 = vmax.f32 %v1806, 0.0
        %v1815 = vmax.f32 %v1807, 0.0
        %v1816 = vmax.f32 %v1808, 0.0
        %v1817 = vmax.f32 %v1809, 0.0
        %v1819 = vsel %vm567, %v1816, 0
        %v1822 = vsel %vm567, %v1817, 0
        %1824 = vmatprep.subr.mxu0 %v1811
        %1825 = vmatpush1.msra.mxu0 %v1810
        %1826 = vmatprep.subr.mxu0 %v1813
        %1827 = vmatpush1.msra.mxu0 %v1812
        %1828 = vmatprep.subr.mxu0 %v1815
        %1829 = vmatpush1.msra.mxu0 %v1814
        %1830 = vmatprep.subr.mxu0 %v1822
        %1831 = vmatpush1.msra.mxu0 %v1819
        %1832 = vmatprep.subr.mxu0 0.0
        %1833 = vmatpush1.msra.mxu0 0.0
        %1834 = vmatprep.subr.mxu0 0.0
        %1835 = vmatpush1.msra.mxu0 0.0
        %1836 = vmatprep.subr.mxu0 0.0
        %1837 = vmatpush1.msra.mxu0 0.0
        %1838 = vmatprep.subr.mxu0 0.0
        %1839 = vmatpush1.msra.mxu0 0.0
        %1840 = vmatprep.subr.mxu0 0.0
        %1841 = vmatpush1.msra.mxu0 0.0
        %1842 = vmatprep.subr.mxu0 0.0
        %1843 = vmatpush1.msra.mxu0 0.0
        %1844 = vmatprep.subr.mxu0 0.0
        %1845 = vmatpush1.msra.mxu0 0.0
        %1846 = vmatprep.subr.mxu0 0.0
        %1847 = vmatpush1.msra.mxu0 0.0
        %1848 = vmatprep.subr.mxu0 0.0
        %1849 = vmatpush1.msra.mxu0 0.0
        %1850 = vmatprep.subr.mxu0 0.0
        %1851 = vmatpush1.msra.mxu0 0.0
        %1852 = vmatprep.subr.mxu0 0.0
        %1853 = vmatpush1.msra.mxu0 0.0
        %1854 = vmatprep.subr.mxu0 0.0
        %1855 = vmatpush1.msra.mxu0 0.0
        %1856 = vmatprep.subr.mxu0 0.0
        %1857 = vmatpush1.msra.mxu0 0.0
        %1858 = vmatprep.subr.mxu0 0.0
        %1859 = vmatpush1.msra.mxu0 0.0
        %1860 = vmatprep.subr.mxu0 0.0
        %1861 = vmatpush1.msra.mxu0 0.0
        %1862 = vmatprep.subr.mxu0 0.0
        %1863 = vmatpush1.msra.mxu0 0.0
        %1864 = vmatprep.subr.mxu0 0.0
        %1865 = vmatpush1.msra.mxu0 0.0
        %1866 = vmatprep.subr.mxu0 0.0
        %1867 = vmatpush1.msra.mxu0 0.0
        %1868 = vmatprep.subr.mxu0 0.0
        %1869 = vmatpush1.msra.mxu0 0.0
        %1870 = vmatprep.subr.mxu0 0.0
        %1871 = vmatpush1.msra.mxu0 0.0
        %1872 = vmatprep.subr.mxu0 0.0
        %1873 = vmatpush1.msra.mxu0 0.0
        %1874 = vmatprep.subr.mxu0 0.0
        %1875 = vmatpush1.msra.mxu0 0.0
        %1876 = vmatprep.subr.mxu0 0.0
        %1877 = vmatpush1.msra.mxu0 0.0
        %1878 = vmatprep.subr.mxu0 0.0
        %1879 = vmatpush1.msra.mxu0 0.0
        %1880 = vmatprep.subr.mxu0 0.0
        %1881 = vmatpush1.msra.mxu0 0.0
        %1882 = vmatprep.subr.mxu0 0.0
        %1883 = vmatpush1.msra.mxu0 0.0
        %1884 = vmatprep.subr.mxu0 0.0
        %1885 = vmatpush1.msra.mxu0 0.0
        %1886 = vmatprep.subr.mxu0 0.0
        %1887 = vmatpush1.msra.mxu0 0.0
        %1888 = vmatprep.mubr.f32.mxu0 0.0
        %1889 = vmatmul.mubr.f32.gmra.mrb[0].mxu0 %v1056
        %v1890 = vpop.f32.mrb[0].mxu0
        %v1891 = vadd.f32 0.0, %v1890
        %v1892 = vpop.f32.mrb[0].mxu0
        %v1893 = vadd.f32 0.0, %v1892
        %1894 = vmatprep.mubr.f32.mxu0 0.0
        %1895 = vmatmul.mubr.f32.gmra.mrb[0].mxu0 %v1059
        %v1896 = vpop.f32.mrb[0].mxu0
        %v1897 = vadd.f32 0.0, %v1896
        %v1898 = vpop.f32.mrb[0].mxu0
        %v1899 = vadd.f32 0.0, %v1898
        %1900 = vdwg.mxu0
        %v1901 = vadd.f32 %v1782, %v1891
        %v1902 = vadd.f32 %v1783, %v1893
        %v1903 = vadd.f32 %v1784, %v1897
        %v1904 = vadd.f32 %v1785, %v1899
        %v1905 = vsel %vm1153, %v1301, %v1310
        %v1906 = vsel %vm1153, %v1302, %v1311
        %v1907 = vsel %vm1153, %v1303, %v1312
        %v1908 = vsel %vm1153, %v1304, %v1313
        %v1909 = vsel %vm1153, %v1305, %v1314
        %v1910 = vsel %vm1153, %v1306, %v1315
        %v1911 = vsel %vm1153, %v1307, %v1316
        %v1912 = vsel %vm1153, %v1308, %v1317
        %v1913 = vmul.f32 %v1162, %v1905
        %v1914 = vmul.f32 %v1162, %v1906
        %v1915 = vmul.f32 %v1162, %v1907
        %v1916 = vmul.f32 %v1162, %v1908
        %v1917 = vmul.f32 %v1162, %v1909
        %v1918 = vmul.f32 %v1162, %v1910
        %v1919 = vmul.f32 %v1162, %v1911
        %v1920 = vmul.f32 %v1162, %v1912
        %v1921 = vadd.f32 %v1913, %v1171
        %v1922 = vadd.f32 %v1914, %v1171
        %v1923 = vadd.f32 %v1915, %v1171
        %v1924 = vadd.f32 %v1916, %v1171
        %v1925 = vadd.f32 %v1917, %v1171
        %v1926 = vadd.f32 %v1918, %v1171
        %v1927 = vadd.f32 %v1919, %v1171
        %v1928 = vadd.f32 %v1920, %v1171
        %v1929 = vmax.f32 %v1921, 0.0
        %v1930 = vmax.f32 %v1922, 0.0
        %v1931 = vmax.f32 %v1923, 0.0
        %v1932 = vmax.f32 %v1924, 0.0
        %v1933 = vmax.f32 %v1925, 0.0
        %v1934 = vmax.f32 %v1926, 0.0
        %v1935 = vmax.f32 %v1927, 0.0
        %v1936 = vmax.f32 %v1928, 0.0
        %v1938 = vsel %vm567, %v1935, 0
        %v1941 = vsel %vm567, %v1936, 0
        %1943 = vmatprep.subr.mxu0 %v1930
        %1944 = vmatpush1.msra.mxu0 %v1929
        %1945 = vmatprep.subr.mxu0 %v1932
        %1946 = vmatpush1.msra.mxu0 %v1931
        %1947 = vmatprep.subr.mxu0 %v1934
        %1948 = vmatpush1.msra.mxu0 %v1933
        %1949 = vmatprep.subr.mxu0 %v1941
        %1950 = vmatpush1.msra.mxu0 %v1938
        %1951 = vmatprep.subr.mxu0 0.0
        %1952 = vmatpush1.msra.mxu0 0.0
        %1953 = vmatprep.subr.mxu0 0.0
        %1954 = vmatpush1.msra.mxu0 0.0
        %1955 = vmatprep.subr.mxu0 0.0
        %1956 = vmatpush1.msra.mxu0 0.0
        %1957 = vmatprep.subr.mxu0 0.0
        %1958 = vmatpush1.msra.mxu0 0.0
        %1959 = vmatprep.subr.mxu0 0.0
        %1960 = vmatpush1.msra.mxu0 0.0
        %1961 = vmatprep.subr.mxu0 0.0
        %1962 = vmatpush1.msra.mxu0 0.0
        %1963 = vmatprep.subr.mxu0 0.0
        %1964 = vmatpush1.msra.mxu0 0.0
        %1965 = vmatprep.subr.mxu0 0.0
        %1966 = vmatpush1.msra.mxu0 0.0
        %1967 = vmatprep.subr.mxu0 0.0
        %1968 = vmatpush1.msra.mxu0 0.0
        %1969 = vmatprep.subr.mxu0 0.0
        %1970 = vmatpush1.msra.mxu0 0.0
        %1971 = vmatprep.subr.mxu0 0.0
        %1972 = vmatpush1.msra.mxu0 0.0
        %1973 = vmatprep.subr.mxu0 0.0
        %1974 = vmatpush1.msra.mxu0 0.0
        %1975 = vmatprep.subr.mxu0 0.0
        %1976 = vmatpush1.msra.mxu0 0.0
        %1977 = vmatprep.subr.mxu0 0.0
        %1978 = vmatpush1.msra.mxu0 0.0
        %1979 = vmatprep.subr.mxu0 0.0
        %1980 = vmatpush1.msra.mxu0 0.0
        %1981 = vmatprep.subr.mxu0 0.0
        %1982 = vmatpush1.msra.mxu0 0.0
        %1983 = vmatprep.subr.mxu0 0.0
        %1984 = vmatpush1.msra.mxu0 0.0
        %1985 = vmatprep.subr.mxu0 0.0
        %1986 = vmatpush1.msra.mxu0 0.0
        %1987 = vmatprep.subr.mxu0 0.0
        %1988 = vmatpush1.msra.mxu0 0.0
        %1989 = vmatprep.subr.mxu0 0.0
        %1990 = vmatpush1.msra.mxu0 0.0
        %1991 = vmatprep.subr.mxu0 0.0
        %1992 = vmatpush1.msra.mxu0 0.0
        %1993 = vmatprep.subr.mxu0 0.0
        %1994 = vmatpush1.msra.mxu0 0.0
        %1995 = vmatprep.subr.mxu0 0.0
        %1996 = vmatpush1.msra.mxu0 0.0
        %1997 = vmatprep.subr.mxu0 0.0
        %1998 = vmatpush1.msra.mxu0 0.0
        %1999 = vmatprep.subr.mxu0 0.0
        %2000 = vmatpush1.msra.mxu0 0.0
        %2001 = vmatprep.subr.mxu0 0.0
        %2002 = vmatpush1.msra.mxu0 0.0
        %2003 = vmatprep.subr.mxu0 0.0
        %2004 = vmatpush1.msra.mxu0 0.0
        %2005 = vmatprep.subr.mxu0 0.0
        %2006 = vmatpush1.msra.mxu0 0.0
        %2007 = vmatprep.mubr.f32.mxu0 0.0
        %2008 = vmatmul.mubr.f32.gmra.mrb[0].mxu0 %v1192
        %v2009 = vpop.f32.mrb[0].mxu0
        %v2010 = vadd.f32 0.0, %v2009
        %v2011 = vpop.f32.mrb[0].mxu0
        %v2012 = vadd.f32 0.0, %v2011
        %2013 = vmatprep.mubr.f32.mxu0 0.0
        %2014 = vmatmul.mubr.f32.gmra.mrb[0].mxu0 %v1195
        %v2015 = vpop.f32.mrb[0].mxu0
        %v2016 = vadd.f32 0.0, %v2015
        %v2017 = vpop.f32.mrb[0].mxu0
        %v2018 = vadd.f32 0.0, %v2017
        %2019 = vdwg.mxu0
        %v2020 = vadd.f32 %v1901, %v2010
        %v2021 = vadd.f32 %v1902, %v2012
        %v2022 = vadd.f32 %v1903, %v2016
        %v2023 = vadd.f32 %v1904, %v2018
        %v2024 = vadd.f32 %v2020, %v1289
        %v2025 = vadd.f32 %v2021, %v1289
        %v2026 = vadd.f32 %v2022, %v1294
        %v2027 = vadd.f32 %v2023, %v1294
        %v2028 = vmax.f32 %v1296, %v2024
        %v2029 = vmax.f32 %v1297, %v2025
        %v2030 = vmax.f32 %v1298, %v2026
        %v2031 = vmax.f32 %v1299, %v2027
        %s2032 = scalar_lea.vmem %s453, 128
        %v2033 = vld [vmem:[%s2032] sm:$0xff]
        %v2034 = vld [vmem:[%s2032 + $0x8] sm:$0xff]
        %v2035 = vld [vmem:[%s2032 + $0x10] sm:$0xff]
        %v2036 = vld [vmem:[%s2032 + $0x18] sm:$0xff]
        %v2037 = vld [vmem:[%s2032 + $0x20] sm:$0xff]
        %v2038 = vld [vmem:[%s2032 + $0x28] sm:$0xff]
        %v2039 = vld [vmem:[%s2032 + $0x30] sm:$0x1]
        %v2040 = vld [vmem:[%s2032 + $0x38] sm:$0x1]
        %s2041 = scalar_lea.vmem %s458, 128
        %v2042 = vld [vmem:[%s2041] sm:$0xff]
        %v2043 = vld [vmem:[%s2041 + $0x8] sm:$0xff]
        %v2044 = vld [vmem:[%s2041 + $0x10] sm:$0xff]
        %v2045 = vld [vmem:[%s2041 + $0x18] sm:$0xff]
        %v2046 = vld [vmem:[%s2041 + $0x20] sm:$0xff]
        %v2047 = vld [vmem:[%s2041 + $0x28] sm:$0xff]
        %v2048 = vld [vmem:[%s2041 + $0x30] sm:$0x1]
        %v2049 = vld [vmem:[%s2041 + $0x38] sm:$0x1]
        %v2050 = vsel %vm480, %v2033, %v2042
        %v2051 = vsel %vm480, %v2034, %v2043
        %v2052 = vsel %vm480, %v2035, %v2044
        %v2053 = vsel %vm480, %v2036, %v2045
        %v2054 = vsel %vm480, %v2037, %v2046
        %v2055 = vsel %vm480, %v2038, %v2047
        %v2056 = vsel %vm480, %v2039, %v2048
        %v2057 = vsel %vm480, %v2040, %v2049
        %v2058 = vmul.f32 %v489, %v2050
        %v2059 = vmul.f32 %v489, %v2051
        %v2060 = vmul.f32 %v489, %v2052
        %v2061 = vmul.f32 %v489, %v2053
        %v2062 = vmul.f32 %v489, %v2054
        %v2063 = vmul.f32 %v489, %v2055
        %v2064 = vmul.f32 %v489, %v2056
        %v2065 = vmul.f32 %v489, %v2057
        %v2066 = vadd.f32 %v2058, %v498
        %v2067 = vadd.f32 %v2059, %v498
        %v2068 = vadd.f32 %v2060, %v498
        %v2069 = vadd.f32 %v2061, %v498
        %v2070 = vadd.f32 %v2062, %v498
        %v2071 = vadd.f32 %v2063, %v498
        %v2072 = vadd.f32 %v2064, %v498
        %v2073 = vadd.f32 %v2065, %v498
        %v2074 = vmax.f32 %v2066, 0.0
        %v2075 = vmax.f32 %v2067, 0.0
        %v2076 = vmax.f32 %v2068, 0.0
        %v2077 = vmax.f32 %v2069, 0.0
        %v2078 = vmax.f32 %v2070, 0.0
        %v2079 = vmax.f32 %v2071, 0.0
        %v2080 = vmax.f32 %v2072, 0.0
        %v2081 = vmax.f32 %v2073, 0.0
        %v2082 = vsel %vm522, %v2033, %v2042
        %v2083 = vsel %vm522, %v2034, %v2043
        %v2084 = vsel %vm522, %v2035, %v2044
        %v2085 = vsel %vm522, %v2036, %v2045
        %v2086 = vsel %vm522, %v2037, %v2046
        %v2087 = vsel %vm522, %v2038, %v2047
        %v2088 = vsel %vm522, %v2039, %v2048
        %v2089 = vsel %vm522, %v2040, %v2049
        %v2090 = vmul.f32 %v531, %v2082
        %v2091 = vmul.f32 %v531, %v2083
        %v2092 = vmul.f32 %v531, %v2084
        %v2093 = vmul.f32 %v531, %v2085
        %v2094 = vmul.f32 %v531, %v2086
        %v2095 = vmul.f32 %v531, %v2087
        %v2096 = vmul.f32 %v531, %v2088
        %v2097 = vmul.f32 %v531, %v2089
        %v2098 = vadd.f32 %v2090, %v540
        %v2099 = vadd.f32 %v2091, %v540
        %v2100 = vadd.f32 %v2092, %v540
        %v2101 = vadd.f32 %v2093, %v540
        %v2102 = vadd.f32 %v2094, %v540
        %v2103 = vadd.f32 %v2095, %v540
        %v2104 = vadd.f32 %v2096, %v540
        %v2105 = vadd.f32 %v2097, %v540
        %v2106 = vmax.f32 %v2098, 0.0
        %v2107 = vmax.f32 %v2099, 0.0
        %v2108 = vmax.f32 %v2100, 0.0
        %v2109 = vmax.f32 %v2101, 0.0
        %v2110 = vmax.f32 %v2102, 0.0
        %v2111 = vmax.f32 %v2103, 0.0
        %v2112 = vmax.f32 %v2104, 0.0
        %v2113 = vmax.f32 %v2105, 0.0
        %v2115 = vsel %vm567, %v2112, 0
        %v2118 = vsel %vm567, %v2113, 0
        %2120 = vmatprep.subr.mxu0 %v2107
        %2121 = vmatpush1.msra.mxu0 %v2106
        %2122 = vmatprep.subr.mxu0 %v2109
        %2123 = vmatpush1.msra.mxu0 %v2108
        %2124 = vmatprep.subr.mxu0 %v2111
        %2125 = vmatpush1.msra.mxu0 %v2110
        %2126 = vmatprep.subr.mxu0 %v2118
        %2127 = vmatpush1.msra.mxu0 %v2115
        %2128 = vmatprep.subr.mxu0 0.0
        %2129 = vmatpush1.msra.mxu0 0.0
        %2130 = vmatprep.subr.mxu0 0.0
        %2131 = vmatpush1.msra.mxu0 0.0
        %2132 = vmatprep.subr.mxu0 0.0
        %2133 = vmatpush1.msra.mxu0 0.0
        %2134 = vmatprep.subr.mxu0 0.0
        %2135 = vmatpush1.msra.mxu0 0.0
        %2136 = vmatprep.subr.mxu0 0.0
        %2137 = vmatpush1.msra.mxu0 0.0
        %2138 = vmatprep.subr.mxu0 0.0
        %2139 = vmatpush1.msra.mxu0 0.0
        %2140 = vmatprep.subr.mxu0 0.0
        %2141 = vmatpush1.msra.mxu0 0.0
        %2142 = vmatprep.subr.mxu0 0.0
        %2143 = vmatpush1.msra.mxu0 0.0
        %2144 = vmatprep.subr.mxu0 0.0
        %2145 = vmatpush1.msra.mxu0 0.0
        %2146 = vmatprep.subr.mxu0 0.0
        %2147 = vmatpush1.msra.mxu0 0.0
        %2148 = vmatprep.subr.mxu0 0.0
        %2149 = vmatpush1.msra.mxu0 0.0
        %2150 = vmatprep.subr.mxu0 0.0
        %2151 = vmatpush1.msra.mxu0 0.0
        %2152 = vmatprep.subr.mxu0 0.0
        %2153 = vmatpush1.msra.mxu0 0.0
        %2154 = vmatprep.subr.mxu0 0.0
        %2155 = vmatpush1.msra.mxu0 0.0
        %2156 = vmatprep.subr.mxu0 0.0
        %2157 = vmatpush1.msra.mxu0 0.0
        %2158 = vmatprep.subr.mxu0 0.0
        %2159 = vmatpush1.msra.mxu0 0.0
        %2160 = vmatprep.subr.mxu0 0.0
        %2161 = vmatpush1.msra.mxu0 0.0
        %2162 = vmatprep.subr.mxu0 0.0
        %2163 = vmatpush1.msra.mxu0 0.0
        %2164 = vmatprep.subr.mxu0 0.0
        %2165 = vmatpush1.msra.mxu0 0.0
        %2166 = vmatprep.subr.mxu0 0.0
        %2167 = vmatpush1.msra.mxu0 0.0
        %2168 = vmatprep.subr.mxu0 0.0
        %2169 = vmatpush1.msra.mxu0 0.0
        %2170 = vmatprep.subr.mxu0 0.0
        %2171 = vmatpush1.msra.mxu0 0.0
        %2172 = vmatprep.subr.mxu0 0.0
        %2173 = vmatpush1.msra.mxu0 0.0
        %2174 = vmatprep.subr.mxu0 0.0
        %2175 = vmatpush1.msra.mxu0 0.0
        %2176 = vmatprep.subr.mxu0 0.0
        %2177 = vmatpush1.msra.mxu0 0.0
        %2178 = vmatprep.subr.mxu0 0.0
        %2179 = vmatpush1.msra.mxu0 0.0
        %2180 = vmatprep.subr.mxu0 0.0
        %2181 = vmatpush1.msra.mxu0 0.0
        %2182 = vmatprep.subr.mxu0 0.0
        %2183 = vmatpush1.msra.mxu0 0.0
        %2184 = vmatprep.mubr.f32.mxu0 0.0
        %2185 = vmatmul.mubr.f32.gmra.mrb[0].mxu0 %v562
        %v2186 = vpop.f32.mrb[0].mxu0
        %v2187 = vadd.f32 0.0, %v2186
        %v2188 = vpop.f32.mrb[0].mxu0
        %v2189 = vadd.f32 0.0, %v2188
        %2190 = vmatprep.mubr.f32.mxu0 0.0
        %2191 = vmatmul.mubr.f32.gmra.mrb[0].mxu0 %v565
        %v2192 = vpop.f32.mrb[0].mxu0
        %v2193 = vadd.f32 0.0, %v2192
        %v2194 = vpop.f32.mrb[0].mxu0
        %v2195 = vadd.f32 0.0, %v2194
        %2196 = vdwg.mxu0
        %v2198 = vsel %vm567, %v2080, 0
        %v2201 = vsel %vm567, %v2081, 0
        %2203 = vmatprep.subr.mxu0 %v2075
        %2204 = vmatpush1.msra.mxu0 %v2074
        %2205 = vmatprep.subr.mxu0 %v2077
        %2206 = vmatpush1.msra.mxu0 %v2076
        %2207 = vmatprep.subr.mxu0 %v2079
        %2208 = vmatpush1.msra.mxu0 %v2078
        %2209 = vmatprep.subr.mxu0 %v2201
        %2210 = vmatpush1.msra.mxu0 %v2198
        %2211 = vmatprep.subr.mxu0 0.0
        %2212 = vmatpush1.msra.mxu0 0.0
        %2213 = vmatprep.subr.mxu0 0.0
        %2214 = vmatpush1.msra.mxu0 0.0
        %2215 = vmatprep.subr.mxu0 0.0
        %2216 = vmatpush1.msra.mxu0 0.0
        %2217 = vmatprep.subr.mxu0 0.0
        %2218 = vmatpush1.msra.mxu0 0.0
        %2219 = vmatprep.subr.mxu0 0.0
        %2220 = vmatpush1.msra.mxu0 0.0
        %2221 = vmatprep.subr.mxu0 0.0
        %2222 = vmatpush1.msra.mxu0 0.0
        %2223 = vmatprep.subr.mxu0 0.0
        %2224 = vmatpush1.msra.mxu0 0.0
        %2225 = vmatprep.subr.mxu0 0.0
        %2226 = vmatpush1.msra.mxu0 0.0
        %2227 = vmatprep.subr.mxu0 0.0
        %2228 = vmatpush1.msra.mxu0 0.0
        %2229 = vmatprep.subr.mxu0 0.0
        %2230 = vmatpush1.msra.mxu0 0.0
        %2231 = vmatprep.subr.mxu0 0.0
        %2232 = vmatpush1.msra.mxu0 0.0
        %2233 = vmatprep.subr.mxu0 0.0
        %2234 = vmatpush1.msra.mxu0 0.0
        %2235 = vmatprep.subr.mxu0 0.0
        %2236 = vmatpush1.msra.mxu0 0.0
        %2237 = vmatprep.subr.mxu0 0.0
        %2238 = vmatpush1.msra.mxu0 0.0
        %2239 = vmatprep.subr.mxu0 0.0
        %2240 = vmatpush1.msra.mxu0 0.0
        %2241 = vmatprep.subr.mxu0 0.0
        %2242 = vmatpush1.msra.mxu0 0.0
        %2243 = vmatprep.subr.mxu0 0.0
        %2244 = vmatpush1.msra.mxu0 0.0
        %2245 = vmatprep.subr.mxu0 0.0
        %2246 = vmatpush1.msra.mxu0 0.0
        %2247 = vmatprep.subr.mxu0 0.0
        %2248 = vmatpush1.msra.mxu0 0.0
        %2249 = vmatprep.subr.mxu0 0.0
        %2250 = vmatpush1.msra.mxu0 0.0
        %2251 = vmatprep.subr.mxu0 0.0
        %2252 = vmatpush1.msra.mxu0 0.0
        %2253 = vmatprep.subr.mxu0 0.0
        %2254 = vmatpush1.msra.mxu0 0.0
        %2255 = vmatprep.subr.mxu0 0.0
        %2256 = vmatpush1.msra.mxu0 0.0
        %2257 = vmatprep.subr.mxu0 0.0
        %2258 = vmatpush1.msra.mxu0 0.0
        %2259 = vmatprep.subr.mxu0 0.0
        %2260 = vmatpush1.msra.mxu0 0.0
        %2261 = vmatprep.subr.mxu0 0.0
        %2262 = vmatpush1.msra.mxu0 0.0
        %2263 = vmatprep.subr.mxu0 0.0
        %2264 = vmatpush1.msra.mxu0 0.0
        %2265 = vmatprep.subr.mxu0 0.0
        %2266 = vmatpush1.msra.mxu0 0.0
        %2267 = vmatprep.mubr.f32.mxu0 0.0
        %2268 = vmatmul.mubr.f32.gmra.mrb[0].mxu0 %v652
        %v2269 = vpop.f32.mrb[0].mxu0
        %v2270 = vadd.f32 %v2187, %v2269
        %v2271 = vpop.f32.mrb[0].mxu0
        %v2272 = vadd.f32 %v2189, %v2271
        %2273 = vmatprep.mubr.f32.mxu0 0.0
        %2274 = vmatmul.mubr.f32.gmra.mrb[0].mxu0 %v655
        %v2275 = vpop.f32.mrb[0].mxu0
        %v2276 = vadd.f32 %v2193, %v2275
        %v2277 = vpop.f32.mrb[0].mxu0
        %v2278 = vadd.f32 %v2195, %v2277
        %2279 = vdwg.mxu0
        %v2280 = vsel %vm745, %v2033, %v2042
        %v2281 = vsel %vm745, %v2034, %v2043
        %v2282 = vsel %vm745, %v2035, %v2044
        %v2283 = vsel %vm745, %v2036, %v2045
        %v2284 = vsel %vm745, %v2037, %v2046
        %v2285 = vsel %vm745, %v2038, %v2047
        %v2286 = vsel %vm745, %v2039, %v2048
        %v2287 = vsel %vm745, %v2040, %v2049
        %v2288 = vmul.f32 %v754, %v2280
        %v2289 = vmul.f32 %v754, %v2281
        %v2290 = vmul.f32 %v754, %v2282
        %v2291 = vmul.f32 %v754, %v2283
        %v2292 = vmul.f32 %v754, %v2284
        %v2293 = vmul.f32 %v754, %v2285
        %v2294 = vmul.f32 %v754, %v2286
        %v2295 = vmul.f32 %v754, %v2287
        %v2296 = vadd.f32 %v2288, %v763
        %v2297 = vadd.f32 %v2289, %v763
        %v2298 = vadd.f32 %v2290, %v763
        %v2299 = vadd.f32 %v2291, %v763
        %v2300 = vadd.f32 %v2292, %v763
        %v2301 = vadd.f32 %v2293, %v763
        %v2302 = vadd.f32 %v2294, %v763
        %v2303 = vadd.f32 %v2295, %v763
        %v2304 = vmax.f32 %v2296, 0.0
        %v2305 = vmax.f32 %v2297, 0.0
        %v2306 = vmax.f32 %v2298, 0.0
        %v2307 = vmax.f32 %v2299, 0.0
        %v2308 = vmax.f32 %v2300, 0.0
        %v2309 = vmax.f32 %v2301, 0.0
        %v2310 = vmax.f32 %v2302, 0.0
        %v2311 = vmax.f32 %v2303, 0.0
        %v2313 = vsel %vm567, %v2310, 0
        %v2316 = vsel %vm567, %v2311, 0
        %2318 = vmatprep.subr.mxu0 %v2305
        %2319 = vmatpush1.msra.mxu0 %v2304
        %2320 = vmatprep.subr.mxu0 %v2307
        %2321 = vmatpush1.msra.mxu0 %v2306
        %2322 = vmatprep.subr.mxu0 %v2309
        %2323 = vmatpush1.msra.mxu0 %v2308
        %2324 = vmatprep.subr.mxu0 %v2316
        %2325 = vmatpush1.msra.mxu0 %v2313
        %2326 = vmatprep.subr.mxu0 0.0
        %2327 = vmatpush1.msra.mxu0 0.0
        %2328 = vmatprep.subr.mxu0 0.0
        %2329 = vmatpush1.msra.mxu0 0.0
        %2330 = vmatprep.subr.mxu0 0.0
        %2331 = vmatpush1.msra.mxu0 0.0
        %2332 = vmatprep.subr.mxu0 0.0
        %2333 = vmatpush1.msra.mxu0 0.0
        %2334 = vmatprep.subr.mxu0 0.0
        %2335 = vmatpush1.msra.mxu0 0.0
        %2336 = vmatprep.subr.mxu0 0.0
        %2337 = vmatpush1.msra.mxu0 0.0
        %2338 = vmatprep.subr.mxu0 0.0
        %2339 = vmatpush1.msra.mxu0 0.0
        %2340 = vmatprep.subr.mxu0 0.0
        %2341 = vmatpush1.msra.mxu0 0.0
        %2342 = vmatprep.subr.mxu0 0.0
        %2343 = vmatpush1.msra.mxu0 0.0
        %2344 = vmatprep.subr.mxu0 0.0
        %2345 = vmatpush1.msra.mxu0 0.0
        %2346 = vmatprep.subr.mxu0 0.0
        %2347 = vmatpush1.msra.mxu0 0.0
        %2348 = vmatprep.subr.mxu0 0.0
        %2349 = vmatpush1.msra.mxu0 0.0
        %2350 = vmatprep.subr.mxu0 0.0
        %2351 = vmatpush1.msra.mxu0 0.0
        %2352 = vmatprep.subr.mxu0 0.0
        %2353 = vmatpush1.msra.mxu0 0.0
        %2354 = vmatprep.subr.mxu0 0.0
        %2355 = vmatpush1.msra.mxu0 0.0
        %2356 = vmatprep.subr.mxu0 0.0
        %2357 = vmatpush1.msra.mxu0 0.0
        %2358 = vmatprep.subr.mxu0 0.0
        %2359 = vmatpush1.msra.mxu0 0.0
        %2360 = vmatprep.subr.mxu0 0.0
        %2361 = vmatpush1.msra.mxu0 0.0
        %2362 = vmatprep.subr.mxu0 0.0
        %2363 = vmatpush1.msra.mxu0 0.0
        %2364 = vmatprep.subr.mxu0 0.0
        %2365 = vmatpush1.msra.mxu0 0.0
        %2366 = vmatprep.subr.mxu0 0.0
        %2367 = vmatpush1.msra.mxu0 0.0
        %2368 = vmatprep.subr.mxu0 0.0
        %2369 = vmatpush1.msra.mxu0 0.0
        %2370 = vmatprep.subr.mxu0 0.0
        %2371 = vmatpush1.msra.mxu0 0.0
        %2372 = vmatprep.subr.mxu0 0.0
        %2373 = vmatpush1.msra.mxu0 0.0
        %2374 = vmatprep.subr.mxu0 0.0
        %2375 = vmatpush1.msra.mxu0 0.0
        %2376 = vmatprep.subr.mxu0 0.0
        %2377 = vmatpush1.msra.mxu0 0.0
        %2378 = vmatprep.subr.mxu0 0.0
        %2379 = vmatpush1.msra.mxu0 0.0
        %2380 = vmatprep.subr.mxu0 0.0
        %2381 = vmatpush1.msra.mxu0 0.0
        %2382 = vmatprep.mubr.f32.mxu0 0.0
        %2383 = vmatmul.mubr.f32.gmra.mrb[0].mxu0 %v784
        %v2384 = vpop.f32.mrb[0].mxu0
        %v2385 = vadd.f32 0.0, %v2384
        %v2386 = vpop.f32.mrb[0].mxu0
        %v2387 = vadd.f32 0.0, %v2386
        %2388 = vmatprep.mubr.f32.mxu0 0.0
        %2389 = vmatmul.mubr.f32.gmra.mrb[0].mxu0 %v787
        %v2390 = vpop.f32.mrb[0].mxu0
        %v2391 = vadd.f32 0.0, %v2390
        %v2392 = vpop.f32.mrb[0].mxu0
        %v2393 = vadd.f32 0.0, %v2392
        %2394 = vdwg.mxu0
        %v2395 = vadd.f32 %v2270, %v2385
        %v2396 = vadd.f32 %v2272, %v2387
        %v2397 = vadd.f32 %v2276, %v2391
        %v2398 = vadd.f32 %v2278, %v2393
        %v2399 = vsel %vm881, %v2033, %v2042
        %v2400 = vsel %vm881, %v2034, %v2043
        %v2401 = vsel %vm881, %v2035, %v2044
        %v2402 = vsel %vm881, %v2036, %v2045
        %v2403 = vsel %vm881, %v2037, %v2046
        %v2404 = vsel %vm881, %v2038, %v2047
        %v2405 = vsel %vm881, %v2039, %v2048
        %v2406 = vsel %vm881, %v2040, %v2049
        %v2407 = vmul.f32 %v890, %v2399
        %v2408 = vmul.f32 %v890, %v2400
        %v2409 = vmul.f32 %v890, %v2401
        %v2410 = vmul.f32 %v890, %v2402
        %v2411 = vmul.f32 %v890, %v2403
        %v2412 = vmul.f32 %v890, %v2404
        %v2413 = vmul.f32 %v890, %v2405
        %v2414 = vmul.f32 %v890, %v2406
        %v2415 = vadd.f32 %v2407, %v899
        %v2416 = vadd.f32 %v2408, %v899
        %v2417 = vadd.f32 %v2409, %v899
        %v2418 = vadd.f32 %v2410, %v899
        %v2419 = vadd.f32 %v2411, %v899
        %v2420 = vadd.f32 %v2412, %v899
        %v2421 = vadd.f32 %v2413, %v899
        %v2422 = vadd.f32 %v2414, %v899
        %v2423 = vmax.f32 %v2415, 0.0
        %v2424 = vmax.f32 %v2416, 0.0
        %v2425 = vmax.f32 %v2417, 0.0
        %v2426 = vmax.f32 %v2418, 0.0
        %v2427 = vmax.f32 %v2419, 0.0
        %v2428 = vmax.f32 %v2420, 0.0
        %v2429 = vmax.f32 %v2421, 0.0
        %v2430 = vmax.f32 %v2422, 0.0
        %v2432 = vsel %vm567, %v2429, 0
        %v2435 = vsel %vm567, %v2430, 0
        %2437 = vmatprep.subr.mxu0 %v2424
        %2438 = vmatpush1.msra.mxu0 %v2423
        %2439 = vmatprep.subr.mxu0 %v2426
        %2440 = vmatpush1.msra.mxu0 %v2425
        %2441 = vmatprep.subr.mxu0 %v2428
        %2442 = vmatpush1.msra.mxu0 %v2427
        %2443 = vmatprep.subr.mxu0 %v2435
        %2444 = vmatpush1.msra.mxu0 %v2432
        %2445 = vmatprep.subr.mxu0 0.0
        %2446 = vmatpush1.msra.mxu0 0.0
        %2447 = vmatprep.subr.mxu0 0.0
        %2448 = vmatpush1.msra.mxu0 0.0
        %2449 = vmatprep.subr.mxu0 0.0
        %2450 = vmatpush1.msra.mxu0 0.0
        %2451 = vmatprep.subr.mxu0 0.0
        %2452 = vmatpush1.msra.mxu0 0.0
        %2453 = vmatprep.subr.mxu0 0.0
        %2454 = vmatpush1.msra.mxu0 0.0
        %2455 = vmatprep.subr.mxu0 0.0
        %2456 = vmatpush1.msra.mxu0 0.0
        %2457 = vmatprep.subr.mxu0 0.0
        %2458 = vmatpush1.msra.mxu0 0.0
        %2459 = vmatprep.subr.mxu0 0.0
        %2460 = vmatpush1.msra.mxu0 0.0
        %2461 = vmatprep.subr.mxu0 0.0
        %2462 = vmatpush1.msra.mxu0 0.0
        %2463 = vmatprep.subr.mxu0 0.0
        %2464 = vmatpush1.msra.mxu0 0.0
        %2465 = vmatprep.subr.mxu0 0.0
        %2466 = vmatpush1.msra.mxu0 0.0
        %2467 = vmatprep.subr.mxu0 0.0
        %2468 = vmatpush1.msra.mxu0 0.0
        %2469 = vmatprep.subr.mxu0 0.0
        %2470 = vmatpush1.msra.mxu0 0.0
        %2471 = vmatprep.subr.mxu0 0.0
        %2472 = vmatpush1.msra.mxu0 0.0
        %2473 = vmatprep.subr.mxu0 0.0
        %2474 = vmatpush1.msra.mxu0 0.0
        %2475 = vmatprep.subr.mxu0 0.0
        %2476 = vmatpush1.msra.mxu0 0.0
        %2477 = vmatprep.subr.mxu0 0.0
        %2478 = vmatpush1.msra.mxu0 0.0
        %2479 = vmatprep.subr.mxu0 0.0
        %2480 = vmatpush1.msra.mxu0 0.0
        %2481 = vmatprep.subr.mxu0 0.0
        %2482 = vmatpush1.msra.mxu0 0.0
        %2483 = vmatprep.subr.mxu0 0.0
        %2484 = vmatpush1.msra.mxu0 0.0
        %2485 = vmatprep.subr.mxu0 0.0
        %2486 = vmatpush1.msra.mxu0 0.0
        %2487 = vmatprep.subr.mxu0 0.0
        %2488 = vmatpush1.msra.mxu0 0.0
        %2489 = vmatprep.subr.mxu0 0.0
        %2490 = vmatpush1.msra.mxu0 0.0
        %2491 = vmatprep.subr.mxu0 0.0
        %2492 = vmatpush1.msra.mxu0 0.0
        %2493 = vmatprep.subr.mxu0 0.0
        %2494 = vmatpush1.msra.mxu0 0.0
        %2495 = vmatprep.subr.mxu0 0.0
        %2496 = vmatpush1.msra.mxu0 0.0
        %2497 = vmatprep.subr.mxu0 0.0
        %2498 = vmatpush1.msra.mxu0 0.0
        %2499 = vmatprep.subr.mxu0 0.0
        %2500 = vmatpush1.msra.mxu0 0.0
        %2501 = vmatprep.mubr.f32.mxu0 0.0
        %2502 = vmatmul.mubr.f32.gmra.mrb[0].mxu0 %v920
        %v2503 = vpop.f32.mrb[0].mxu0
        %v2504 = vadd.f32 0.0, %v2503
        %v2505 = vpop.f32.mrb[0].mxu0
        %v2506 = vadd.f32 0.0, %v2505
        %2507 = vmatprep.mubr.f32.mxu0 0.0
        %2508 = vmatmul.mubr.f32.gmra.mrb[0].mxu0 %v923
        %v2509 = vpop.f32.mrb[0].mxu0
        %v2510 = vadd.f32 0.0, %v2509
        %v2511 = vpop.f32.mrb[0].mxu0
        %v2512 = vadd.f32 0.0, %v2511
        %2513 = vdwg.mxu0
        %v2514 = vadd.f32 %v2395, %v2504
        %v2515 = vadd.f32 %v2396, %v2506
        %v2516 = vadd.f32 %v2397, %v2510
        %v2517 = vadd.f32 %v2398, %v2512
        %v2518 = vsel %vm1017, %v2033, %v2042
        %v2519 = vsel %vm1017, %v2034, %v2043
        %v2520 = vsel %vm1017, %v2035, %v2044
        %v2521 = vsel %vm1017, %v2036, %v2045
        %v2522 = vsel %vm1017, %v2037, %v2046
        %v2523 = vsel %vm1017, %v2038, %v2047
        %v2524 = vsel %vm1017, %v2039, %v2048
        %v2525 = vsel %vm1017, %v2040, %v2049
        %v2526 = vmul.f32 %v1026, %v2518
        %v2527 = vmul.f32 %v1026, %v2519
        %v2528 = vmul.f32 %v1026, %v2520
        %v2529 = vmul.f32 %v1026, %v2521
        %v2530 = vmul.f32 %v1026, %v2522
        %v2531 = vmul.f32 %v1026, %v2523
        %v2532 = vmul.f32 %v1026, %v2524
        %v2533 = vmul.f32 %v1026, %v2525
        %v2534 = vadd.f32 %v2526, %v1035
        %v2535 = vadd.f32 %v2527, %v1035
        %v2536 = vadd.f32 %v2528, %v1035
        %v2537 = vadd.f32 %v2529, %v1035
        %v2538 = vadd.f32 %v2530, %v1035
        %v2539 = vadd.f32 %v2531, %v1035
        %v2540 = vadd.f32 %v2532, %v1035
        %v2541 = vadd.f32 %v2533, %v1035
        %v2542 = vmax.f32 %v2534, 0.0
        %v2543 = vmax.f32 %v2535, 0.0
        %v2544 = vmax.f32 %v2536, 0.0
        %v2545 = vmax.f32 %v2537, 0.0
        %v2546 = vmax.f32 %v2538, 0.0
        %v2547 = vmax.f32 %v2539, 0.0
        %v2548 = vmax.f32 %v2540, 0.0
        %v2549 = vmax.f32 %v2541, 0.0
        %v2551 = vsel %vm567, %v2548, 0
        %v2554 = vsel %vm567, %v2549, 0
        %2556 = vmatprep.subr.mxu0 %v2543
        %2557 = vmatpush1.msra.mxu0 %v2542
        %2558 = vmatprep.subr.mxu0 %v2545
        %2559 = vmatpush1.msra.mxu0 %v2544
        %2560 = vmatprep.subr.mxu0 %v2547
        %2561 = vmatpush1.msra.mxu0 %v2546
        %2562 = vmatprep.subr.mxu0 %v2554
        %2563 = vmatpush1.msra.mxu0 %v2551
        %2564 = vmatprep.subr.mxu0 0.0
        %2565 = vmatpush1.msra.mxu0 0.0
        %2566 = vmatprep.subr.mxu0 0.0
        %2567 = vmatpush1.msra.mxu0 0.0
        %2568 = vmatprep.subr.mxu0 0.0
        %2569 = vmatpush1.msra.mxu0 0.0
        %2570 = vmatprep.subr.mxu0 0.0
        %2571 = vmatpush1.msra.mxu0 0.0
        %2572 = vmatprep.subr.mxu0 0.0
        %2573 = vmatpush1.msra.mxu0 0.0
        %2574 = vmatprep.subr.mxu0 0.0
        %2575 = vmatpush1.msra.mxu0 0.0
        %2576 = vmatprep.subr.mxu0 0.0
        %2577 = vmatpush1.msra.mxu0 0.0
        %2578 = vmatprep.subr.mxu0 0.0
        %2579 = vmatpush1.msra.mxu0 0.0
        %2580 = vmatprep.subr.mxu0 0.0
        %2581 = vmatpush1.msra.mxu0 0.0
        %2582 = vmatprep.subr.mxu0 0.0
        %2583 = vmatpush1.msra.mxu0 0.0
        %2584 = vmatprep.subr.mxu0 0.0
        %2585 = vmatpush1.msra.mxu0 0.0
        %2586 = vmatprep.subr.mxu0 0.0
        %2587 = vmatpush1.msra.mxu0 0.0
        %2588 = vmatprep.subr.mxu0 0.0
        %2589 = vmatpush1.msra.mxu0 0.0
        %2590 = vmatprep.subr.mxu0 0.0
        %2591 = vmatpush1.msra.mxu0 0.0
        %2592 = vmatprep.subr.mxu0 0.0
        %2593 = vmatpush1.msra.mxu0 0.0
        %2594 = vmatprep.subr.mxu0 0.0
        %2595 = vmatpush1.msra.mxu0 0.0
        %2596 = vmatprep.subr.mxu0 0.0
        %2597 = vmatpush1.msra.mxu0 0.0
        %2598 = vmatprep.subr.mxu0 0.0
        %2599 = vmatpush1.msra.mxu0 0.0
        %2600 = vmatprep.subr.mxu0 0.0
        %2601 = vmatpush1.msra.mxu0 0.0
        %2602 = vmatprep.subr.mxu0 0.0
        %2603 = vmatpush1.msra.mxu0 0.0
        %2604 = vmatprep.subr.mxu0 0.0
        %2605 = vmatpush1.msra.mxu0 0.0
        %2606 = vmatprep.subr.mxu0 0.0
        %2607 = vmatpush1.msra.mxu0 0.0
        %2608 = vmatprep.subr.mxu0 0.0
        %2609 = vmatpush1.msra.mxu0 0.0
        %2610 = vmatprep.subr.mxu0 0.0
        %2611 = vmatpush1.msra.mxu0 0.0
        %2612 = vmatprep.subr.mxu0 0.0
        %2613 = vmatpush1.msra.mxu0 0.0
        %2614 = vmatprep.subr.mxu0 0.0
        %2615 = vmatpush1.msra.mxu0 0.0
        %2616 = vmatprep.subr.mxu0 0.0
        %2617 = vmatpush1.msra.mxu0 0.0
        %2618 = vmatprep.subr.mxu0 0.0
        %2619 = vmatpush1.msra.mxu0 0.0
        %2620 = vmatprep.mubr.f32.mxu0 0.0
        %2621 = vmatmul.mubr.f32.gmra.mrb[0].mxu0 %v1056
        %v2622 = vpop.f32.mrb[0].mxu0
        %v2623 = vadd.f32 0.0, %v2622
        %v2624 = vpop.f32.mrb[0].mxu0
        %v2625 = vadd.f32 0.0, %v2624
        %2626 = vmatprep.mubr.f32.mxu0 0.0
        %2627 = vmatmul.mubr.f32.gmra.mrb[0].mxu0 %v1059
        %v2628 = vpop.f32.mrb[0].mxu0
        %v2629 = vadd.f32 0.0, %v2628
        %v2630 = vpop.f32.mrb[0].mxu0
        %v2631 = vadd.f32 0.0, %v2630
        %2632 = vdwg.mxu0
        %v2633 = vadd.f32 %v2514, %v2623
        %v2634 = vadd.f32 %v2515, %v2625
        %v2635 = vadd.f32 %v2516, %v2629
        %v2636 = vadd.f32 %v2517, %v2631
        %v2637 = vsel %vm1153, %v2033, %v2042
        %v2638 = vsel %vm1153, %v2034, %v2043
        %v2639 = vsel %vm1153, %v2035, %v2044
        %v2640 = vsel %vm1153, %v2036, %v2045
        %v2641 = vsel %vm1153, %v2037, %v2046
        %v2642 = vsel %vm1153, %v2038, %v2047
        %v2643 = vsel %vm1153, %v2039, %v2048
        %v2644 = vsel %vm1153, %v2040, %v2049
        %v2645 = vmul.f32 %v1162, %v2637
        %v2646 = vmul.f32 %v1162, %v2638
        %v2647 = vmul.f32 %v1162, %v2639
        %v2648 = vmul.f32 %v1162, %v2640
        %v2649 = vmul.f32 %v1162, %v2641
        %v2650 = vmul.f32 %v1162, %v2642
        %v2651 = vmul.f32 %v1162, %v2643
        %v2652 = vmul.f32 %v1162, %v2644
        %v2653 = vadd.f32 %v2645, %v1171
        %v2654 = vadd.f32 %v2646, %v1171
        %v2655 = vadd.f32 %v2647, %v1171
        %v2656 = vadd.f32 %v2648, %v1171
        %v2657 = vadd.f32 %v2649, %v1171
        %v2658 = vadd.f32 %v2650, %v1171
        %v2659 = vadd.f32 %v2651, %v1171
        %v2660 = vadd.f32 %v2652, %v1171
        %v2661 = vmax.f32 %v2653, 0.0
        %v2662 = vmax.f32 %v2654, 0.0
        %v2663 = vmax.f32 %v2655, 0.0
        %v2664 = vmax.f32 %v2656, 0.0
        %v2665 = vmax.f32 %v2657, 0.0
        %v2666 = vmax.f32 %v2658, 0.0
        %v2667 = vmax.f32 %v2659, 0.0
        %v2668 = vmax.f32 %v2660, 0.0
        %v2670 = vsel %vm567, %v2667, 0
        %v2673 = vsel %vm567, %v2668, 0
        %2675 = vmatprep.subr.mxu0 %v2662
        %2676 = vmatpush1.msra.mxu0 %v2661
        %2677 = vmatprep.subr.mxu0 %v2664
        %2678 = vmatpush1.msra.mxu0 %v2663
        %2679 = vmatprep.subr.mxu0 %v2666
        %2680 = vmatpush1.msra.mxu0 %v2665
        %2681 = vmatprep.subr.mxu0 %v2673
        %2682 = vmatpush1.msra.mxu0 %v2670
        %2683 = vmatprep.subr.mxu0 0.0
        %2684 = vmatpush1.msra.mxu0 0.0
        %2685 = vmatprep.subr.mxu0 0.0
        %2686 = vmatpush1.msra.mxu0 0.0
        %2687 = vmatprep.subr.mxu0 0.0
        %2688 = vmatpush1.msra.mxu0 0.0
        %2689 = vmatprep.subr.mxu0 0.0
        %2690 = vmatpush1.msra.mxu0 0.0
        %2691 = vmatprep.subr.mxu0 0.0
        %2692 = vmatpush1.msra.mxu0 0.0
        %2693 = vmatprep.subr.mxu0 0.0
        %2694 = vmatpush1.msra.mxu0 0.0
        %2695 = vmatprep.subr.mxu0 0.0
        %2696 = vmatpush1.msra.mxu0 0.0
        %2697 = vmatprep.subr.mxu0 0.0
        %2698 = vmatpush1.msra.mxu0 0.0
        %2699 = vmatprep.subr.mxu0 0.0
        %2700 = vmatpush1.msra.mxu0 0.0
        %2701 = vmatprep.subr.mxu0 0.0
        %2702 = vmatpush1.msra.mxu0 0.0
        %2703 = vmatprep.subr.mxu0 0.0
        %2704 = vmatpush1.msra.mxu0 0.0
        %2705 = vmatprep.subr.mxu0 0.0
        %2706 = vmatpush1.msra.mxu0 0.0
        %2707 = vmatprep.subr.mxu0 0.0
        %2708 = vmatpush1.msra.mxu0 0.0
        %2709 = vmatprep.subr.mxu0 0.0
        %2710 = vmatpush1.msra.mxu0 0.0
        %2711 = vmatprep.subr.mxu0 0.0
        %2712 = vmatpush1.msra.mxu0 0.0
        %2713 = vmatprep.subr.mxu0 0.0
        %2714 = vmatpush1.msra.mxu0 0.0
        %2715 = vmatprep.subr.mxu0 0.0
        %2716 = vmatpush1.msra.mxu0 0.0
        %2717 = vmatprep.subr.mxu0 0.0
        %2718 = vmatpush1.msra.mxu0 0.0
        %2719 = vmatprep.subr.mxu0 0.0
        %2720 = vmatpush1.msra.mxu0 0.0
        %2721 = vmatprep.subr.mxu0 0.0
        %2722 = vmatpush1.msra.mxu0 0.0
        %2723 = vmatprep.subr.mxu0 0.0
        %2724 = vmatpush1.msra.mxu0 0.0
        %2725 = vmatprep.subr.mxu0 0.0
        %2726 = vmatpush1.msra.mxu0 0.0
        %2727 = vmatprep.subr.mxu0 0.0
        %2728 = vmatpush1.msra.mxu0 0.0
        %2729 = vmatprep.subr.mxu0 0.0
        %2730 = vmatpush1.msra.mxu0 0.0
        %2731 = vmatprep.subr.mxu0 0.0
        %2732 = vmatpush1.msra.mxu0 0.0
        %2733 = vmatprep.subr.mxu0 0.0
        %2734 = vmatpush1.msra.mxu0 0.0
        %2735 = vmatprep.subr.mxu0 0.0
        %2736 = vmatpush1.msra.mxu0 0.0
        %2737 = vmatprep.subr.mxu0 0.0
        %2738 = vmatpush1.msra.mxu0 0.0
        %2739 = vmatprep.mubr.f32.mxu0 0.0
        %2740 = vmatmul.mubr.f32.gmra.mrb[0].mxu0 %v1192
        %v2741 = vpop.f32.mrb[0].mxu0
        %v2742 = vadd.f32 0.0, %v2741
        %v2743 = vpop.f32.mrb[0].mxu0
        %v2744 = vadd.f32 0.0, %v2743
        %2745 = vmatprep.mubr.f32.mxu0 0.0
        %2746 = vmatmul.mubr.f32.gmra.mrb[0].mxu0 %v1195
        %v2747 = vpop.f32.mrb[0].mxu0
        %v2748 = vadd.f32 0.0, %v2747
        %v2749 = vpop.f32.mrb[0].mxu0
        %v2750 = vadd.f32 0.0, %v2749
        %2751 = vdwg.mxu0
        %v2752 = vadd.f32 %v2633, %v2742
        %v2753 = vadd.f32 %v2634, %v2744
        %v2754 = vadd.f32 %v2635, %v2748
        %v2755 = vadd.f32 %v2636, %v2750
        %v2756 = vadd.f32 %v2752, %v1289
        %v2757 = vadd.f32 %v2753, %v1289
        %v2758 = vadd.f32 %v2754, %v1294
        %v2759 = vadd.f32 %v2755, %v1294
        %v2760 = vmax.f32 %v2028, %v2756
        %v2761 = vmax.f32 %v2029, %v2757
        %v2762 = vmax.f32 %v2030, %v2758
        %v2763 = vmax.f32 %v2031, %v2759
        %s2764 = scalar_lea.vmem %s453, 192
        %v2765 = vld [vmem:[%s2764] sm:$0xff]
        %v2766 = vld [vmem:[%s2764 + $0x8] sm:$0xff]
        %v2767 = vld [vmem:[%s2764 + $0x10] sm:$0xff]
        %v2768 = vld [vmem:[%s2764 + $0x18] sm:$0xff]
        %v2769 = vld [vmem:[%s2764 + $0x20] sm:$0xff]
        %v2770 = vld [vmem:[%s2764 + $0x28] sm:$0xff]
        %v2771 = vld [vmem:[%s2764 + $0x30] sm:$0x1]
        %v2772 = vld [vmem:[%s2764 + $0x38] sm:$0x1]
        %s2773 = scalar_lea.vmem %s458, 192
        %v2774 = vld [vmem:[%s2773] sm:$0xff]
        %v2775 = vld [vmem:[%s2773 + $0x8] sm:$0xff]
        %v2776 = vld [vmem:[%s2773 + $0x10] sm:$0xff]
        %v2777 = vld [vmem:[%s2773 + $0x18] sm:$0xff]
        %v2778 = vld [vmem:[%s2773 + $0x20] sm:$0xff]
        %v2779 = vld [vmem:[%s2773 + $0x28] sm:$0xff]
        %v2780 = vld [vmem:[%s2773 + $0x30] sm:$0x1]
        %v2781 = vld [vmem:[%s2773 + $0x38] sm:$0x1]
        %v2782 = vsel %vm480, %v2765, %v2774
        %v2783 = vsel %vm480, %v2766, %v2775
        %v2784 = vsel %vm480, %v2767, %v2776
        %v2785 = vsel %vm480, %v2768, %v2777
        %v2786 = vsel %vm480, %v2769, %v2778
        %v2787 = vsel %vm480, %v2770, %v2779
        %v2788 = vsel %vm480, %v2771, %v2780
        %v2789 = vsel %vm480, %v2772, %v2781
        %v2790 = vmul.f32 %v489, %v2782
        %v2791 = vmul.f32 %v489, %v2783
        %v2792 = vmul.f32 %v489, %v2784
        %v2793 = vmul.f32 %v489, %v2785
        %v2794 = vmul.f32 %v489, %v2786
        %v2795 = vmul.f32 %v489, %v2787
        %v2796 = vmul.f32 %v489, %v2788
        %v2797 = vmul.f32 %v489, %v2789
        %v2798 = vadd.f32 %v2790, %v498
        %v2799 = vadd.f32 %v2791, %v498
        %v2800 = vadd.f32 %v2792, %v498
        %v2801 = vadd.f32 %v2793, %v498
        %v2802 = vadd.f32 %v2794, %v498
        %v2803 = vadd.f32 %v2795, %v498
        %v2804 = vadd.f32 %v2796, %v498
        %v2805 = vadd.f32 %v2797, %v498
        %v2806 = vmax.f32 %v2798, 0.0
        %v2807 = vmax.f32 %v2799, 0.0
        %v2808 = vmax.f32 %v2800, 0.0
        %v2809 = vmax.f32 %v2801, 0.0
        %v2810 = vmax.f32 %v2802, 0.0
        %v2811 = vmax.f32 %v2803, 0.0
        %v2812 = vmax.f32 %v2804, 0.0
        %v2813 = vmax.f32 %v2805, 0.0
        %v2814 = vsel %vm522, %v2765, %v2774
        %v2815 = vsel %vm522, %v2766, %v2775
        %v2816 = vsel %vm522, %v2767, %v2776
        %v2817 = vsel %vm522, %v2768, %v2777
        %v2818 = vsel %vm522, %v2769, %v2778
        %v2819 = vsel %vm522, %v2770, %v2779
        %v2820 = vsel %vm522, %v2771, %v2780
        %v2821 = vsel %vm522, %v2772, %v2781
        %v2822 = vmul.f32 %v531, %v2814
        %v2823 = vmul.f32 %v531, %v2815
        %v2824 = vmul.f32 %v531, %v2816
        %v2825 = vmul.f32 %v531, %v2817
        %v2826 = vmul.f32 %v531, %v2818
        %v2827 = vmul.f32 %v531, %v2819
        %v2828 = vmul.f32 %v531, %v2820
        %v2829 = vmul.f32 %v531, %v2821
        %v2830 = vadd.f32 %v2822, %v540
        %v2831 = vadd.f32 %v2823, %v540
        %v2832 = vadd.f32 %v2824, %v540
        %v2833 = vadd.f32 %v2825, %v540
        %v2834 = vadd.f32 %v2826, %v540
        %v2835 = vadd.f32 %v2827, %v540
        %v2836 = vadd.f32 %v2828, %v540
        %v2837 = vadd.f32 %v2829, %v540
        %v2838 = vmax.f32 %v2830, 0.0
        %v2839 = vmax.f32 %v2831, 0.0
        %v2840 = vmax.f32 %v2832, 0.0
        %v2841 = vmax.f32 %v2833, 0.0
        %v2842 = vmax.f32 %v2834, 0.0
        %v2843 = vmax.f32 %v2835, 0.0
        %v2844 = vmax.f32 %v2836, 0.0
        %v2845 = vmax.f32 %v2837, 0.0
        %v2847 = vsel %vm567, %v2844, 0
        %v2850 = vsel %vm567, %v2845, 0
        %2852 = vmatprep.subr.mxu0 %v2839
        %2853 = vmatpush1.msra.mxu0 %v2838
        %2854 = vmatprep.subr.mxu0 %v2841
        %2855 = vmatpush1.msra.mxu0 %v2840
        %2856 = vmatprep.subr.mxu0 %v2843
        %2857 = vmatpush1.msra.mxu0 %v2842
        %2858 = vmatprep.subr.mxu0 %v2850
        %2859 = vmatpush1.msra.mxu0 %v2847
        %2860 = vmatprep.subr.mxu0 0.0
        %2861 = vmatpush1.msra.mxu0 0.0
        %2862 = vmatprep.subr.mxu0 0.0
        %2863 = vmatpush1.msra.mxu0 0.0
        %2864 = vmatprep.subr.mxu0 0.0
        %2865 = vmatpush1.msra.mxu0 0.0
        %2866 = vmatprep.subr.mxu0 0.0
        %2867 = vmatpush1.msra.mxu0 0.0
        %2868 = vmatprep.subr.mxu0 0.0
        %2869 = vmatpush1.msra.mxu0 0.0
        %2870 = vmatprep.subr.mxu0 0.0
        %2871 = vmatpush1.msra.mxu0 0.0
        %2872 = vmatprep.subr.mxu0 0.0
        %2873 = vmatpush1.msra.mxu0 0.0
        %2874 = vmatprep.subr.mxu0 0.0
        %2875 = vmatpush1.msra.mxu0 0.0
        %2876 = vmatprep.subr.mxu0 0.0
        %2877 = vmatpush1.msra.mxu0 0.0
        %2878 = vmatprep.subr.mxu0 0.0
        %2879 = vmatpush1.msra.mxu0 0.0
        %2880 = vmatprep.subr.mxu0 0.0
        %2881 = vmatpush1.msra.mxu0 0.0
        %2882 = vmatprep.subr.mxu0 0.0
        %2883 = vmatpush1.msra.mxu0 0.0
        %2884 = vmatprep.subr.mxu0 0.0
        %2885 = vmatpush1.msra.mxu0 0.0
        %2886 = vmatprep.subr.mxu0 0.0
        %2887 = vmatpush1.msra.mxu0 0.0
        %2888 = vmatprep.subr.mxu0 0.0
        %2889 = vmatpush1.msra.mxu0 0.0
        %2890 = vmatprep.subr.mxu0 0.0
        %2891 = vmatpush1.msra.mxu0 0.0
        %2892 = vmatprep.subr.mxu0 0.0
        %2893 = vmatpush1.msra.mxu0 0.0
        %2894 = vmatprep.subr.mxu0 0.0
        %2895 = vmatpush1.msra.mxu0 0.0
        %2896 = vmatprep.subr.mxu0 0.0
        %2897 = vmatpush1.msra.mxu0 0.0
        %2898 = vmatprep.subr.mxu0 0.0
        %2899 = vmatpush1.msra.mxu0 0.0
        %2900 = vmatprep.subr.mxu0 0.0
        %2901 = vmatpush1.msra.mxu0 0.0
        %2902 = vmatprep.subr.mxu0 0.0
        %2903 = vmatpush1.msra.mxu0 0.0
        %2904 = vmatprep.subr.mxu0 0.0
        %2905 = vmatpush1.msra.mxu0 0.0
        %2906 = vmatprep.subr.mxu0 0.0
        %2907 = vmatpush1.msra.mxu0 0.0
        %2908 = vmatprep.subr.mxu0 0.0
        %2909 = vmatpush1.msra.mxu0 0.0
        %2910 = vmatprep.subr.mxu0 0.0
        %2911 = vmatpush1.msra.mxu0 0.0
        %2912 = vmatprep.subr.mxu0 0.0
        %2913 = vmatpush1.msra.mxu0 0.0
        %2914 = vmatprep.subr.mxu0 0.0
        %2915 = vmatpush1.msra.mxu0 0.0
        %2916 = vmatprep.mubr.f32.mxu0 0.0
        %2917 = vmatmul.mubr.f32.gmra.mrb[0].mxu0 %v562
        %v2918 = vpop.f32.mrb[0].mxu0
        %v2919 = vadd.f32 0.0, %v2918
        %v2920 = vpop.f32.mrb[0].mxu0
        %v2921 = vadd.f32 0.0, %v2920
        %2922 = vmatprep.mubr.f32.mxu0 0.0
        %2923 = vmatmul.mubr.f32.gmra.mrb[0].mxu0 %v565
        %v2924 = vpop.f32.mrb[0].mxu0
        %v2925 = vadd.f32 0.0, %v2924
        %v2926 = vpop.f32.mrb[0].mxu0
        %v2927 = vadd.f32 0.0, %v2926
        %2928 = vdwg.mxu0
        %v2930 = vsel %vm567, %v2812, 0
        %v2933 = vsel %vm567, %v2813, 0
        %2935 = vmatprep.subr.mxu0 %v2807
        %2936 = vmatpush1.msra.mxu0 %v2806
        %2937 = vmatprep.subr.mxu0 %v2809
        %2938 = vmatpush1.msra.mxu0 %v2808
        %2939 = vmatprep.subr.mxu0 %v2811
        %2940 = vmatpush1.msra.mxu0 %v2810
        %2941 = vmatprep.subr.mxu0 %v2933
        %2942 = vmatpush1.msra.mxu0 %v2930
        %2943 = vmatprep.subr.mxu0 0.0
        %2944 = vmatpush1.msra.mxu0 0.0
        %2945 = vmatprep.subr.mxu0 0.0
        %2946 = vmatpush1.msra.mxu0 0.0
        %2947 = vmatprep.subr.mxu0 0.0
        %2948 = vmatpush1.msra.mxu0 0.0
        %2949 = vmatprep.subr.mxu0 0.0
        %2950 = vmatpush1.msra.mxu0 0.0
        %2951 = vmatprep.subr.mxu0 0.0
        %2952 = vmatpush1.msra.mxu0 0.0
        %2953 = vmatprep.subr.mxu0 0.0
        %2954 = vmatpush1.msra.mxu0 0.0
        %2955 = vmatprep.subr.mxu0 0.0
        %2956 = vmatpush1.msra.mxu0 0.0
        %2957 = vmatprep.subr.mxu0 0.0
        %2958 = vmatpush1.msra.mxu0 0.0
        %2959 = vmatprep.subr.mxu0 0.0
        %2960 = vmatpush1.msra.mxu0 0.0
        %2961 = vmatprep.subr.mxu0 0.0
        %2962 = vmatpush1.msra.mxu0 0.0
        %2963 = vmatprep.subr.mxu0 0.0
        %2964 = vmatpush1.msra.mxu0 0.0
        %2965 = vmatprep.subr.mxu0 0.0
        %2966 = vmatpush1.msra.mxu0 0.0
        %2967 = vmatprep.subr.mxu0 0.0
        %2968 = vmatpush1.msra.mxu0 0.0
        %2969 = vmatprep.subr.mxu0 0.0
        %2970 = vmatpush1.msra.mxu0 0.0
        %2971 = vmatprep.subr.mxu0 0.0
        %2972 = vmatpush1.msra.mxu0 0.0
        %2973 = vmatprep.subr.mxu0 0.0
        %2974 = vmatpush1.msra.mxu0 0.0
        %2975 = vmatprep.subr.mxu0 0.0
        %2976 = vmatpush1.msra.mxu0 0.0
        %2977 = vmatprep.subr.mxu0 0.0
        %2978 = vmatpush1.msra.mxu0 0.0
        %2979 = vmatprep.subr.mxu0 0.0
        %2980 = vmatpush1.msra.mxu0 0.0
        %2981 = vmatprep.subr.mxu0 0.0
        %2982 = vmatpush1.msra.mxu0 0.0
        %2983 = vmatprep.subr.mxu0 0.0
        %2984 = vmatpush1.msra.mxu0 0.0
        %2985 = vmatprep.subr.mxu0 0.0
        %2986 = vmatpush1.msra.mxu0 0.0
        %2987 = vmatprep.subr.mxu0 0.0
        %2988 = vmatpush1.msra.mxu0 0.0
        %2989 = vmatprep.subr.mxu0 0.0
        %2990 = vmatpush1.msra.mxu0 0.0
        %2991 = vmatprep.subr.mxu0 0.0
        %2992 = vmatpush1.msra.mxu0 0.0
        %2993 = vmatprep.subr.mxu0 0.0
        %2994 = vmatpush1.msra.mxu0 0.0
        %2995 = vmatprep.subr.mxu0 0.0
        %2996 = vmatpush1.msra.mxu0 0.0
        %2997 = vmatprep.subr.mxu0 0.0
        %2998 = vmatpush1.msra.mxu0 0.0
        %2999 = vmatprep.mubr.f32.mxu0 0.0
        %3000 = vmatmul.mubr.f32.gmra.mrb[0].mxu0 %v652
        %v3001 = vpop.f32.mrb[0].mxu0
        %v3002 = vadd.f32 %v2919, %v3001
        %v3003 = vpop.f32.mrb[0].mxu0
        %v3004 = vadd.f32 %v2921, %v3003
        %3005 = vmatprep.mubr.f32.mxu0 0.0
        %3006 = vmatmul.mubr.f32.gmra.mrb[0].mxu0 %v655
        %v3007 = vpop.f32.mrb[0].mxu0
        %v3008 = vadd.f32 %v2925, %v3007
        %v3009 = vpop.f32.mrb[0].mxu0
        %v3010 = vadd.f32 %v2927, %v3009
        %3011 = vdwg.mxu0
        %v3012 = vsel %vm745, %v2765, %v2774
        %v3013 = vsel %vm745, %v2766, %v2775
        %v3014 = vsel %vm745, %v2767, %v2776
        %v3015 = vsel %vm745, %v2768, %v2777
        %v3016 = vsel %vm745, %v2769, %v2778
        %v3017 = vsel %vm745, %v2770, %v2779
        %v3018 = vsel %vm745, %v2771, %v2780
        %v3019 = vsel %vm745, %v2772, %v2781
        %v3020 = vmul.f32 %v754, %v3012
        %v3021 = vmul.f32 %v754, %v3013
        %v3022 = vmul.f32 %v754, %v3014
        %v3023 = vmul.f32 %v754, %v3015
        %v3024 = vmul.f32 %v754, %v3016
        %v3025 = vmul.f32 %v754, %v3017
        %v3026 = vmul.f32 %v754, %v3018
        %v3027 = vmul.f32 %v754, %v3019
        %v3028 = vadd.f32 %v3020, %v763
        %v3029 = vadd.f32 %v3021, %v763
        %v3030 = vadd.f32 %v3022, %v763
        %v3031 = vadd.f32 %v3023, %v763
        %v3032 = vadd.f32 %v3024, %v763
        %v3033 = vadd.f32 %v3025, %v763
        %v3034 = vadd.f32 %v3026, %v763
        %v3035 = vadd.f32 %v3027, %v763
        %v3036 = vmax.f32 %v3028, 0.0
        %v3037 = vmax.f32 %v3029, 0.0
        %v3038 = vmax.f32 %v3030, 0.0
        %v3039 = vmax.f32 %v3031, 0.0
        %v3040 = vmax.f32 %v3032, 0.0
        %v3041 = vmax.f32 %v3033, 0.0
        %v3042 = vmax.f32 %v3034, 0.0
        %v3043 = vmax.f32 %v3035, 0.0
        %v3045 = vsel %vm567, %v3042, 0
        %v3048 = vsel %vm567, %v3043, 0
        %3050 = vmatprep.subr.mxu0 %v3037
        %3051 = vmatpush1.msra.mxu0 %v3036
        %3052 = vmatprep.subr.mxu0 %v3039
        %3053 = vmatpush1.msra.mxu0 %v3038
        %3054 = vmatprep.subr.mxu0 %v3041
        %3055 = vmatpush1.msra.mxu0 %v3040
        %3056 = vmatprep.subr.mxu0 %v3048
        %3057 = vmatpush1.msra.mxu0 %v3045
        %3058 = vmatprep.subr.mxu0 0.0
        %3059 = vmatpush1.msra.mxu0 0.0
        %3060 = vmatprep.subr.mxu0 0.0
        %3061 = vmatpush1.msra.mxu0 0.0
        %3062 = vmatprep.subr.mxu0 0.0
        %3063 = vmatpush1.msra.mxu0 0.0
        %3064 = vmatprep.subr.mxu0 0.0
        %3065 = vmatpush1.msra.mxu0 0.0
        %3066 = vmatprep.subr.mxu0 0.0
        %3067 = vmatpush1.msra.mxu0 0.0
        %3068 = vmatprep.subr.mxu0 0.0
        %3069 = vmatpush1.msra.mxu0 0.0
        %3070 = vmatprep.subr.mxu0 0.0
        %3071 = vmatpush1.msra.mxu0 0.0
        %3072 = vmatprep.subr.mxu0 0.0
        %3073 = vmatpush1.msra.mxu0 0.0
        %3074 = vmatprep.subr.mxu0 0.0
        %3075 = vmatpush1.msra.mxu0 0.0
        %3076 = vmatprep.subr.mxu0 0.0
        %3077 = vmatpush1.msra.mxu0 0.0
        %3078 = vmatprep.subr.mxu0 0.0
        %3079 = vmatpush1.msra.mxu0 0.0
        %3080 = vmatprep.subr.mxu0 0.0
        %3081 = vmatpush1.msra.mxu0 0.0
        %3082 = vmatprep.subr.mxu0 0.0
        %3083 = vmatpush1.msra.mxu0 0.0
        %3084 = vmatprep.subr.mxu0 0.0
        %3085 = vmatpush1.msra.mxu0 0.0
        %3086 = vmatprep.subr.mxu0 0.0
        %3087 = vmatpush1.msra.mxu0 0.0
        %3088 = vmatprep.subr.mxu0 0.0
        %3089 = vmatpush1.msra.mxu0 0.0
        %3090 = vmatprep.subr.mxu0 0.0
        %3091 = vmatpush1.msra.mxu0 0.0
        %3092 = vmatprep.subr.mxu0 0.0
        %3093 = vmatpush1.msra.mxu0 0.0
        %3094 = vmatprep.subr.mxu0 0.0
        %3095 = vmatpush1.msra.mxu0 0.0
        %3096 = vmatprep.subr.mxu0 0.0
        %3097 = vmatpush1.msra.mxu0 0.0
        %3098 = vmatprep.subr.mxu0 0.0
        %3099 = vmatpush1.msra.mxu0 0.0
        %3100 = vmatprep.subr.mxu0 0.0
        %3101 = vmatpush1.msra.mxu0 0.0
        %3102 = vmatprep.subr.mxu0 0.0
        %3103 = vmatpush1.msra.mxu0 0.0
        %3104 = vmatprep.subr.mxu0 0.0
        %3105 = vmatpush1.msra.mxu0 0.0
        %3106 = vmatprep.subr.mxu0 0.0
        %3107 = vmatpush1.msra.mxu0 0.0
        %3108 = vmatprep.subr.mxu0 0.0
        %3109 = vmatpush1.msra.mxu0 0.0
        %3110 = vmatprep.subr.mxu0 0.0
        %3111 = vmatpush1.msra.mxu0 0.0
        %3112 = vmatprep.subr.mxu0 0.0
        %3113 = vmatpush1.msra.mxu0 0.0
        %3114 = vmatprep.mubr.f32.mxu0 0.0
        %3115 = vmatmul.mubr.f32.gmra.mrb[0].mxu0 %v784
        %v3116 = vpop.f32.mrb[0].mxu0
        %v3117 = vadd.f32 0.0, %v3116
        %v3118 = vpop.f32.mrb[0].mxu0
        %v3119 = vadd.f32 0.0, %v3118
        %3120 = vmatprep.mubr.f32.mxu0 0.0
        %3121 = vmatmul.mubr.f32.gmra.mrb[0].mxu0 %v787
        %v3122 = vpop.f32.mrb[0].mxu0
        %v3123 = vadd.f32 0.0, %v3122
        %v3124 = vpop.f32.mrb[0].mxu0
        %v3125 = vadd.f32 0.0, %v3124
        %3126 = vdwg.mxu0
        %v3127 = vadd.f32 %v3002, %v3117
        %v3128 = vadd.f32 %v3004, %v3119
        %v3129 = vadd.f32 %v3008, %v3123
        %v3130 = vadd.f32 %v3010, %v3125
        %v3131 = vsel %vm881, %v2765, %v2774
        %v3132 = vsel %vm881, %v2766, %v2775
        %v3133 = vsel %vm881, %v2767, %v2776
        %v3134 = vsel %vm881, %v2768, %v2777
        %v3135 = vsel %vm881, %v2769, %v2778
        %v3136 = vsel %vm881, %v2770, %v2779
        %v3137 = vsel %vm881, %v2771, %v2780
        %v3138 = vsel %vm881, %v2772, %v2781
        %v3139 = vmul.f32 %v890, %v3131
        %v3140 = vmul.f32 %v890, %v3132
        %v3141 = vmul.f32 %v890, %v3133
        %v3142 = vmul.f32 %v890, %v3134
        %v3143 = vmul.f32 %v890, %v3135
        %v3144 = vmul.f32 %v890, %v3136
        %v3145 = vmul.f32 %v890, %v3137
        %v3146 = vmul.f32 %v890, %v3138
        %v3147 = vadd.f32 %v3139, %v899
        %v3148 = vadd.f32 %v3140, %v899
        %v3149 = vadd.f32 %v3141, %v899
        %v3150 = vadd.f32 %v3142, %v899
        %v3151 = vadd.f32 %v3143, %v899
        %v3152 = vadd.f32 %v3144, %v899
        %v3153 = vadd.f32 %v3145, %v899
        %v3154 = vadd.f32 %v3146, %v899
        %v3155 = vmax.f32 %v3147, 0.0
        %v3156 = vmax.f32 %v3148, 0.0
        %v3157 = vmax.f32 %v3149, 0.0
        %v3158 = vmax.f32 %v3150, 0.0
        %v3159 = vmax.f32 %v3151, 0.0
        %v3160 = vmax.f32 %v3152, 0.0
        %v3161 = vmax.f32 %v3153, 0.0
        %v3162 = vmax.f32 %v3154, 0.0
        %v3164 = vsel %vm567, %v3161, 0
        %v3167 = vsel %vm567, %v3162, 0
        %3169 = vmatprep.subr.mxu0 %v3156
        %3170 = vmatpush1.msra.mxu0 %v3155
        %3171 = vmatprep.subr.mxu0 %v3158
        %3172 = vmatpush1.msra.mxu0 %v3157
        %3173 = vmatprep.subr.mxu0 %v3160
        %3174 = vmatpush1.msra.mxu0 %v3159
        %3175 = vmatprep.subr.mxu0 %v3167
        %3176 = vmatpush1.msra.mxu0 %v3164
        %3177 = vmatprep.subr.mxu0 0.0
        %3178 = vmatpush1.msra.mxu0 0.0
        %3179 = vmatprep.subr.mxu0 0.0
        %3180 = vmatpush1.msra.mxu0 0.0
        %3181 = vmatprep.subr.mxu0 0.0
        %3182 = vmatpush1.msra.mxu0 0.0
        %3183 = vmatprep.subr.mxu0 0.0
        %3184 = vmatpush1.msra.mxu0 0.0
        %3185 = vmatprep.subr.mxu0 0.0
        %3186 = vmatpush1.msra.mxu0 0.0
        %3187 = vmatprep.subr.mxu0 0.0
        %3188 = vmatpush1.msra.mxu0 0.0
        %3189 = vmatprep.subr.mxu0 0.0
        %3190 = vmatpush1.msra.mxu0 0.0
        %3191 = vmatprep.subr.mxu0 0.0
        %3192 = vmatpush1.msra.mxu0 0.0
        %3193 = vmatprep.subr.mxu0 0.0
        %3194 = vmatpush1.msra.mxu0 0.0
        %3195 = vmatprep.subr.mxu0 0.0
        %3196 = vmatpush1.msra.mxu0 0.0
        %3197 = vmatprep.subr.mxu0 0.0
        %3198 = vmatpush1.msra.mxu0 0.0
        %3199 = vmatprep.subr.mxu0 0.0
        %3200 = vmatpush1.msra.mxu0 0.0
        %3201 = vmatprep.subr.mxu0 0.0
        %3202 = vmatpush1.msra.mxu0 0.0
        %3203 = vmatprep.subr.mxu0 0.0
        %3204 = vmatpush1.msra.mxu0 0.0
        %3205 = vmatprep.subr.mxu0 0.0
        %3206 = vmatpush1.msra.mxu0 0.0
        %3207 = vmatprep.subr.mxu0 0.0
        %3208 = vmatpush1.msra.mxu0 0.0
        %3209 = vmatprep.subr.mxu0 0.0
        %3210 = vmatpush1.msra.mxu0 0.0
        %3211 = vmatprep.subr.mxu0 0.0
        %3212 = vmatpush1.msra.mxu0 0.0
        %3213 = vmatprep.subr.mxu0 0.0
        %3214 = vmatpush1.msra.mxu0 0.0
        %3215 = vmatprep.subr.mxu0 0.0
        %3216 = vmatpush1.msra.mxu0 0.0
        %3217 = vmatprep.subr.mxu0 0.0
        %3218 = vmatpush1.msra.mxu0 0.0
        %3219 = vmatprep.subr.mxu0 0.0
        %3220 = vmatpush1.msra.mxu0 0.0
        %3221 = vmatprep.subr.mxu0 0.0
        %3222 = vmatpush1.msra.mxu0 0.0
        %3223 = vmatprep.subr.mxu0 0.0
        %3224 = vmatpush1.msra.mxu0 0.0
        %3225 = vmatprep.subr.mxu0 0.0
        %3226 = vmatpush1.msra.mxu0 0.0
        %3227 = vmatprep.subr.mxu0 0.0
        %3228 = vmatpush1.msra.mxu0 0.0
        %3229 = vmatprep.subr.mxu0 0.0
        %3230 = vmatpush1.msra.mxu0 0.0
        %3231 = vmatprep.subr.mxu0 0.0
        %3232 = vmatpush1.msra.mxu0 0.0
        %3233 = vmatprep.mubr.f32.mxu0 0.0
        %3234 = vmatmul.mubr.f32.gmra.mrb[0].mxu0 %v920
        %v3235 = vpop.f32.mrb[0].mxu0
        %v3236 = vadd.f32 0.0, %v3235
        %v3237 = vpop.f32.mrb[0].mxu0
        %v3238 = vadd.f32 0.0, %v3237
        %3239 = vmatprep.mubr.f32.mxu0 0.0
        %3240 = vmatmul.mubr.f32.gmra.mrb[0].mxu0 %v923
        %v3241 = vpop.f32.mrb[0].mxu0
        %v3242 = vadd.f32 0.0, %v3241
        %v3243 = vpop.f32.mrb[0].mxu0
        %v3244 = vadd.f32 0.0, %v3243
        %3245 = vdwg.mxu0
        %v3246 = vadd.f32 %v3127, %v3236
        %v3247 = vadd.f32 %v3128, %v3238
        %v3248 = vadd.f32 %v3129, %v3242
        %v3249 = vadd.f32 %v3130, %v3244
        %v3250 = vsel %vm1017, %v2765, %v2774
        %v3251 = vsel %vm1017, %v2766, %v2775
        %v3252 = vsel %vm1017, %v2767, %v2776
        %v3253 = vsel %vm1017, %v2768, %v2777
        %v3254 = vsel %vm1017, %v2769, %v2778
        %v3255 = vsel %vm1017, %v2770, %v2779
        %v3256 = vsel %vm1017, %v2771, %v2780
        %v3257 = vsel %vm1017, %v2772, %v2781
        %v3258 = vmul.f32 %v1026, %v3250
        %v3259 = vmul.f32 %v1026, %v3251
        %v3260 = vmul.f32 %v1026, %v3252
        %v3261 = vmul.f32 %v1026, %v3253
        %v3262 = vmul.f32 %v1026, %v3254
        %v3263 = vmul.f32 %v1026, %v3255
        %v3264 = vmul.f32 %v1026, %v3256
        %v3265 = vmul.f32 %v1026, %v3257
        %v3266 = vadd.f32 %v3258, %v1035
        %v3267 = vadd.f32 %v3259, %v1035
        %v3268 = vadd.f32 %v3260, %v1035
        %v3269 = vadd.f32 %v3261, %v1035
        %v3270 = vadd.f32 %v3262, %v1035
        %v3271 = vadd.f32 %v3263, %v1035
        %v3272 = vadd.f32 %v3264, %v1035
        %v3273 = vadd.f32 %v3265, %v1035
        %v3274 = vmax.f32 %v3266, 0.0
        %v3275 = vmax.f32 %v3267, 0.0
        %v3276 = vmax.f32 %v3268, 0.0
        %v3277 = vmax.f32 %v3269, 0.0
        %v3278 = vmax.f32 %v3270, 0.0
        %v3279 = vmax.f32 %v3271, 0.0
        %v3280 = vmax.f32 %v3272, 0.0
        %v3281 = vmax.f32 %v3273, 0.0
        %v3283 = vsel %vm567, %v3280, 0
        %v3286 = vsel %vm567, %v3281, 0
        %3288 = vmatprep.subr.mxu0 %v3275
        %3289 = vmatpush1.msra.mxu0 %v3274
        %3290 = vmatprep.subr.mxu0 %v3277
        %3291 = vmatpush1.msra.mxu0 %v3276
        %3292 = vmatprep.subr.mxu0 %v3279
        %3293 = vmatpush1.msra.mxu0 %v3278
        %3294 = vmatprep.subr.mxu0 %v3286
        %3295 = vmatpush1.msra.mxu0 %v3283
        %3296 = vmatprep.subr.mxu0 0.0
        %3297 = vmatpush1.msra.mxu0 0.0
        %3298 = vmatprep.subr.mxu0 0.0
        %3299 = vmatpush1.msra.mxu0 0.0
        %3300 = vmatprep.subr.mxu0 0.0
        %3301 = vmatpush1.msra.mxu0 0.0
        %3302 = vmatprep.subr.mxu0 0.0
        %3303 = vmatpush1.msra.mxu0 0.0
        %3304 = vmatprep.subr.mxu0 0.0
        %3305 = vmatpush1.msra.mxu0 0.0
        %3306 = vmatprep.subr.mxu0 0.0
        %3307 = vmatpush1.msra.mxu0 0.0
        %3308 = vmatprep.subr.mxu0 0.0
        %3309 = vmatpush1.msra.mxu0 0.0
        %3310 = vmatprep.subr.mxu0 0.0
        %3311 = vmatpush1.msra.mxu0 0.0
        %3312 = vmatprep.subr.mxu0 0.0
        %3313 = vmatpush1.msra.mxu0 0.0
        %3314 = vmatprep.subr.mxu0 0.0
        %3315 = vmatpush1.msra.mxu0 0.0
        %3316 = vmatprep.subr.mxu0 0.0
        %3317 = vmatpush1.msra.mxu0 0.0
        %3318 = vmatprep.subr.mxu0 0.0
        %3319 = vmatpush1.msra.mxu0 0.0
        %3320 = vmatprep.subr.mxu0 0.0
        %3321 = vmatpush1.msra.mxu0 0.0
        %3322 = vmatprep.subr.mxu0 0.0
        %3323 = vmatpush1.msra.mxu0 0.0
        %3324 = vmatprep.subr.mxu0 0.0
        %3325 = vmatpush1.msra.mxu0 0.0
        %3326 = vmatprep.subr.mxu0 0.0
        %3327 = vmatpush1.msra.mxu0 0.0
        %3328 = vmatprep.subr.mxu0 0.0
        %3329 = vmatpush1.msra.mxu0 0.0
        %3330 = vmatprep.subr.mxu0 0.0
        %3331 = vmatpush1.msra.mxu0 0.0
        %3332 = vmatprep.subr.mxu0 0.0
        %3333 = vmatpush1.msra.mxu0 0.0
        %3334 = vmatprep.subr.mxu0 0.0
        %3335 = vmatpush1.msra.mxu0 0.0
        %3336 = vmatprep.subr.mxu0 0.0
        %3337 = vmatpush1.msra.mxu0 0.0
        %3338 = vmatprep.subr.mxu0 0.0
        %3339 = vmatpush1.msra.mxu0 0.0
        %3340 = vmatprep.subr.mxu0 0.0
        %3341 = vmatpush1.msra.mxu0 0.0
        %3342 = vmatprep.subr.mxu0 0.0
        %3343 = vmatpush1.msra.mxu0 0.0
        %3344 = vmatprep.subr.mxu0 0.0
        %3345 = vmatpush1.msra.mxu0 0.0
        %3346 = vmatprep.subr.mxu0 0.0
        %3347 = vmatpush1.msra.mxu0 0.0
        %3348 = vmatprep.subr.mxu0 0.0
        %3349 = vmatpush1.msra.mxu0 0.0
        %3350 = vmatprep.subr.mxu0 0.0
        %3351 = vmatpush1.msra.mxu0 0.0
        %3352 = vmatprep.mubr.f32.mxu0 0.0
        %3353 = vmatmul.mubr.f32.gmra.mrb[0].mxu0 %v1056
        %v3354 = vpop.f32.mrb[0].mxu0
        %v3355 = vadd.f32 0.0, %v3354
        %v3356 = vpop.f32.mrb[0].mxu0
        %v3357 = vadd.f32 0.0, %v3356
        %3358 = vmatprep.mubr.f32.mxu0 0.0
        %3359 = vmatmul.mubr.f32.gmra.mrb[0].mxu0 %v1059
        %v3360 = vpop.f32.mrb[0].mxu0
        %v3361 = vadd.f32 0.0, %v3360
        %v3362 = vpop.f32.mrb[0].mxu0
        %v3363 = vadd.f32 0.0, %v3362
        %3364 = vdwg.mxu0
        %v3365 = vadd.f32 %v3246, %v3355
        %v3366 = vadd.f32 %v3247, %v3357
        %v3367 = vadd.f32 %v3248, %v3361
        %v3368 = vadd.f32 %v3249, %v3363
        %v3369 = vsel %vm1153, %v2765, %v2774
        %v3370 = vsel %vm1153, %v2766, %v2775
        %v3371 = vsel %vm1153, %v2767, %v2776
        %v3372 = vsel %vm1153, %v2768, %v2777
        %v3373 = vsel %vm1153, %v2769, %v2778
        %v3374 = vsel %vm1153, %v2770, %v2779
        %v3375 = vsel %vm1153, %v2771, %v2780
        %v3376 = vsel %vm1153, %v2772, %v2781
        %v3377 = vmul.f32 %v1162, %v3369
        %v3378 = vmul.f32 %v1162, %v3370
        %v3379 = vmul.f32 %v1162, %v3371
        %v3380 = vmul.f32 %v1162, %v3372
        %v3381 = vmul.f32 %v1162, %v3373
        %v3382 = vmul.f32 %v1162, %v3374
        %v3383 = vmul.f32 %v1162, %v3375
        %v3384 = vmul.f32 %v1162, %v3376
        %v3385 = vadd.f32 %v3377, %v1171
        %v3386 = vadd.f32 %v3378, %v1171
        %v3387 = vadd.f32 %v3379, %v1171
        %v3388 = vadd.f32 %v3380, %v1171
        %v3389 = vadd.f32 %v3381, %v1171
        %v3390 = vadd.f32 %v3382, %v1171
        %v3391 = vadd.f32 %v3383, %v1171
        %v3392 = vadd.f32 %v3384, %v1171
        %v3393 = vmax.f32 %v3385, 0.0
        %v3394 = vmax.f32 %v3386, 0.0
        %v3395 = vmax.f32 %v3387, 0.0
        %v3396 = vmax.f32 %v3388, 0.0
        %v3397 = vmax.f32 %v3389, 0.0
        %v3398 = vmax.f32 %v3390, 0.0
        %v3399 = vmax.f32 %v3391, 0.0
        %v3400 = vmax.f32 %v3392, 0.0
        %v3402 = vsel %vm567, %v3399, 0
        %v3405 = vsel %vm567, %v3400, 0
        %3407 = vmatprep.subr.mxu0 %v3394
        %3408 = vmatpush1.msra.mxu0 %v3393
        %3409 = vmatprep.subr.mxu0 %v3396
        %3410 = vmatpush1.msra.mxu0 %v3395
        %3411 = vmatprep.subr.mxu0 %v3398
        %3412 = vmatpush1.msra.mxu0 %v3397
        %3413 = vmatprep.subr.mxu0 %v3405
        %3414 = vmatpush1.msra.mxu0 %v3402
        %3415 = vmatprep.subr.mxu0 0.0
        %3416 = vmatpush1.msra.mxu0 0.0
        %3417 = vmatprep.subr.mxu0 0.0
        %3418 = vmatpush1.msra.mxu0 0.0
        %3419 = vmatprep.subr.mxu0 0.0
        %3420 = vmatpush1.msra.mxu0 0.0
        %3421 = vmatprep.subr.mxu0 0.0
        %3422 = vmatpush1.msra.mxu0 0.0
        %3423 = vmatprep.subr.mxu0 0.0
        %3424 = vmatpush1.msra.mxu0 0.0
        %3425 = vmatprep.subr.mxu0 0.0
        %3426 = vmatpush1.msra.mxu0 0.0
        %3427 = vmatprep.subr.mxu0 0.0
        %3428 = vmatpush1.msra.mxu0 0.0
        %3429 = vmatprep.subr.mxu0 0.0
        %3430 = vmatpush1.msra.mxu0 0.0
        %3431 = vmatprep.subr.mxu0 0.0
        %3432 = vmatpush1.msra.mxu0 0.0
        %3433 = vmatprep.subr.mxu0 0.0
        %3434 = vmatpush1.msra.mxu0 0.0
        %3435 = vmatprep.subr.mxu0 0.0
        %3436 = vmatpush1.msra.mxu0 0.0
        %3437 = vmatprep.subr.mxu0 0.0
        %3438 = vmatpush1.msra.mxu0 0.0
        %3439 = vmatprep.subr.mxu0 0.0
        %3440 = vmatpush1.msra.mxu0 0.0
        %3441 = vmatprep.subr.mxu0 0.0
        %3442 = vmatpush1.msra.mxu0 0.0
        %3443 = vmatprep.subr.mxu0 0.0
        %3444 = vmatpush1.msra.mxu0 0.0
        %3445 = vmatprep.subr.mxu0 0.0
        %3446 = vmatpush1.msra.mxu0 0.0
        %3447 = vmatprep.subr.mxu0 0.0
        %3448 = vmatpush1.msra.mxu0 0.0
        %3449 = vmatprep.subr.mxu0 0.0
        %3450 = vmatpush1.msra.mxu0 0.0
        %3451 = vmatprep.subr.mxu0 0.0
        %3452 = vmatpush1.msra.mxu0 0.0
        %3453 = vmatprep.subr.mxu0 0.0
        %3454 = vmatpush1.msra.mxu0 0.0
        %3455 = vmatprep.subr.mxu0 0.0
        %3456 = vmatpush1.msra.mxu0 0.0
        %3457 = vmatprep.subr.mxu0 0.0
        %3458 = vmatpush1.msra.mxu0 0.0
        %3459 = vmatprep.subr.mxu0 0.0
        %3460 = vmatpush1.msra.mxu0 0.0
        %3461 = vmatprep.subr.mxu0 0.0
        %3462 = vmatpush1.msra.mxu0 0.0
        %3463 = vmatprep.subr.mxu0 0.0
        %3464 = vmatpush1.msra.mxu0 0.0
        %3465 = vmatprep.subr.mxu0 0.0
        %3466 = vmatpush1.msra.mxu0 0.0
        %3467 = vmatprep.subr.mxu0 0.0
        %3468 = vmatpush1.msra.mxu0 0.0
        %3469 = vmatprep.subr.mxu0 0.0
        %3470 = vmatpush1.msra.mxu0 0.0
        %3471 = vmatprep.mubr.f32.mxu0 0.0
        %3472 = vmatmul.mubr.f32.gmra.mrb[0].mxu0 %v1192
        %v3473 = vpop.f32.mrb[0].mxu0
        %v3474 = vadd.f32 0.0, %v3473
        %v3475 = vpop.f32.mrb[0].mxu0
        %v3476 = vadd.f32 0.0, %v3475
        %3477 = vmatprep.mubr.f32.mxu0 0.0
        %3478 = vmatmul.mubr.f32.gmra.mrb[0].mxu0 %v1195
        %v3479 = vpop.f32.mrb[0].mxu0
        %v3480 = vadd.f32 0.0, %v3479
        %v3481 = vpop.f32.mrb[0].mxu0
        %v3482 = vadd.f32 0.0, %v3481
        %3483 = vdwg.mxu0
        %v3484 = vadd.f32 %v3365, %v3474
        %v3485 = vadd.f32 %v3366, %v3476
        %v3486 = vadd.f32 %v3367, %v3480
        %v3487 = vadd.f32 %v3368, %v3482
        %v3488 = vadd.f32 %v3484, %v1289
        %v3489 = vadd.f32 %v3485, %v1289
        %v3490 = vadd.f32 %v3486, %v1294
        %v3491 = vadd.f32 %v3487, %v1294
        %v3492 = vmax.f32 %v2760, %v3488
        %v3493 = vmax.f32 %v2761, %v3489
        %v3494 = vmax.f32 %v2762, %v3490
        %v3495 = vmax.f32 %v2763, %v3491
        %v3496 = vmax.f32 %v3492, 0.0
        %v3497 = vmax.f32 %v3493, 0.0
        %v3498 = vmax.f32 %v3494, 0.0
        %v3499 = vmax.f32 %v3495, 0.0
        %3500 = vxpose.xlu0.b32.start [1/16] %v3496, 128
        %3501 = vxpose.xlu0.b32.cont [2/16] %v3498, 128
        %3502 = vxpose.xlu0.b32.cont [3/16] 0.0, 128
        %3503 = vxpose.xlu0.b32.cont [4/16] 0.0, 128
        %3504 = vxpose.xlu0.b32.cont [5/16] 0.0, 128
        %3505 = vxpose.xlu0.b32.cont [6/16] 0.0, 128
        %3506 = vxpose.xlu0.b32.cont [7/16] 0.0, 128
        %3507 = vxpose.xlu0.b32.cont [8/16] 0.0, 128
        %3508 = vxpose.xlu0.b32.cont [9/16] 0.0, 128
        %3509 = vxpose.xlu0.b32.cont [10/16] 0.0, 128
        %3510 = vxpose.xlu0.b32.cont [11/16] 0.0, 128
        %3511 = vxpose.xlu0.b32.cont [12/16] 0.0, 128
        %3512 = vxpose.xlu0.b32.cont [13/16] 0.0, 128
        %3513 = vxpose.xlu0.b32.cont [14/16] 0.0, 128
        %3514 = vxpose.xlu0.b32.cont [15/16] 0.0, 128
        %3515 = vxpose.xlu0.b32.end [16/16] 0.0, 128
        %v3516 = vpop.trf.xlu0
        %v3517 = vpop.trf.xlu0
        %v3518 = vpop.trf.xlu0
        %v3519 = vpop.trf.xlu0
        %v3520 = vpop.trf.xlu0
        %v3521 = vpop.trf.xlu0
        %v3522 = vpop.trf.xlu0
        %v3523 = vpop.trf.xlu0
        %v3524 = vpop.trf.xlu0
        %v3525 = vpop.trf.xlu0
        %v3526 = vpop.trf.xlu0
        %v3527 = vpop.trf.xlu0
        %v3528 = vpop.trf.xlu0
        %v3529 = vpop.trf.xlu0
        %v3530 = vpop.trf.xlu0
        %v3531 = vpop.trf.xlu0
        %3532 = vxpose.xlu0.b32.start [1/16] %v3497, 128
        %3533 = vxpose.xlu0.b32.cont [2/16] %v3499, 128
        %3534 = vxpose.xlu0.b32.cont [3/16] 0.0, 128
        %3535 = vxpose.xlu0.b32.cont [4/16] 0.0, 128
        %3536 = vxpose.xlu0.b32.cont [5/16] 0.0, 128
        %3537 = vxpose.xlu0.b32.cont [6/16] 0.0, 128
        %3538 = vxpose.xlu0.b32.cont [7/16] 0.0, 128
        %3539 = vxpose.xlu0.b32.cont [8/16] 0.0, 128
        %3540 = vxpose.xlu0.b32.cont [9/16] 0.0, 128
        %3541 = vxpose.xlu0.b32.cont [10/16] 0.0, 128
        %3542 = vxpose.xlu0.b32.cont [11/16] 0.0, 128
        %3543 = vxpose.xlu0.b32.cont [12/16] 0.0, 128
        %3544 = vxpose.xlu0.b32.cont [13/16] 0.0, 128
        %3545 = vxpose.xlu0.b32.cont [14/16] 0.0, 128
        %3546 = vxpose.xlu0.b32.cont [15/16] 0.0, 128
        %3547 = vxpose.xlu0.b32.end [16/16] 0.0, 128
        %v3548 = vpop.trf.xlu0
        %v3549 = vpop.trf.xlu0
        %v3550 = vpop.trf.xlu0
        %v3551 = vpop.trf.xlu0
        %v3552 = vpop.trf.xlu0
        %v3553 = vpop.trf.xlu0
        %v3554 = vpop.trf.xlu0
        %v3555 = vpop.trf.xlu0
        %v3556 = vpop.trf.xlu0
        %v3557 = vpop.trf.xlu0
        %v3558 = vpop.trf.xlu0
        %v3559 = vpop.trf.xlu0
        %v3560 = vpop.trf.xlu0
        %v3561 = vpop.trf.xlu0
        %v3562 = vpop.trf.xlu0
        %v3563 = vpop.trf.xlu0
        %3565 = vrot.lane.b32.xlu0 %v3517, 16
        %v3566 = vpop.permute.xlu0 %3565
        %3569 = vrot.lane.b32.xlu0 %v3518, 32
        %v3570 = vpop.permute.xlu0 %3569
        %3573 = vrot.lane.b32.xlu0 %v3519, 48
        %v3574 = vpop.permute.xlu0 %3573
        %3577 = vrot.lane.b32.xlu0 %v3520, 64
        %v3578 = vpop.permute.xlu0 %3577
        %3581 = vrot.lane.b32.xlu0 %v3521, 80
        %v3582 = vpop.permute.xlu0 %3581
        %3585 = vrot.lane.b32.xlu0 %v3522, 96
        %v3586 = vpop.permute.xlu0 %3585
        %3589 = vrot.lane.b32.xlu0 %v3523, 112
        %v3590 = vpop.permute.xlu0 %3589
        %3593 = vrot.lane.b32.xlu0 %v3525, 16
        %v3594 = vpop.permute.xlu0 %3593
        %3597 = vrot.lane.b32.xlu0 %v3526, 32
        %v3598 = vpop.permute.xlu0 %3597
        %3601 = vrot.lane.b32.xlu0 %v3527, 48
        %v3602 = vpop.permute.xlu0 %3601
        %3605 = vrot.lane.b32.xlu0 %v3528, 64
        %v3606 = vpop.permute.xlu0 %3605
        %3609 = vrot.lane.b32.xlu0 %v3529, 80
        %v3610 = vpop.permute.xlu0 %3609
        %3613 = vrot.lane.b32.xlu0 %v3530, 96
        %v3614 = vpop.permute.xlu0 %3613
        %3617 = vrot.lane.b32.xlu0 %v3531, 112
        %v3618 = vpop.permute.xlu0 %3617
        %vm3620 = vcmask 130048
        %v3621 = vsel %vm3620, %v3516, %v3566
        %vm3622 = vcmask 261120
        %v3623 = vsel %vm3622, %v3621, %v3570
        %vm3624 = vcmask 392192
        %v3625 = vsel %vm3624, %v3623, %v3574
        %vm3626 = vcmask 523264
        %v3627 = vsel %vm3626, %v3625, %v3578
        %vm3628 = vcmask 654336
        %v3629 = vsel %vm3628, %v3627, %v3582
        %vm3630 = vcmask 785408
        %v3631 = vsel %vm3630, %v3629, %v3586
        %vm3632 = vcmask 916480
        %v3633 = vsel %vm3632, %v3631, %v3590
        %v3634 = vsel %vm3620, %v3524, %v3594
        %v3635 = vsel %vm3622, %v3634, %v3598
        %v3636 = vsel %vm3624, %v3635, %v3602
        %v3637 = vsel %vm3626, %v3636, %v3606
        %v3638 = vsel %vm3628, %v3637, %v3610
        %v3639 = vsel %vm3630, %v3638, %v3614
        %v3640 = vsel %vm3632, %v3639, %v3618
        %3642 = vrot.lane.b32.xlu0 %v3549, 16
        %v3643 = vpop.permute.xlu0 %3642
        %3646 = vrot.lane.b32.xlu0 %v3550, 32
        %v3647 = vpop.permute.xlu0 %3646
        %3650 = vrot.lane.b32.xlu0 %v3551, 48
        %v3651 = vpop.permute.xlu0 %3650
        %3654 = vrot.lane.b32.xlu0 %v3552, 64
        %v3655 = vpop.permute.xlu0 %3654
        %3658 = vrot.lane.b32.xlu0 %v3553, 80
        %v3659 = vpop.permute.xlu0 %3658
        %3662 = vrot.lane.b32.xlu0 %v3554, 96
        %v3663 = vpop.permute.xlu0 %3662
        %3666 = vrot.lane.b32.xlu0 %v3555, 112
        %v3667 = vpop.permute.xlu0 %3666
        %v3669 = vsel %vm3620, %v3548, %v3643
        %v3670 = vsel %vm3622, %v3669, %v3647
        %v3671 = vsel %vm3624, %v3670, %v3651
        %v3672 = vsel %vm3626, %v3671, %v3655
        %v3673 = vsel %vm3628, %v3672, %v3659
        %v3674 = vsel %vm3630, %v3673, %v3663
        %v3675 = vsel %vm3632, %v3674, %v3667
        %v3676 = vld [vmem:[%s6] sm:$0xff]
        %v3677 = vld [vmem:[%s6 + $0x8] sm:$0xff]
        %v3678 = vld [vmem:[%s6 + $0x10] sm:$0xff]
        %v3679 = vld [vmem:[%s6 + $0x18] sm:$0xff]
        %v3680 = vld [vmem:[%s6 + $0x20] sm:$0xff]
        %v3681 = vld [vmem:[%s6 + $0x28] sm:$0xff]
        %v3682 = vld [vmem:[%s6 + $0x30] sm:$0xff]
        %v3683 = vld [vmem:[%s6 + $0x38] sm:$0xff]
        %v3684 = vld [vmem:[%s6 + $0x40] sm:$0xff]
        %v3685 = vld [vmem:[%s6 + $0x48] sm:$0xff]
        %v3686 = vld [vmem:[%s6 + $0x50] sm:$0xff]
        %v3687 = vld [vmem:[%s6 + $0x58] sm:$0xff]
        %v3688 = vld [vmem:[%s6 + $0x60] sm:$0xff]
        %v3689 = vld [vmem:[%s6 + $0x68] sm:$0xff]
        %v3690 = vld [vmem:[%s6 + $0x70] sm:$0xff]
        %v3691 = vld [vmem:[%s6 + $0x78] sm:$0xff]
        %v3692 = vld [vmem:[%s6 + $0x80] sm:$0xff]
        %v3693 = vld [vmem:[%s6 + $0x88] sm:$0xff]
        %v3694 = vld [vmem:[%s6 + $0x90] sm:$0xff]
        %v3695 = vld [vmem:[%s6 + $0x98] sm:$0xff]
        %v3696 = vld [vmem:[%s6 + $0xa0] sm:$0xff]
        %v3697 = vld [vmem:[%s6 + $0xa8] sm:$0xff]
        %v3698 = vld [vmem:[%s6 + $0xb0] sm:$0xff]
        %v3699 = vld [vmem:[%s6 + $0xb8] sm:$0xff]
        %v3700 = vld [vmem:[%s6 + $0xc0] sm:$0xff]
        %v3701 = vld [vmem:[%s6 + $0xc8] sm:$0xff]
        %v3702 = vld [vmem:[%s6 + $0xd0] sm:$0xff]
        %v3703 = vld [vmem:[%s6 + $0xd8] sm:$0xff]
        %v3704 = vld [vmem:[%s6 + $0xe0] sm:$0xff]
        %v3705 = vld [vmem:[%s6 + $0xe8] sm:$0xff]
        %v3706 = vld [vmem:[%s6 + $0xf0] sm:$0xff]
        %v3707 = vld [vmem:[%s6 + $0xf8] sm:$0xff]
        %v3708 = vld [vmem:[%s6 + $0x100] sm:$0xff]
        %v3709 = vld [vmem:[%s6 + $0x108] sm:$0xff]
        %v3710 = vld [vmem:[%s6 + $0x110] sm:$0xff]
        %v3711 = vld [vmem:[%s6 + $0x118] sm:$0xff]
        %v3712 = vld [vmem:[%s6 + $0x120] sm:$0xff]
        %v3713 = vld [vmem:[%s6 + $0x128] sm:$0xff]
        %v3714 = vld [vmem:[%s6 + $0x130] sm:$0xff]
        %v3715 = vld [vmem:[%s6 + $0x138] sm:$0xff]
        %v3716 = vld [vmem:[%s6 + $0x140] sm:$0xff]
        %v3717 = vld [vmem:[%s6 + $0x148] sm:$0xff]
        %v3718 = vld [vmem:[%s6 + $0x150] sm:$0xff]
        %v3719 = vld [vmem:[%s6 + $0x158] sm:$0xff]
        %v3720 = vld [vmem:[%s6 + $0x160] sm:$0xff]
        %v3721 = vld [vmem:[%s6 + $0x168] sm:$0xff]
        %v3722 = vld [vmem:[%s6 + $0x170] sm:$0xff]
        %v3723 = vld [vmem:[%s6 + $0x178] sm:$0xff]
        %v3724 = vld [vmem:[%s6 + $0x180] sm:$0xff]
        %v3725 = vld [vmem:[%s6 + $0x188] sm:$0xff]
        %v3726 = vld [vmem:[%s7] sm:$0x1]
        %v3728 = vlaneseq
        %v3729 = vshrl.u32 %v3728, 7
        %v3730 = vsub.s32 0, %v3729
        %v3731 = vrot.slane %v3726, %v3730
        %v3734 = vsel %vm3620, %v3556, 0
        %3736 = vmatprep.subr.mxu0 0.0
        %3737 = vmatpush1.msra.mxu0 %v3676
        %3738 = vmatprep.subr.mxu0 0.0
        %3739 = vmatpush1.msra.mxu0 %v3677
        %3740 = vmatprep.subr.mxu0 0.0
        %3741 = vmatpush1.msra.mxu0 %v3678
        %3742 = vmatprep.subr.mxu0 0.0
        %3743 = vmatpush1.msra.mxu0 %v3679
        %3744 = vmatprep.subr.mxu0 0.0
        %3745 = vmatpush1.msra.mxu0 %v3680
        %3746 = vmatprep.subr.mxu0 0.0
        %3747 = vmatpush1.msra.mxu0 %v3681
        %3748 = vmatprep.subr.mxu0 0.0
        %3749 = vmatpush1.msra.mxu0 %v3682
        %3750 = vmatprep.subr.mxu0 0.0
        %3751 = vmatpush1.msra.mxu0 %v3683
        %3752 = vmatprep.subr.mxu0 0.0
        %3753 = vmatpush1.msra.mxu0 %v3684
        %3754 = vmatprep.subr.mxu0 0.0
        %3755 = vmatpush1.msra.mxu0 %v3685
        %3756 = vmatprep.subr.mxu0 0.0
        %3757 = vmatpush1.msra.mxu0 %v3686
        %3758 = vmatprep.subr.mxu0 0.0
        %3759 = vmatpush1.msra.mxu0 %v3687
        %3760 = vmatprep.subr.mxu0 0.0
        %3761 = vmatpush1.msra.mxu0 %v3688
        %3762 = vmatprep.subr.mxu0 0.0
        %3763 = vmatpush1.msra.mxu0 %v3689
        %3764 = vmatprep.subr.mxu0 0.0
        %3765 = vmatpush1.msra.mxu0 %v3690
        %3766 = vmatprep.subr.mxu0 0.0
        %3767 = vmatpush1.msra.mxu0 %v3691
        %3768 = vmatprep.subr.mxu0 0.0
        %3769 = vmatpush1.msra.mxu0 %v3692
        %3770 = vmatprep.subr.mxu0 0.0
        %3771 = vmatpush1.msra.mxu0 %v3693
        %3772 = vmatprep.subr.mxu0 0.0
        %3773 = vmatpush1.msra.mxu0 %v3694
        %3774 = vmatprep.subr.mxu0 0.0
        %3775 = vmatpush1.msra.mxu0 %v3695
        %3776 = vmatprep.subr.mxu0 0.0
        %3777 = vmatpush1.msra.mxu0 %v3696
        %3778 = vmatprep.subr.mxu0 0.0
        %3779 = vmatpush1.msra.mxu0 %v3697
        %3780 = vmatprep.subr.mxu0 0.0
        %3781 = vmatpush1.msra.mxu0 %v3698
        %3782 = vmatprep.subr.mxu0 0.0
        %3783 = vmatpush1.msra.mxu0 %v3699
        %3784 = vmatprep.subr.mxu0 0.0
        %3785 = vmatpush1.msra.mxu0 %v3700
        %3786 = vmatprep.subr.mxu0 0.0
        %3787 = vmatpush1.msra.mxu0 %v3701
        %3788 = vmatprep.subr.mxu0 0.0
        %3789 = vmatpush1.msra.mxu0 %v3702
        %3790 = vmatprep.subr.mxu0 0.0
        %3791 = vmatpush1.msra.mxu0 %v3703
        %3792 = vmatprep.subr.mxu0 0.0
        %3793 = vmatpush1.msra.mxu0 %v3704
        %3794 = vmatprep.subr.mxu0 0.0
        %3795 = vmatpush1.msra.mxu0 %v3705
        %3796 = vmatprep.subr.mxu0 0.0
        %3797 = vmatpush1.msra.mxu0 %v3706
        %3798 = vmatprep.subr.mxu0 0.0
        %3799 = vmatpush1.msra.mxu0 %v3707
        %3800 = vmatprep.mubr.f32.mxu0 %v3640
        %3801 = vmatmul.mubr.f32.gmra.mrb[0].mxu0 %v3633
        %v3802 = vpop.f32.mrb[0].mxu0
        %v3803 = vadd.f32 %v3731, %v3802
        %v3804 = vpop.f32.mrb[0].mxu0
        %3805 = vdwg.mxu0
        %3806 = vmatprep.subr.mxu0 0.0
        %3807 = vmatpush1.msra.mxu0 %v3708
        %3808 = vmatprep.subr.mxu0 0.0
        %3809 = vmatpush1.msra.mxu0 %v3709
        %3810 = vmatprep.subr.mxu0 0.0
        %3811 = vmatpush1.msra.mxu0 %v3710
        %3812 = vmatprep.subr.mxu0 0.0
        %3813 = vmatpush1.msra.mxu0 %v3711
        %3814 = vmatprep.subr.mxu0 0.0
        %3815 = vmatpush1.msra.mxu0 %v3712
        %3816 = vmatprep.subr.mxu0 0.0
        %3817 = vmatpush1.msra.mxu0 %v3713
        %3818 = vmatprep.subr.mxu0 0.0
        %3819 = vmatpush1.msra.mxu0 %v3714
        %3820 = vmatprep.subr.mxu0 0.0
        %3821 = vmatpush1.msra.mxu0 %v3715
        %3822 = vmatprep.subr.mxu0 0.0
        %3823 = vmatpush1.msra.mxu0 %v3716
        %3824 = vmatprep.subr.mxu0 0.0
        %3825 = vmatpush1.msra.mxu0 %v3717
        %3826 = vmatprep.subr.mxu0 0.0
        %3827 = vmatpush1.msra.mxu0 %v3718
        %3828 = vmatprep.subr.mxu0 0.0
        %3829 = vmatpush1.msra.mxu0 %v3719
        %3830 = vmatprep.subr.mxu0 0.0
        %3831 = vmatpush1.msra.mxu0 %v3720
        %3832 = vmatprep.subr.mxu0 0.0
        %3833 = vmatpush1.msra.mxu0 %v3721
        %3834 = vmatprep.subr.mxu0 0.0
        %3835 = vmatpush1.msra.mxu0 %v3722
        %3836 = vmatprep.subr.mxu0 0.0
        %3837 = vmatpush1.msra.mxu0 %v3723
        %3838 = vmatprep.subr.mxu0 0.0
        %3839 = vmatpush1.msra.mxu0 %v3724
        %3840 = vmatprep.subr.mxu0 0.0
        %3841 = vmatpush1.msra.mxu0 %v3725
        %3842 = vmatprep.subr.mxu0 0.0
        %3843 = vmatpush1.msra.mxu0 0.0
        %3844 = vmatprep.subr.mxu0 0.0
        %3845 = vmatpush1.msra.mxu0 0.0
        %3846 = vmatprep.subr.mxu0 0.0
        %3847 = vmatpush1.msra.mxu0 0.0
        %3848 = vmatprep.subr.mxu0 0.0
        %3849 = vmatpush1.msra.mxu0 0.0
        %3850 = vmatprep.subr.mxu0 0.0
        %3851 = vmatpush1.msra.mxu0 0.0
        %3852 = vmatprep.subr.mxu0 0.0
        %3853 = vmatpush1.msra.mxu0 0.0
        %3854 = vmatprep.subr.mxu0 0.0
        %3855 = vmatpush1.msra.mxu0 0.0
        %3856 = vmatprep.subr.mxu0 0.0
        %3857 = vmatpush1.msra.mxu0 0.0
        %3858 = vmatprep.subr.mxu0 0.0
        %3859 = vmatpush1.msra.mxu0 0.0
        %3860 = vmatprep.subr.mxu0 0.0
        %3861 = vmatpush1.msra.mxu0 0.0
        %3862 = vmatprep.subr.mxu0 0.0
        %3863 = vmatpush1.msra.mxu0 0.0
        %3864 = vmatprep.subr.mxu0 0.0
        %3865 = vmatpush1.msra.mxu0 0.0
        %3866 = vmatprep.subr.mxu0 0.0
        %3867 = vmatpush1.msra.mxu0 0.0
        %3868 = vmatprep.subr.mxu0 0.0
        %3869 = vmatpush1.msra.mxu0 0.0
        %3870 = vmatprep.mubr.f32.mxu0 %v3734
        %3871 = vmatmul.mubr.f32.gmra.mrb[0].mxu0 %v3675
        %v3872 = vpop.f32.mrb[0].mxu0
        %v3873 = vadd.f32 %v3803, %v3872
        %v3874 = vpop.f32.mrb[0].mxu0
        %3875 = vdwg.mxu0
        %v3876 = vld [vmem:[%s8] sm:$0xff]
        %v3877 = vld [vmem:[%s8 + $0x8] sm:$0xff]
        %v3878 = vld [vmem:[%s8 + $0x10] sm:$0xff]
        %v3879 = vld [vmem:[%s8 + $0x18] sm:$0xff]
        %v3880 = vld [vmem:[%s8 + $0x20] sm:$0xff]
        %v3881 = vld [vmem:[%s8 + $0x28] sm:$0xff]
        %v3882 = vld [vmem:[%s8 + $0x30] sm:$0xff]
        %v3883 = vld [vmem:[%s8 + $0x38] sm:$0xff]
        %v3884 = vld [vmem:[%s8 + $0x40] sm:$0xff]
        %v3885 = vld [vmem:[%s8 + $0x48] sm:$0xff]
        %v3886 = vld [vmem:[%s8 + $0x50] sm:$0xff]
        %v3887 = vld [vmem:[%s8 + $0x58] sm:$0xff]
        %v3888 = vld [vmem:[%s8 + $0x60] sm:$0xff]
        %v3889 = vld [vmem:[%s8 + $0x68] sm:$0xff]
        %v3890 = vld [vmem:[%s8 + $0x70] sm:$0xff]
        %v3891 = vld [vmem:[%s8 + $0x78] sm:$0xff]
        %v3892 = vld [vmem:[%s9] sm:$0x1]
        %v3894 = vlaneseq
        %v3895 = vshrl.u32 %v3894, 7
        %v3896 = vsub.s32 0, %v3895
        %v3897 = vrot.slane %v3892, %v3896
        %3899 = vmatprep.subr.mxu0 0.0
        %3900 = vmatpush1.msra.mxu0 %v3876
        %3901 = vmatprep.subr.mxu0 0.0
        %3902 = vmatpush1.msra.mxu0 %v3877
        %3903 = vmatprep.subr.mxu0 0.0
        %3904 = vmatpush1.msra.mxu0 %v3878
        %3905 = vmatprep.subr.mxu0 0.0
        %3906 = vmatpush1.msra.mxu0 %v3879
        %3907 = vmatprep.subr.mxu0 0.0
        %3908 = vmatpush1.msra.mxu0 %v3880
        %3909 = vmatprep.subr.mxu0 0.0
        %3910 = vmatpush1.msra.mxu0 %v3881
        %3911 = vmatprep.subr.mxu0 0.0
        %3912 = vmatpush1.msra.mxu0 %v3882
        %3913 = vmatprep.subr.mxu0 0.0
        %3914 = vmatpush1.msra.mxu0 %v3883
        %3915 = vmatprep.subr.mxu0 0.0
        %3916 = vmatpush1.msra.mxu0 %v3884
        %3917 = vmatprep.subr.mxu0 0.0
        %3918 = vmatpush1.msra.mxu0 %v3885
        %3919 = vmatprep.subr.mxu0 0.0
        %3920 = vmatpush1.msra.mxu0 %v3886
        %3921 = vmatprep.subr.mxu0 0.0
        %3922 = vmatpush1.msra.mxu0 %v3887
        %3923 = vmatprep.subr.mxu0 0.0
        %3924 = vmatpush1.msra.mxu0 %v3888
        %3925 = vmatprep.subr.mxu0 0.0
        %3926 = vmatpush1.msra.mxu0 %v3889
        %3927 = vmatprep.subr.mxu0 0.0
        %3928 = vmatpush1.msra.mxu0 %v3890
        %3929 = vmatprep.subr.mxu0 0.0
        %3930 = vmatpush1.msra.mxu0 %v3891
        %3931 = vmatprep.subr.mxu0 0.0
        %3932 = vmatpush1.msra.mxu0 0.0
        %3933 = vmatprep.subr.mxu0 0.0
        %3934 = vmatpush1.msra.mxu0 0.0
        %3935 = vmatprep.subr.mxu0 0.0
        %3936 = vmatpush1.msra.mxu0 0.0
        %3937 = vmatprep.subr.mxu0 0.0
        %3938 = vmatpush1.msra.mxu0 0.0
        %3939 = vmatprep.subr.mxu0 0.0
        %3940 = vmatpush1.msra.mxu0 0.0
        %3941 = vmatprep.subr.mxu0 0.0
        %3942 = vmatpush1.msra.mxu0 0.0
        %3943 = vmatprep.subr.mxu0 0.0
        %3944 = vmatpush1.msra.mxu0 0.0
        %3945 = vmatprep.subr.mxu0 0.0
        %3946 = vmatpush1.msra.mxu0 0.0
        %3947 = vmatprep.subr.mxu0 0.0
        %3948 = vmatpush1.msra.mxu0 0.0
        %3949 = vmatprep.subr.mxu0 0.0
        %3950 = vmatpush1.msra.mxu0 0.0
        %3951 = vmatprep.subr.mxu0 0.0
        %3952 = vmatpush1.msra.mxu0 0.0
        %3953 = vmatprep.subr.mxu0 0.0
        %3954 = vmatpush1.msra.mxu0 0.0
        %3955 = vmatprep.subr.mxu0 0.0
        %3956 = vmatpush1.msra.mxu0 0.0
        %3957 = vmatprep.subr.mxu0 0.0
        %3958 = vmatpush1.msra.mxu0 0.0
        %3959 = vmatprep.subr.mxu0 0.0
        %3960 = vmatpush1.msra.mxu0 0.0
        %3961 = vmatprep.subr.mxu0 0.0
        %3962 = vmatpush1.msra.mxu0 0.0
        %3963 = vmatprep.mubr.f32.mxu0 0.0
        %3964 = vmatmul.mubr.f32.gmra.mrb[0].mxu0 %v3873
        %v3965 = vpop.f32.mrb[0].mxu0
        %v3966 = vadd.f32 %v3897, %v3965
        %v3967 = vpop.f32.mrb[0].mxu0
        %3968 = vdwg.mxu0
        %v3969 = vld [vmem:[%s10] sm:$0xff]
        %v3970 = vld [vmem:[%s10 + $0x8] sm:$0xff]
        %v3971 = vld [vmem:[%s10 + $0x10] sm:$0xff]
        %v3972 = vld [vmem:[%s10 + $0x18] sm:$0xff]
        %v3973 = vld [vmem:[%s10 + $0x20] sm:$0xff]
        %v3974 = vld [vmem:[%s10 + $0x28] sm:$0xff]
        %v3975 = vld [vmem:[%s10 + $0x30] sm:$0xff]
        %v3976 = vld [vmem:[%s10 + $0x38] sm:$0xff]
        %v3977 = vld [vmem:[%s10 + $0x40] sm:$0xff]
        %v3978 = vld [vmem:[%s10 + $0x48] sm:$0xff]
        %v3979 = vld [vmem:[%s10 + $0x50] sm:$0xff]
        %v3980 = vld [vmem:[%s10 + $0x58] sm:$0xff]
        %v3981 = vld [vmem:[%s10 + $0x60] sm:$0xff]
        %v3982 = vld [vmem:[%s10 + $0x68] sm:$0xff]
        %v3983 = vld [vmem:[%s10 + $0x70] sm:$0xff]
        %v3984 = vld [vmem:[%s10 + $0x78] sm:$0xff]
        %v3985 = vld [vmem:[%s11] sm:$0x1]
        %v3987 = vlaneseq
        %v3988 = vshrl.u32 %v3987, 7
        %v3989 = vsub.s32 0, %v3988
        %v3990 = vrot.slane %v3985, %v3989
        %3992 = vmatprep.subr.mxu0 0.0
        %3993 = vmatpush1.msra.mxu0 %v3969
        %3994 = vmatprep.subr.mxu0 0.0
        %3995 = vmatpush1.msra.mxu0 %v3970
        %3996 = vmatprep.subr.mxu0 0.0
        %3997 = vmatpush1.msra.mxu0 %v3971
        %3998 = vmatprep.subr.mxu0 0.0
        %3999 = vmatpush1.msra.mxu0 %v3972
        %4000 = vmatprep.subr.mxu0 0.0
        %4001 = vmatpush1.msra.mxu0 %v3973
        %4002 = vmatprep.subr.mxu0 0.0
        %4003 = vmatpush1.msra.mxu0 %v3974
        %4004 = vmatprep.subr.mxu0 0.0
        %4005 = vmatpush1.msra.mxu0 %v3975
        %4006 = vmatprep.subr.mxu0 0.0
        %4007 = vmatpush1.msra.mxu0 %v3976
        %4008 = vmatprep.subr.mxu0 0.0
        %4009 = vmatpush1.msra.mxu0 %v3977
        %4010 = vmatprep.subr.mxu0 0.0
        %4011 = vmatpush1.msra.mxu0 %v3978
        %4012 = vmatprep.subr.mxu0 0.0
        %4013 = vmatpush1.msra.mxu0 %v3979
        %4014 = vmatprep.subr.mxu0 0.0
        %4015 = vmatpush1.msra.mxu0 %v3980
        %4016 = vmatprep.subr.mxu0 0.0
        %4017 = vmatpush1.msra.mxu0 %v3981
        %4018 = vmatprep.subr.mxu0 0.0
        %4019 = vmatpush1.msra.mxu0 %v3982
        %4020 = vmatprep.subr.mxu0 0.0
        %4021 = vmatpush1.msra.mxu0 %v3983
        %4022 = vmatprep.subr.mxu0 0.0
        %4023 = vmatpush1.msra.mxu0 %v3984
        %4024 = vmatprep.subr.mxu0 0.0
        %4025 = vmatpush1.msra.mxu0 0.0
        %4026 = vmatprep.subr.mxu0 0.0
        %4027 = vmatpush1.msra.mxu0 0.0
        %4028 = vmatprep.subr.mxu0 0.0
        %4029 = vmatpush1.msra.mxu0 0.0
        %4030 = vmatprep.subr.mxu0 0.0
        %4031 = vmatpush1.msra.mxu0 0.0
        %4032 = vmatprep.subr.mxu0 0.0
        %4033 = vmatpush1.msra.mxu0 0.0
        %4034 = vmatprep.subr.mxu0 0.0
        %4035 = vmatpush1.msra.mxu0 0.0
        %4036 = vmatprep.subr.mxu0 0.0
        %4037 = vmatpush1.msra.mxu0 0.0
        %4038 = vmatprep.subr.mxu0 0.0
        %4039 = vmatpush1.msra.mxu0 0.0
        %4040 = vmatprep.subr.mxu0 0.0
        %4041 = vmatpush1.msra.mxu0 0.0
        %4042 = vmatprep.subr.mxu0 0.0
        %4043 = vmatpush1.msra.mxu0 0.0
        %4044 = vmatprep.subr.mxu0 0.0
        %4045 = vmatpush1.msra.mxu0 0.0
        %4046 = vmatprep.subr.mxu0 0.0
        %4047 = vmatpush1.msra.mxu0 0.0
        %4048 = vmatprep.subr.mxu0 0.0
        %4049 = vmatpush1.msra.mxu0 0.0
        %4050 = vmatprep.subr.mxu0 0.0
        %4051 = vmatpush1.msra.mxu0 0.0
        %4052 = vmatprep.subr.mxu0 0.0
        %4053 = vmatpush1.msra.mxu0 0.0
        %4054 = vmatprep.subr.mxu0 0.0
        %4055 = vmatpush1.msra.mxu0 0.0
        %4056 = vmatprep.mubr.f32.mxu0 0.0
        %4057 = vmatmul.mubr.f32.gmra.mrb[0].mxu0 %v3966
        %v4058 = vpop.f32.mrb[0].mxu0
        %v4059 = vadd.f32 %v3990, %v4058
        %v4060 = vpop.f32.mrb[0].mxu0
        %4061 = vdwg.mxu0
        %4062 = vst [vmem:[%s448] sm:$0xff] %v4059
        %s4063 = sand.u32 %s298, 1
        %s4064 = scalar_lea.sflag [#allocation3], %s4063
        %s4065 = sand.u32 %s298, 1
        %s4066 = smul.addr %s4065, 8
        %s4067 = scalar_lea.vmem [#allocation7], %s4066
        // Predicated region
        $region77: #{lenet_forward.1} parent=67 // pred_check
          %p4068 = pneg %p308
        $region78: #{lenet_forward.1} parent=67 // pred_check_branch
          %4070 = sbr.rel (%p4068) target = $region80
        $region79: #{lenet_forward.1} parent=67 // pred_region
          %s4072 = ssub.s32 128, 128
          %4073 = vsyncadd %s4064, %s4072
          %s4074 = smul.addr %s28, 128
          %s4075 = scalar_lea.hbm %s12, %s4074
          %s4077 = sshll.u32 %s4067, 4
          %s4078 = int_to_ptr.vmem [resolvable:$true] %s4077
          %4080 = dma.vmem_to_hbm [thread:$0]  %s4078, 128, %s4075, %s4064
        $region80: #{lenet_forward.1} parent=67 // pred_fallthru
          _
      $region68: #{lenet_forward.1} parent=5 // pred_fallthru
        _
      %p4081 = scmp.le.s32.totalorder 2, %s23
      // Predicated region
      $region81: #{lenet_forward.1} parent=5 // pred_check
        %p4082 = pneg %p4081
      $region82: #{lenet_forward.1} parent=5 // pred_check_branch
        %4084 = sbr.rel (%p4082) target = $region84
      $region83: #{lenet_forward.1} parent=5 // pred_region
        %s4085 = ssub.s32 %s23, 2
        // Predicated region
        $region85: #{lenet_forward.1} parent=83 // pred_check
          %p4086 = pneg %p314
        $region86: #{lenet_forward.1} parent=83 // pred_check_branch
          %4088 = sbr.rel (%p4086) target = $region88
        $region87: #{lenet_forward.1} parent=83 // pred_region
          %s4089 = sand.u32 %s299, 1
          %s4090 = scalar_lea.sflag [#allocation3], %s4089
          %s4091 = sand.u32 %s299, 1
          %s4092 = smul.addr %s4091, 8
          %s4093 = scalar_lea.vmem [#allocation7], %s4092
          %4094 = dma.done %s4090, 128
        $region88: #{lenet_forward.1} parent=83 // pred_fallthru
          _
      $region84: #{lenet_forward.1} parent=5 // pred_fallthru
        _
    $region6: #{lenet_forward.1} parent=1 // loop_footer
      %s27 = sadd.s32 1, %s23
    $region7: #{lenet_forward.1} parent=1 // loop_footer_branch
      %22 = sbr.rel target = $region3
    $region8: #{lenet_forward.1} parent=1 // loop_exit
      _
    %4095 = vsyncpa [#allocation3], 1
    %s4096 = scalar_lea.sflag [#allocation3], 1
    %4097 = vsyncpa %s4096, 1
    %4098 = vsyncpa [#allocation4], 1
    %s4099 = scalar_lea.sflag [#allocation4], 1
    %4100 = vsyncpa %s4099, 1
    %4101 = vsyncpa [#allocation6], 1

</llo_original>
